<compile_context>
chip_gen: v7x
topology: tpu7x:2x2x1
jax: 0.10.0
libtpu: 0.0.40
codegen_flags: <defaults>
</compile_context>

<pallas_src>
import functools

import jax
import jax.numpy as jnp
import numpy as np
from jax.experimental import pallas as pl
from jax.experimental.pallas import tpu as pltpu


def _window_attn_kernel(x_ref, qkvw_ref, qkvb_ref, projw_ref, projb_ref,
                        bm_ref, o_ref, *, num_heads, head_dim, scale, nW, N):
  # x_ref:    (1, M, C)  with M = nW * N (all windows of one batch element)
  # qkvw_ref: (C, 3C)       qkvb_ref: (1, 3C)
  # projw_ref:(C, C)        projb_ref:(1, C)
  # bm_ref:   (nW, H, N, N) fused relative-position bias + shift mask
  # o_ref:    (1, M, C)
  M = x_ref.shape[1]
  C = x_ref.shape[2]

  x = x_ref[0]                                                   # (M, C)

  # Single large-M QKV projection on the MXU.
  qkv = jnp.dot(x, qkvw_ref[...],
                preferred_element_type=jnp.float32) + qkvb_ref[0]   # (M, 3C)
  qkv = qkv.reshape(nW, N, 3 * C)                                # window-batched view

  bm = bm_ref[...]                                               # (nW, H, N, N)
  projw = projw_ref[...]                                         # (C, C)

  # Accumulate the output projection per head (folds the head concat into MXU
  # accumulation instead of an 8-lane concatenate).
  acc = jnp.zeros((M, C), jnp.float32)
  for h in range(num_heads):          # num_heads is small; static unroll is fine
    lo = h * head_dim
    qh = qkv[:, :, lo:lo + head_dim] * scale                     # (nW, N, hd)
    kh = qkv[:, :, C + lo:C + lo + head_dim]                     # (nW, N, hd)
    vh = qkv[:, :, 2 * C + lo:2 * C + lo + head_dim]             # (nW, N, hd)

    # Window-batched scores; contraction on head_dim (no explicit transpose).
    s = jnp.einsum('wqd,wkd->wqk', qh, kh,
                   preferred_element_type=jnp.float32)           # (nW, N, N)
    s = s + bm[:, h]                                             # bias + mask

    # Softmax over the key axis.
    mmax = jnp.max(s, axis=-1, keepdims=True)
    e = jnp.exp(s - mmax)
    p = e * pl.reciprocal(jnp.sum(e, axis=-1, keepdims=True), approx=True)

    oh = jnp.einsum('wqk,wkd->wqd', p, vh,
                    preferred_element_type=jnp.float32)          # (nW, N, hd)

    acc = acc + jnp.dot(oh.reshape(M, head_dim),
                        projw[lo:lo + head_dim, :],
                        preferred_element_type=jnp.float32)      # (M, C)

  o_ref[0] = (acc + projb_ref[0]).astype(o_ref.dtype)


def window_attention(x, qkv_w, qkv_b, proj_w, proj_b, rel_bias, mask,
                     num_heads):
  """x: (B, nW, N, C); mask: (nW, N, N); rel_bias: (H, N, N)."""
  B, nW, N, C = x.shape
  H = num_heads
  head_dim = C // num_heads
  scale = head_dim ** (-0.5)
  M = nW * N

  # Pre-fuse relative-position bias and the per-window mask once (wrapper glue).
  bias_mask = (rel_bias[None].astype(jnp.float32)
               + mask[:, None].astype(jnp.float32))              # (nW, H, N, N)

  # Present windows flattened so the kernel sees a lane/sublane-friendly
  # (M, C) activation slab per batch element.
  x_flat = x.reshape(B, M, C)

  kernel = functools.partial(_window_attn_kernel, num_heads=num_heads,
                             head_dim=head_dim, scale=scale, nW=nW, N=N)

  out_flat = pl.pallas_call(
      kernel,
      out_shape=jax.ShapeDtypeStruct((B, M, C), x.dtype),
      grid_spec=pltpu.PrefetchScalarGridSpec(
          num_scalar_prefetch=0,
          grid=(B,),                                   # >=2 parallel steps (v7x)
          in_specs=[
              pl.BlockSpec((1, M, C), lambda b: (b, 0, 0)),          # x
              pl.BlockSpec((C, 3 * C), lambda b: (0, 0)),            # qkv_w
              pl.BlockSpec((1, 3 * C), lambda b: (0, 0)),            # qkv_b
              pl.BlockSpec((C, C), lambda b: (0, 0)),                # proj_w
              pl.BlockSpec((1, C), lambda b: (0, 0)),                # proj_b
              pl.BlockSpec((nW, H, N, N), lambda b: (0, 0, 0, 0)),   # bias+mask
          ],
          out_specs=pl.BlockSpec((1, M, C), lambda b: (b, 0, 0)),
      ),
      compiler_params=pltpu.CompilerParams(
          dimension_semantics=("parallel",)),
  )(x_flat, qkv_w, qkv_b, proj_w, proj_b, bias_mask)

  return out_flat.reshape(B, nW, N, C)


def relative_position_index(window_size):
  """Exact replica of the PyTorch buffer computation."""
  Wh, Ww = window_size
  coords_h = np.arange(Wh)
  coords_w = np.arange(Ww)
  coords = np.stack(np.meshgrid(coords_h, coords_w, indexing="ij"))   # (2,Wh,Ww)
  coords_flat = coords.reshape(2, -1)                                  # (2, N)
  rel = coords_flat[:, :, None] - coords_flat[:, None, :]              # (2,N,N)
  rel = rel.transpose(1, 2, 0).copy()                                  # (N,N,2)
  rel[:, :, 0] += Wh - 1
  rel[:, :, 1] += Ww - 1
  rel[:, :, 0] *= 2 * Ww - 1
  return rel.sum(-1)                                                   # (N,N)


def reference(x, qkv_w, qkv_b, proj_w, proj_b, rel_bias, mask, num_heads):
  """Pure-JAX reference mirroring the PyTorch forward."""
  B, nW, N, C = x.shape
  hd = C // num_heads
  scale = hd ** (-0.5)
  xf = x.reshape(B * nW, N, C)
  qkv = xf @ qkv_w + qkv_b[0]                               # (B_, N, 3C)
  qkv = qkv.reshape(B * nW, N, 3, num_heads, hd).transpose(2, 0, 3, 1, 4)
  q, k, v = qkv[0] * scale, qkv[1], qkv[2]                  # (B_, H, N, hd)
  attn = jnp.einsum("bhqd,bhkd->bhqk", q, k)
  attn = attn + rel_bias[None]
  attn = attn.reshape(B, nW, num_heads, N, N) + mask[None, :, None]
  attn = attn.reshape(B * nW, num_heads, N, N)
  attn = jax.nn.softmax(attn, axis=-1)
  out = jnp.einsum("bhqk,bhkd->bhqd", attn, v)
  out = out.transpose(0, 2, 1, 3).reshape(B * nW, N, C)
  out = out @ proj_w + proj_b[0]
  return out.reshape(B, nW, N, C)


if __name__ == "__main__":
  # Small, module-consistent shapes.
  B = 2                      # batch
  window_size = (4, 4)       # (Wh, Ww)  ->  N = 16 tokens per window
  nW = 4                     # number of windows (e.g. 8x8 feature map)
  dim = 32                   # channels
  num_heads = 4
  N = window_size[0] * window_size[1]

  key = jax.random.PRNGKey(0)
  kx, kt, kqw, kqb, kpw, kpb, km = jax.random.split(key, 7)

  # Input features (num_windows*B, N, C) laid out as (B, nW, N, C).
  x = jax.random.normal(kx, (B, nW, N, dim), dtype=jnp.float32)

  # Parameters (deterministic init; trunc_normal approximated by normal*0.02).
  num_rel = (2 * window_size[0] - 1) * (2 * window_size[1] - 1)
  rel_table = jax.random.normal(kt, (num_rel, num_heads), jnp.float32) * 0.02
  # PyTorch Linear weights are (out, in); pass transposed (in, out) to kernel.
  qkv_w = jax.random.normal(kqw, (dim, 3 * dim), jnp.float32) * 0.05
  qkv_b = (jax.random.normal(kqb, (3 * dim,), jnp.float32) * 0.05).reshape(1, -1)
  proj_w = jax.random.normal(kpw, (dim, dim), jnp.float32) * 0.05
  proj_b = (jax.random.normal(kpb, (dim,), jnp.float32) * 0.05).reshape(1, -1)

  # Relative position bias gather (glue, done once in plain JAX).
  rpi = relative_position_index(window_size)                      # (N, N)
  rel_bias = rel_table[rpi.reshape(-1)].reshape(N, N, num_heads)
  rel_bias = jnp.transpose(rel_bias, (2, 0, 1))                   # (H, N, N)

  # Shifted-window attention mask (0 / -inf pattern), shape (nW, N, N).
  mask = jnp.where(jax.random.uniform(km, (nW, N, N)) < 0.1, -1e9, 0.0)
  mask = mask.astype(jnp.float32)

  out = window_attention(x, qkv_w, qkv_b, proj_w, proj_b, rel_bias, mask,
                         num_heads)
  out = jax.block_until_ready(out)

  ref = reference(x, qkv_w, qkv_b, proj_w, proj_b, rel_bias, mask, num_heads)
  # Tolerance loosened slightly because the softmax denominator uses the EUP
  # approximate reciprocal (pl.reciprocal(..., approx=True)).
  np.testing.assert_allclose(np.asarray(out), np.asarray(ref),
                             rtol=5e-3, atol=5e-3)
  print("KERNEL_OK")
</pallas_src>

<mosaic_0001>
module attributes {stable_mosaic.version = 11 : i64} {
  func.func @_window_attn_kernel(%arg0: i32, %arg1: memref<1x64x32xf32, #tpu.memory_space<vmem>>, %arg2: memref<32x96xf32, #tpu.memory_space<vmem>>, %arg3: memref<1x96xf32, #tpu.memory_space<vmem>>, %arg4: memref<32x32xf32, #tpu.memory_space<vmem>>, %arg5: memref<1x32xf32, #tpu.memory_space<vmem>>, %arg6: memref<4x4x16x16xf32, #tpu.memory_space<vmem>>, %arg7: memref<1x64x32xf32, #tpu.memory_space<vmem>>) attributes {dimension_semantics = [#tpu.dimension_semantics<parallel>], iteration_bounds = array<i64: 2>, scalar_prefetch = 0 : i64, scratch_operands = 0 : i64, tpu.core_type = #tpu.core_type<tc>, window_params = [{transform_indices = @transform_0, window_bounds = array<i64: 1, 64, 32>}, {pipeline_mode = #tpu.pipeline_mode<synchronous>, transform_indices = @transform_1, window_bounds = array<i64: 32, 96>}, {pipeline_mode = #tpu.pipeline_mode<synchronous>, transform_indices = @transform_2, window_bounds = array<i64: 1, 96>}, {pipeline_mode = #tpu.pipeline_mode<synchronous>, transform_indices = @transform_3, window_bounds = array<i64: 32, 32>}, {pipeline_mode = #tpu.pipeline_mode<synchronous>, transform_indices = @transform_4, window_bounds = array<i64: 1, 32>}, {pipeline_mode = #tpu.pipeline_mode<synchronous>, transform_indices = @transform_5, window_bounds = array<i64: 4, 4, 16, 16>}, {transform_indices = @transform_6, window_bounds = array<i64: 1, 64, 32>}]} {
    %c0 = arith.constant 0 : index
    %c0_0 = arith.constant 0 : index
    %c0_1 = arith.constant 0 : index
    %0 = vector.load %arg1[%c0, %c0_0, %c0_1] : memref<1x64x32xf32, #tpu.memory_space<vmem>>, vector<1x64x32xf32>
    %1 = vector.shape_cast %0 : vector<1x64x32xf32> to vector<64x32xf32>
    %c0_2 = arith.constant 0 : index
    %c0_3 = arith.constant 0 : index
    %2 = vector.load %arg2[%c0_2, %c0_3] : memref<32x96xf32, #tpu.memory_space<vmem>>, vector<32x96xf32>
    %cst = arith.constant dense<0.000000e+00> : vector<64x96xf32>
    %3 = tpu.matmul %1, %2, %cst {dimension_numbers = #tpu.dot_dimension_numbers<[1], [0], [0], [1], [0, 0, 1, 1], [], []>} : vector<64x32xf32>, vector<32x96xf32>, vector<64x96xf32> -> vector<64x96xf32>
    %c0_4 = arith.constant 0 : index
    %c0_5 = arith.constant 0 : index
    %4 = vector.load %arg3[%c0_4, %c0_5] : memref<1x96xf32, #tpu.memory_space<vmem>>, vector<1x96xf32>
    %5 = vector.shape_cast %4 : vector<1x96xf32> to vector<96xf32>
    %6 = vector.shape_cast %5 : vector<96xf32> to vector<1x96xf32>
    %7 = vector.broadcast %6 : vector<1x96xf32> to vector<64x96xf32>
    %8 = arith.addf %3, %7 : vector<64x96xf32>
    %9 = vector.shape_cast %8 : vector<64x96xf32> to vector<4x16x96xf32>
    %c0_6 = arith.constant 0 : index
    %c0_7 = arith.constant 0 : index
    %c0_8 = arith.constant 0 : index
    %c0_9 = arith.constant 0 : index
    %10 = vector.load %arg6[%c0_6, %c0_7, %c0_8, %c0_9] : memref<4x4x16x16xf32, #tpu.memory_space<vmem>>, vector<4x4x16x16xf32>
    %c0_10 = arith.constant 0 : index
    %c0_11 = arith.constant 0 : index
    %11 = vector.load %arg4[%c0_10, %c0_11] : memref<32x32xf32, #tpu.memory_space<vmem>>, vector<32x32xf32>
    %cst_12 = arith.constant 0.000000e+00 : f32
    %12 = vector.broadcast %cst_12 : f32 to vector<64x32xf32>
    %13 = vector.extract_strided_slice %9 {offsets = [0, 0, 0], sizes = [4, 16, 8], strides = [1, 1, 1]} : vector<4x16x96xf32> to vector<4x16x8xf32>
    %cst_13 = arith.constant 0.353553385 : f32
    %14 = vector.broadcast %cst_13 : f32 to vector<4x16x8xf32>
    %15 = arith.mulf %13, %14 : vector<4x16x8xf32>
    %16 = vector.extract_strided_slice %9 {offsets = [0, 0, 32], sizes = [4, 16, 8], strides = [1, 1, 1]} : vector<4x16x96xf32> to vector<4x16x8xf32>
    %17 = vector.extract_strided_slice %9 {offsets = [0, 0, 64], sizes = [4, 16, 8], strides = [1, 1, 1]} : vector<4x16x96xf32> to vector<4x16x8xf32>
    "tpu.trace_start"() <{level = 10 : i32, message = "wqd,wkd->wqk"}> : () -> ()
    %cst_14 = arith.constant dense<0.000000e+00> : vector<4x16x16xf32>
    %18 = tpu.matmul %15, %16, %cst_14 {dimension_numbers = #tpu.dot_dimension_numbers<[2], [2], [1], [1], [0, 0, 0, 1, 1, 1], [0], [0]>} : vector<4x16x8xf32>, vector<4x16x8xf32>, vector<4x16x16xf32> -> vector<4x16x16xf32>
    "tpu.trace_stop"() : () -> ()
    %19 = vector.extract_strided_slice %10 {offsets = [0, 0, 0, 0], sizes = [4, 1, 16, 16], strides = [1, 1, 1, 1]} : vector<4x4x16x16xf32> to vector<4x1x16x16xf32>
    %20 = vector.shape_cast %19 : vector<4x1x16x16xf32> to vector<4x16x16xf32>
    %21 = arith.addf %18, %20 : vector<4x16x16xf32>
    %cst_15 = arith.constant dense<0xFF800000> : vector<4x16xf32>
    %22 = vector.multi_reduction <maximumf>, %21, %cst_15 [2] : vector<4x16x16xf32> to vector<4x16xf32>
    %23 = vector.shape_cast %22 : vector<4x16xf32> to vector<4x16x1xf32>
    %24 = vector.broadcast %23 : vector<4x16x1xf32> to vector<4x16x16xf32>
    %25 = arith.subf %21, %24 : vector<4x16x16xf32>
    %26 = math.exp %25 : vector<4x16x16xf32>
    %cst_16 = arith.constant dense<0.000000e+00> : vector<4x16xf32>
    %27 = vector.multi_reduction <add>, %26, %cst_16 [2] : vector<4x16x16xf32> to vector<4x16xf32>
    %28 = vector.shape_cast %27 : vector<4x16xf32> to vector<4x16x1xf32>
    %29 = tpu.reciprocal %28 {approx = true} : vector<4x16x1xf32> -> vector<4x16x1xf32>
    %30 = vector.broadcast %29 : vector<4x16x1xf32> to vector<4x16x16xf32>
    %31 = arith.mulf %26, %30 : vector<4x16x16xf32>
    "tpu.trace_start"() <{level = 10 : i32, message = "wqk,wkd->wqd"}> : () -> ()
    %cst_17 = arith.constant dense<0.000000e+00> : vector<4x16x8xf32>
    %32 = tpu.matmul %31, %17, %cst_17 {dimension_numbers = #tpu.dot_dimension_numbers<[2], [1], [1], [2], [0, 0, 0, 1, 1, 2], [0], [0]>} : vector<4x16x16xf32>, vector<4x16x8xf32>, vector<4x16x8xf32> -> vector<4x16x8xf32>
    "tpu.trace_stop"() : () -> ()
    %33 = vector.shape_cast %32 : vector<4x16x8xf32> to vector<64x8xf32>
    %34 = vector.extract_strided_slice %11 {offsets = [0, 0], sizes = [8, 32], strides = [1, 1]} : vector<32x32xf32> to vector<8x32xf32>
    %cst_18 = arith.constant dense<0.000000e+00> : vector<64x32xf32>
    %35 = tpu.matmul %33, %34, %cst_18 {dimension_numbers = #tpu.dot_dimension_numbers<[1], [0], [0], [1], [0, 0, 1, 1], [], []>} : vector<64x8xf32>, vector<8x32xf32>, vector<64x32xf32> -> vector<64x32xf32>
    %36 = arith.addf %12, %35 : vector<64x32xf32>
    %37 = vector.extract_strided_slice %9 {offsets = [0, 0, 8], sizes = [4, 16, 8], strides = [1, 1, 1]} : vector<4x16x96xf32> to vector<4x16x8xf32>
    %cst_19 = arith.constant 0.353553385 : f32
    %38 = vector.broadcast %cst_19 : f32 to vector<4x16x8xf32>
    %39 = arith.mulf %37, %38 : vector<4x16x8xf32>
    %40 = vector.extract_strided_slice %9 {offsets = [0, 0, 40], sizes = [4, 16, 8], strides = [1, 1, 1]} : vector<4x16x96xf32> to vector<4x16x8xf32>
    %41 = vector.extract_strided_slice %9 {offsets = [0, 0, 72], sizes = [4, 16, 8], strides = [1, 1, 1]} : vector<4x16x96xf32> to vector<4x16x8xf32>
    "tpu.trace_start"() <{level = 10 : i32, message = "wqd,wkd->wqk"}> : () -> ()
    %cst_20 = arith.constant dense<0.000000e+00> : vector<4x16x16xf32>
    %42 = tpu.matmul %39, %40, %cst_20 {dimension_numbers = #tpu.dot_dimension_numbers<[2], [2], [1], [1], [0, 0, 0, 1, 1, 1], [0], [0]>} : vector<4x16x8xf32>, vector<4x16x8xf32>, vector<4x16x16xf32> -> vector<4x16x16xf32>
    "tpu.trace_stop"() : () -> ()
    %43 = vector.extract_strided_slice %10 {offsets = [0, 1, 0, 0], sizes = [4, 1, 16, 16], strides = [1, 1, 1, 1]} : vector<4x4x16x16xf32> to vector<4x1x16x16xf32>
    %44 = vector.shape_cast %43 : vector<4x1x16x16xf32> to vector<4x16x16xf32>
    %45 = arith.addf %42, %44 : vector<4x16x16xf32>
    %cst_21 = arith.constant dense<0xFF800000> : vector<4x16xf32>
    %46 = vector.multi_reduction <maximumf>, %45, %cst_21 [2] : vector<4x16x16xf32> to vector<4x16xf32>
    %47 = vector.shape_cast %46 : vector<4x16xf32> to vector<4x16x1xf32>
    %48 = vector.broadcast %47 : vector<4x16x1xf32> to vector<4x16x16xf32>
    %49 = arith.subf %45, %48 : vector<4x16x16xf32>
    %50 = math.exp %49 : vector<4x16x16xf32>
    %cst_22 = arith.constant dense<0.000000e+00> : vector<4x16xf32>
    %51 = vector.multi_reduction <add>, %50, %cst_22 [2] : vector<4x16x16xf32> to vector<4x16xf32>
    %52 = vector.shape_cast %51 : vector<4x16xf32> to vector<4x16x1xf32>
    %53 = tpu.reciprocal %52 {approx = true} : vector<4x16x1xf32> -> vector<4x16x1xf32>
    %54 = vector.broadcast %53 : vector<4x16x1xf32> to vector<4x16x16xf32>
    %55 = arith.mulf %50, %54 : vector<4x16x16xf32>
    "tpu.trace_start"() <{level = 10 : i32, message = "wqk,wkd->wqd"}> : () -> ()
    %cst_23 = arith.constant dense<0.000000e+00> : vector<4x16x8xf32>
    %56 = tpu.matmul %55, %41, %cst_23 {dimension_numbers = #tpu.dot_dimension_numbers<[2], [1], [1], [2], [0, 0, 0, 1, 1, 2], [0], [0]>} : vector<4x16x16xf32>, vector<4x16x8xf32>, vector<4x16x8xf32> -> vector<4x16x8xf32>
    "tpu.trace_stop"() : () -> ()
    %57 = vector.shape_cast %56 : vector<4x16x8xf32> to vector<64x8xf32>
    %58 = vector.extract_strided_slice %11 {offsets = [8, 0], sizes = [8, 32], strides = [1, 1]} : vector<32x32xf32> to vector<8x32xf32>
    %cst_24 = arith.constant dense<0.000000e+00> : vector<64x32xf32>
    %59 = tpu.matmul %57, %58, %cst_24 {dimension_numbers = #tpu.dot_dimension_numbers<[1], [0], [0], [1], [0, 0, 1, 1], [], []>} : vector<64x8xf32>, vector<8x32xf32>, vector<64x32xf32> -> vector<64x32xf32>
    %60 = arith.addf %36, %59 : vector<64x32xf32>
    %61 = vector.extract_strided_slice %9 {offsets = [0, 0, 16], sizes = [4, 16, 8], strides = [1, 1, 1]} : vector<4x16x96xf32> to vector<4x16x8xf32>
    %cst_25 = arith.constant 0.353553385 : f32
    %62 = vector.broadcast %cst_25 : f32 to vector<4x16x8xf32>
    %63 = arith.mulf %61, %62 : vector<4x16x8xf32>
    %64 = vector.extract_strided_slice %9 {offsets = [0, 0, 48], sizes = [4, 16, 8], strides = [1, 1, 1]} : vector<4x16x96xf32> to vector<4x16x8xf32>
    %65 = vector.extract_strided_slice %9 {offsets = [0, 0, 80], sizes = [4, 16, 8], strides = [1, 1, 1]} : vector<4x16x96xf32> to vector<4x16x8xf32>
    "tpu.trace_start"() <{level = 10 : i32, message = "wqd,wkd->wqk"}> : () -> ()
    %cst_26 = arith.constant dense<0.000000e+00> : vector<4x16x16xf32>
    %66 = tpu.matmul %63, %64, %cst_26 {dimension_numbers = #tpu.dot_dimension_numbers<[2], [2], [1], [1], [0, 0, 0, 1, 1, 1], [0], [0]>} : vector<4x16x8xf32>, vector<4x16x8xf32>, vector<4x16x16xf32> -> vector<4x16x16xf32>
    "tpu.trace_stop"() : () -> ()
    %67 = vector.extract_strided_slice %10 {offsets = [0, 2, 0, 0], sizes = [4, 1, 16, 16], strides = [1, 1, 1, 1]} : vector<4x4x16x16xf32> to vector<4x1x16x16xf32>
    %68 = vector.shape_cast %67 : vector<4x1x16x16xf32> to vector<4x16x16xf32>
    %69 = arith.addf %66, %68 : vector<4x16x16xf32>
    %cst_27 = arith.constant dense<0xFF800000> : vector<4x16xf32>
    %70 = vector.multi_reduction <maximumf>, %69, %cst_27 [2] : vector<4x16x16xf32> to vector<4x16xf32>
    %71 = vector.shape_cast %70 : vector<4x16xf32> to vector<4x16x1xf32>
    %72 = vector.broadcast %71 : vector<4x16x1xf32> to vector<4x16x16xf32>
    %73 = arith.subf %69, %72 : vector<4x16x16xf32>
    %74 = math.exp %73 : vector<4x16x16xf32>
    %cst_28 = arith.constant dense<0.000000e+00> : vector<4x16xf32>
    %75 = vector.multi_reduction <add>, %74, %cst_28 [2] : vector<4x16x16xf32> to vector<4x16xf32>
    %76 = vector.shape_cast %75 : vector<4x16xf32> to vector<4x16x1xf32>
    %77 = tpu.reciprocal %76 {approx = true} : vector<4x16x1xf32> -> vector<4x16x1xf32>
    %78 = vector.broadcast %77 : vector<4x16x1xf32> to vector<4x16x16xf32>
    %79 = arith.mulf %74, %78 : vector<4x16x16xf32>
    "tpu.trace_start"() <{level = 10 : i32, message = "wqk,wkd->wqd"}> : () -> ()
    %cst_29 = arith.constant dense<0.000000e+00> : vector<4x16x8xf32>
    %80 = tpu.matmul %79, %65, %cst_29 {dimension_numbers = #tpu.dot_dimension_numbers<[2], [1], [1], [2], [0, 0, 0, 1, 1, 2], [0], [0]>} : vector<4x16x16xf32>, vector<4x16x8xf32>, vector<4x16x8xf32> -> vector<4x16x8xf32>
    "tpu.trace_stop"() : () -> ()
    %81 = vector.shape_cast %80 : vector<4x16x8xf32> to vector<64x8xf32>
    %82 = vector.extract_strided_slice %11 {offsets = [16, 0], sizes = [8, 32], strides = [1, 1]} : vector<32x32xf32> to vector<8x32xf32>
    %cst_30 = arith.constant dense<0.000000e+00> : vector<64x32xf32>
    %83 = tpu.matmul %81, %82, %cst_30 {dimension_numbers = #tpu.dot_dimension_numbers<[1], [0], [0], [1], [0, 0, 1, 1], [], []>} : vector<64x8xf32>, vector<8x32xf32>, vector<64x32xf32> -> vector<64x32xf32>
    %84 = arith.addf %60, %83 : vector<64x32xf32>
    %85 = vector.extract_strided_slice %9 {offsets = [0, 0, 24], sizes = [4, 16, 8], strides = [1, 1, 1]} : vector<4x16x96xf32> to vector<4x16x8xf32>
    %cst_31 = arith.constant 0.353553385 : f32
    %86 = vector.broadcast %cst_31 : f32 to vector<4x16x8xf32>
    %87 = arith.mulf %85, %86 : vector<4x16x8xf32>
    %88 = vector.extract_strided_slice %9 {offsets = [0, 0, 56], sizes = [4, 16, 8], strides = [1, 1, 1]} : vector<4x16x96xf32> to vector<4x16x8xf32>
    %89 = vector.extract_strided_slice %9 {offsets = [0, 0, 88], sizes = [4, 16, 8], strides = [1, 1, 1]} : vector<4x16x96xf32> to vector<4x16x8xf32>
    "tpu.trace_start"() <{level = 10 : i32, message = "wqd,wkd->wqk"}> : () -> ()
    %cst_32 = arith.constant dense<0.000000e+00> : vector<4x16x16xf32>
    %90 = tpu.matmul %87, %88, %cst_32 {dimension_numbers = #tpu.dot_dimension_numbers<[2], [2], [1], [1], [0, 0, 0, 1, 1, 1], [0], [0]>} : vector<4x16x8xf32>, vector<4x16x8xf32>, vector<4x16x16xf32> -> vector<4x16x16xf32>
    "tpu.trace_stop"() : () -> ()
    %91 = vector.extract_strided_slice %10 {offsets = [0, 3, 0, 0], sizes = [4, 1, 16, 16], strides = [1, 1, 1, 1]} : vector<4x4x16x16xf32> to vector<4x1x16x16xf32>
    %92 = vector.shape_cast %91 : vector<4x1x16x16xf32> to vector<4x16x16xf32>
    %93 = arith.addf %90, %92 : vector<4x16x16xf32>
    %cst_33 = arith.constant dense<0xFF800000> : vector<4x16xf32>
    %94 = vector.multi_reduction <maximumf>, %93, %cst_33 [2] : vector<4x16x16xf32> to vector<4x16xf32>
    %95 = vector.shape_cast %94 : vector<4x16xf32> to vector<4x16x1xf32>
    %96 = vector.broadcast %95 : vector<4x16x1xf32> to vector<4x16x16xf32>
    %97 = arith.subf %93, %96 : vector<4x16x16xf32>
    %98 = math.exp %97 : vector<4x16x16xf32>
    %cst_34 = arith.constant dense<0.000000e+00> : vector<4x16xf32>
    %99 = vector.multi_reduction <add>, %98, %cst_34 [2] : vector<4x16x16xf32> to vector<4x16xf32>
    %100 = vector.shape_cast %99 : vector<4x16xf32> to vector<4x16x1xf32>
    %101 = tpu.reciprocal %100 {approx = true} : vector<4x16x1xf32> -> vector<4x16x1xf32>
    %102 = vector.broadcast %101 : vector<4x16x1xf32> to vector<4x16x16xf32>
    %103 = arith.mulf %98, %102 : vector<4x16x16xf32>
    "tpu.trace_start"() <{level = 10 : i32, message = "wqk,wkd->wqd"}> : () -> ()
    %cst_35 = arith.constant dense<0.000000e+00> : vector<4x16x8xf32>
    %104 = tpu.matmul %103, %89, %cst_35 {dimension_numbers = #tpu.dot_dimension_numbers<[2], [1], [1], [2], [0, 0, 0, 1, 1, 2], [0], [0]>} : vector<4x16x16xf32>, vector<4x16x8xf32>, vector<4x16x8xf32> -> vector<4x16x8xf32>
    "tpu.trace_stop"() : () -> ()
    %105 = vector.shape_cast %104 : vector<4x16x8xf32> to vector<64x8xf32>
    %106 = vector.extract_strided_slice %11 {offsets = [24, 0], sizes = [8, 32], strides = [1, 1]} : vector<32x32xf32> to vector<8x32xf32>
    %cst_36 = arith.constant dense<0.000000e+00> : vector<64x32xf32>
    %107 = tpu.matmul %105, %106, %cst_36 {dimension_numbers = #tpu.dot_dimension_numbers<[1], [0], [0], [1], [0, 0, 1, 1], [], []>} : vector<64x8xf32>, vector<8x32xf32>, vector<64x32xf32> -> vector<64x32xf32>
    %108 = arith.addf %84, %107 : vector<64x32xf32>
    %c0_37 = arith.constant 0 : index
    %c0_38 = arith.constant 0 : index
    %109 = vector.load %arg5[%c0_37, %c0_38] : memref<1x32xf32, #tpu.memory_space<vmem>>, vector<1x32xf32>
    %110 = vector.shape_cast %109 : vector<1x32xf32> to vector<32xf32>
    %111 = vector.shape_cast %110 : vector<32xf32> to vector<1x32xf32>
    %112 = vector.broadcast %111 : vector<1x32xf32> to vector<64x32xf32>
    %113 = arith.addf %108, %112 : vector<64x32xf32>
    %c0_39 = arith.constant 0 : index
    %c0_40 = arith.constant 0 : index
    %c0_41 = arith.constant 0 : index
    %114 = vector.load %arg7[%c0_39, %c0_40, %c0_41] : memref<1x64x32xf32, #tpu.memory_space<vmem>>, vector<1x64x32xf32>
    %115 = vector.shape_cast %114 : vector<1x64x32xf32> to vector<64x32xf32>
    %116 = vector.shape_cast %113 : vector<64x32xf32> to vector<1x64x32xf32>
    tpu.vector_store %arg7[%c0_39, %c0_40, %c0_41], %116 {strides = array<i32>} : memref<1x64x32xf32, #tpu.memory_space<vmem>>, vector<1x64x32xf32>,
    return
  }
  func.func @transform_0(%arg0: i32) -> (i32, i32, i32) {
    %c0_i32 = arith.constant 0 : i32
    %c0_i32_0 = arith.constant 0 : i32
    %c0_i32_1 = arith.constant 0 : i32
    return %arg0, %c0_i32, %c0_i32_0 : i32, i32, i32
  }
  func.func @transform_1(%arg0: i32) -> (i32, i32) {
    %c0_i32 = arith.constant 0 : i32
    %c0_i32_0 = arith.constant 0 : i32
    %c0_i32_1 = arith.constant 0 : i32
    return %c0_i32, %c0_i32_0 : i32, i32
  }
  func.func @transform_2(%arg0: i32) -> (i32, i32) {
    %c0_i32 = arith.constant 0 : i32
    %c0_i32_0 = arith.constant 0 : i32
    %c0_i32_1 = arith.constant 0 : i32
    return %c0_i32, %c0_i32_0 : i32, i32
  }
  func.func @transform_3(%arg0: i32) -> (i32, i32) {
    %c0_i32 = arith.constant 0 : i32
    %c0_i32_0 = arith.constant 0 : i32
    %c0_i32_1 = arith.constant 0 : i32
    return %c0_i32, %c0_i32_0 : i32, i32
  }
  func.func @transform_4(%arg0: i32) -> (i32, i32) {
    %c0_i32 = arith.constant 0 : i32
    %c0_i32_0 = arith.constant 0 : i32
    %c0_i32_1 = arith.constant 0 : i32
    return %c0_i32, %c0_i32_0 : i32, i32
  }
  func.func @transform_5(%arg0: i32) -> (i32, i32, i32, i32) {
    %c0_i32 = arith.constant 0 : i32
    %c0_i32_0 = arith.constant 0 : i32
    %c0_i32_1 = arith.constant 0 : i32
    %c0_i32_2 = arith.constant 0 : i32
    %c0_i32_3 = arith.constant 0 : i32
    return %c0_i32, %c0_i32_0, %c0_i32_1, %c0_i32_2 : i32, i32, i32, i32
  }
  func.func @transform_6(%arg0: i32) -> (i32, i32, i32) {
    %c0_i32 = arith.constant 0 : i32
    %c0_i32_0 = arith.constant 0 : i32
    %c0_i32_1 = arith.constant 0 : i32
    return %arg0, %c0_i32, %c0_i32_0 : i32, i32, i32
  }
}

</mosaic_0001>

<llo_original>
// kernel: tpu_custom_call.1
$region0: #{tpu_custom_call.1}
  #allocation0 [shape = 'u32[]', space=smem, size = 0x4, offset = 0x4, fixed_abs, tag = 'smem constant byte address 0x4 - core index']
  #allocation1 [shape = 'u32[144,128]{1,0:T(1,128)}', space=vmem, size = 0x12000, scoped, tag = 'internal scratch']
  %s0 = inlined_call_operand.vmem [shape: f32[2,64,32], index: 0, kind: input, shape index: {}]
  %s1 = inlined_call_operand.vmem [shape: f32[32,96], index: 1, kind: input, shape index: {}]
  %s2 = inlined_call_operand.vmem [shape: f32[1,96], index: 2, kind: input, shape index: {}]
  %s3 = inlined_call_operand.vmem [shape: f32[32,32], index: 3, kind: input, shape index: {}]
  %s4 = inlined_call_operand.vmem [shape: f32[1,32], index: 4, kind: input, shape index: {}]
  %s5 = inlined_call_operand.hbm [shape: f32[4,4,16,16], index: 5, kind: input, shape index: {}]
  %s6 = inlined_call_operand.vmem [shape: f32[2,64,32], index: 6, kind: output, shape index: {}]
  %s7 = sld [smem:[#allocation0]]
  $region61: #{tpu_custom_call.1} parent=0
    _
  %s9 = ssub.s32 1, %s7
  %s10 = scalar_select 0, %s9, %s7
  $region1: #{tpu_custom_call.1} parent=0
    #allocation2 [shape = 'u8[131072]{0}', space=vmem, size = 0x20000, scoped, tag = 'input window, operand 5, single buffered']
    #allocation3 [shape = 's32[2]{0}', space=sflag, size = 0x8, scoped, tag = 'scoped memory for tpu_custom_call.1']
    %11 = vsyncpa [#allocation3], 0
    loop: start=0, step=1, limit=4
    $region2: #{tpu_custom_call.1} parent=1 // loop_pre_header
      _
    $region3: #{tpu_custom_call.1} parent=1 // loop_header
      %s13 = sphi 0, %s17
      %p14 = scmp.ge.s32.totalorder %s13, 4
      %s23 = sphi 0, %s25
      %s26 = sphi 0, %s23
      %s27 = sphi 0, %s26
      %s43 = sphi 0, %s27
      %s47 = sphi 0, %s47
      %s49 = sphi 0, %s47
      %s50 = sphi 0, %s49
      %s64 = sphi 0, %s50
      %s68 = sphi 0, %s68
      %s70 = sphi 0, %s68
      %s71 = sphi 0, %s70
      %s85 = sphi 0, %s71
      %s89 = sphi 0, %s89
      %s91 = sphi 0, %s89
      %s92 = sphi 0, %s91
      %s106 = sphi 0, %s92
      %s110 = sphi 0, %s110
      %s112 = sphi 0, %s110
      %s113 = sphi 0, %s112
      %s127 = sphi 0, %s113
      %s131 = sphi 0, %s131
      %s133 = sphi 0, %s131
      %s134 = sphi 0, %s133
      %s148 = sphi 0, %s134
      %s154 = sphi 0, %s156
      %s157 = sphi 0, %s154
      %s158 = sphi 0, %s157
      %s174 = sphi 0, %s158
    $region4: #{tpu_custom_call.1} parent=1 // loop_header_branch
      %16 = sbr.rel (%p14) target = $region8
    $region5: #{tpu_custom_call.1} parent=1 // loop_body
      %s18 = ssub.s32 %s13, 1
      %s19 = ssub.s32 %s13, 2
      %s20 = sadd.s32 %s13, 1
      %s21 = ssub.s32 %s13, %s20
      %p22 = scmp.eq.s32.totalorder %s21, 0
      %s24 = sadd.s32 %s23, 1
      %s25 = scalar_select %p22, %s23, %s24
      %p28 = pneg %p22
      %p29 = scmp.eq.s32.totalorder %s13, 1
      %p30 = por %p28, %p29
      %p31 = scmp.ne.s32.totalorder %s23, %s26
      %p32 = scmp.eq.s32.totalorder %s13, 0
      %p33 = por %p31, %p32
      %p34 = scmp.ne.s32.totalorder %s23, %s26
      %p35 = scmp.eq.s32.totalorder %s18, 1
      %p36 = por %p34, %p35
      %p37 = scmp.ne.s32.totalorder %s26, %s27
      %p38 = scmp.eq.s32.totalorder %s18, 0
      %p39 = por %p37, %p38
      %p40 = scmp.ne.s32.totalorder %s26, %s27
      %p41 = scmp.eq.s32.totalorder %s19, 1
      %p42 = por %p40, %p41
      %p44 = scmp.ne.s32.totalorder %s27, %s43
      %p45 = scmp.eq.s32.totalorder %s19, 0
      %p46 = por %p44, %p45
      %s48 = sadd.s32 %s47, 1
      %p51 = scmp.eq.s32.totalorder %s13, 1
      %p52 = scmp.ne.s32.totalorder %s47, %s49
      %p53 = scmp.eq.s32.totalorder %s13, 0
      %p54 = por %p52, %p53
      %p55 = scmp.ne.s32.totalorder %s47, %s49
      %p56 = scmp.eq.s32.totalorder %s18, 1
      %p57 = por %p55, %p56
      %p58 = scmp.ne.s32.totalorder %s49, %s50
      %p59 = scmp.eq.s32.totalorder %s18, 0
      %p60 = por %p58, %p59
      %p61 = scmp.ne.s32.totalorder %s49, %s50
      %p62 = scmp.eq.s32.totalorder %s19, 1
      %p63 = por %p61, %p62
      %p65 = scmp.ne.s32.totalorder %s50, %s64
      %p66 = scmp.eq.s32.totalorder %s19, 0
      %p67 = por %p65, %p66
      %s69 = sadd.s32 %s68, 1
      %p72 = scmp.eq.s32.totalorder %s13, 1
      %p73 = scmp.ne.s32.totalorder %s68, %s70
      %p74 = scmp.eq.s32.totalorder %s13, 0
      %p75 = por %p73, %p74
      %p76 = scmp.ne.s32.totalorder %s68, %s70
      %p77 = scmp.eq.s32.totalorder %s18, 1
      %p78 = por %p76, %p77
      %p79 = scmp.ne.s32.totalorder %s70, %s71
      %p80 = scmp.eq.s32.totalorder %s18, 0
      %p81 = por %p79, %p80
      %p82 = scmp.ne.s32.totalorder %s70, %s71
      %p83 = scmp.eq.s32.totalorder %s19, 1
      %p84 = por %p82, %p83
      %p86 = scmp.ne.s32.totalorder %s71, %s85
      %p87 = scmp.eq.s32.totalorder %s19, 0
      %p88 = por %p86, %p87
      %s90 = sadd.s32 %s89, 1
      %p93 = scmp.eq.s32.totalorder %s13, 1
      %p94 = scmp.ne.s32.totalorder %s89, %s91
      %p95 = scmp.eq.s32.totalorder %s13, 0
      %p96 = por %p94, %p95
      %p97 = scmp.ne.s32.totalorder %s89, %s91
      %p98 = scmp.eq.s32.totalorder %s18, 1
      %p99 = por %p97, %p98
      %p100 = scmp.ne.s32.totalorder %s91, %s92
      %p101 = scmp.eq.s32.totalorder %s18, 0
      %p102 = por %p100, %p101
      %p103 = scmp.ne.s32.totalorder %s91, %s92
      %p104 = scmp.eq.s32.totalorder %s19, 1
      %p105 = por %p103, %p104
      %p107 = scmp.ne.s32.totalorder %s92, %s106
      %p108 = scmp.eq.s32.totalorder %s19, 0
      %p109 = por %p107, %p108
      %s111 = sadd.s32 %s110, 1
      %p114 = scmp.eq.s32.totalorder %s13, 1
      %p115 = scmp.ne.s32.totalorder %s110, %s112
      %p116 = scmp.eq.s32.totalorder %s13, 0
      %p117 = por %p115, %p116
      %p118 = scmp.ne.s32.totalorder %s110, %s112
      %p119 = scmp.eq.s32.totalorder %s18, 1
      %p120 = por %p118, %p119
      %p121 = scmp.ne.s32.totalorder %s112, %s113
      %p122 = scmp.eq.s32.totalorder %s18, 0
      %p123 = por %p121, %p122
      %p124 = scmp.ne.s32.totalorder %s112, %s113
      %p125 = scmp.eq.s32.totalorder %s19, 1
      %p126 = por %p124, %p125
      %p128 = scmp.ne.s32.totalorder %s113, %s127
      %p129 = scmp.eq.s32.totalorder %s19, 0
      %p130 = por %p128, %p129
      %s132 = sadd.s32 %s131, 1
      %p135 = scmp.eq.s32.totalorder %s13, 1
      %p136 = scmp.ne.s32.totalorder %s131, %s133
      %p137 = scmp.eq.s32.totalorder %s13, 0
      %p138 = por %p136, %p137
      %p139 = scmp.ne.s32.totalorder %s131, %s133
      %p140 = scmp.eq.s32.totalorder %s18, 1
      %p141 = por %p139, %p140
      %p142 = scmp.ne.s32.totalorder %s133, %s134
      %p143 = scmp.eq.s32.totalorder %s18, 0
      %p144 = por %p142, %p143
      %p145 = scmp.ne.s32.totalorder %s133, %s134
      %p146 = scmp.eq.s32.totalorder %s19, 1
      %p147 = por %p145, %p146
      %p149 = scmp.ne.s32.totalorder %s134, %s148
      %p150 = scmp.eq.s32.totalorder %s19, 0
      %p151 = por %p149, %p150
      %s152 = ssub.s32 %s13, %s20
      %p153 = scmp.eq.s32.totalorder %s152, 0
      %s155 = sadd.s32 %s154, 1
      %s156 = scalar_select %p153, %s154, %s155
      %p159 = pneg %p153
      %p160 = scmp.eq.s32.totalorder %s13, 1
      %p161 = por %p159, %p160
      %p162 = scmp.ne.s32.totalorder %s154, %s157
      %p163 = scmp.eq.s32.totalorder %s13, 0
      %p164 = por %p162, %p163
      %p165 = scmp.ne.s32.totalorder %s154, %s157
      %p166 = scmp.eq.s32.totalorder %s18, 1
      %p167 = por %p165, %p166
      %p168 = scmp.ne.s32.totalorder %s157, %s158
      %p169 = scmp.eq.s32.totalorder %s18, 0
      %p170 = por %p168, %p169
      %p171 = scmp.ne.s32.totalorder %s157, %s158
      %p172 = scmp.eq.s32.totalorder %s19, 1
      %p173 = por %p171, %p172
      %p175 = scmp.ne.s32.totalorder %s158, %s174
      %p176 = scmp.eq.s32.totalorder %s19, 0
      %p177 = por %p175, %p176
      %p178 = scmp.le.s32.totalorder 1, %s13
      %p179 = scmp.lt.s32.totalorder %s13, 3
      %p180 = pnand %p178, %p179
      %p181 = pneg %p180
      // Predicated region
      $region9: #{tpu_custom_call.1} parent=5 // pred_check
        _
      $region10: #{tpu_custom_call.1} parent=5 // pred_check_branch
        %183 = sbr.rel (%p180) target = $region12
      $region11: #{tpu_custom_call.1} parent=5 // pred_region
        %s184 = ssub.s32 %s13, 1
        // Predicated region
        $region13: #{tpu_custom_call.1} parent=11 // pred_check
          %p185 = pneg %p60
        $region14: #{tpu_custom_call.1} parent=11 // pred_check_branch
          %187 = sbr.rel (%p185) target = $region16
        $region15: #{tpu_custom_call.1} parent=11 // pred_region
          _
        $region16: #{tpu_custom_call.1} parent=11 // pred_fallthru
          _
        // Predicated region
        $region17: #{tpu_custom_call.1} parent=11 // pred_check
          %p188 = pneg %p81
        $region18: #{tpu_custom_call.1} parent=11 // pred_check_branch
          %190 = sbr.rel (%p188) target = $region20
        $region19: #{tpu_custom_call.1} parent=11 // pred_region
          _
        $region20: #{tpu_custom_call.1} parent=11 // pred_fallthru
          _
        // Predicated region
        $region21: #{tpu_custom_call.1} parent=11 // pred_check
          %p191 = pneg %p102
        $region22: #{tpu_custom_call.1} parent=11 // pred_check_branch
          %193 = sbr.rel (%p191) target = $region24
        $region23: #{tpu_custom_call.1} parent=11 // pred_region
          _
        $region24: #{tpu_custom_call.1} parent=11 // pred_fallthru
          _
        // Predicated region
        $region25: #{tpu_custom_call.1} parent=11 // pred_check
          %p194 = pneg %p123
        $region26: #{tpu_custom_call.1} parent=11 // pred_check_branch
          %196 = sbr.rel (%p194) target = $region28
        $region27: #{tpu_custom_call.1} parent=11 // pred_region
          _
        $region28: #{tpu_custom_call.1} parent=11 // pred_fallthru
          _
        // Predicated region
        $region29: #{tpu_custom_call.1} parent=11 // pred_check
          %p197 = pneg %p144
        $region30: #{tpu_custom_call.1} parent=11 // pred_check_branch
          %199 = sbr.rel (%p197) target = $region32
        $region31: #{tpu_custom_call.1} parent=11 // pred_region
          %s201 = ssub.s32 4096, 4096
          %202 = vsyncadd [#allocation3], %s201
          %s203 = sshll.u32 [#allocation2], 4
          %s204 = int_to_ptr.vmem [resolvable:$true] %s203
          %209 = dma.hbm_to_vmem [thread:$0]  %s5, 4096, %s204, [#allocation3], 128, 128, 8
        $region32: #{tpu_custom_call.1} parent=11 // pred_fallthru
          _
      $region12: #{tpu_custom_call.1} parent=5 // pred_fallthru
        _
      %p210 = scmp.lt.s32.totalorder %s13, 2
      // Predicated region
      $region33: #{tpu_custom_call.1} parent=5 // pred_check
        %p211 = pneg %p210
      $region34: #{tpu_custom_call.1} parent=5 // pred_check_branch
        %213 = sbr.rel (%p211) target = $region36
      $region35: #{tpu_custom_call.1} parent=5 // pred_region
        // Predicated region
        $region37: #{tpu_custom_call.1} parent=35 // pred_check
          %p214 = pneg %p33
        $region38: #{tpu_custom_call.1} parent=35 // pred_check_branch
          %216 = sbr.rel (%p214) target = $region40
        $region39: #{tpu_custom_call.1} parent=35 // pred_region
          %p217 = scmp.lt.s32.totalorder %s13, 1
          %s218 = scalar_select %p217, %s13, 1
          %s219 = smul.addr %s218, 8
          %s220 = smul.addr %s219, 8
          %s221 = scalar_lea.vmem %s0, %s220
        $region40: #{tpu_custom_call.1} parent=35 // pred_fallthru
          _
      $region36: #{tpu_custom_call.1} parent=5 // pred_fallthru
        _
      %p222 = scmp.le.s32.totalorder 1, %s13
      %p223 = scmp.lt.s32.totalorder %s13, 3
      %p224 = pnand %p222, %p223
      %p225 = pneg %p224
      // Predicated region
      $region41: #{tpu_custom_call.1} parent=5 // pred_check
        _
      $region42: #{tpu_custom_call.1} parent=5 // pred_check_branch
        %227 = sbr.rel (%p224) target = $region44
      $region43: #{tpu_custom_call.1} parent=5 // pred_region
        %s228 = ssub.s32 %s13, 1
        // Predicated region
        $region45: #{tpu_custom_call.1} parent=43 // pred_check
          %p229 = pneg %p144
        $region46: #{tpu_custom_call.1} parent=43 // pred_check_branch
          %231 = sbr.rel (%p229) target = $region48
        $region47: #{tpu_custom_call.1} parent=43 // pred_region
          %232 = dma.done [#allocation3], 4096
        $region48: #{tpu_custom_call.1} parent=43 // pred_fallthru
          _
        %p233 = scmp.lt.s32.totalorder %s18, 1
        %s234 = scalar_select %p233, %s18, 1
        %s235 = smul.addr %s234, 8
        %s236 = smul.addr %s235, 8
        %s237 = scalar_lea.vmem %s0, %s236
        %p238 = pneg %p39
        %p239 = pneg %p36
        %p240 = pneg %p60
        %p241 = pneg %p57
        %p242 = pneg %p81
        %p243 = pneg %p78
        %p244 = pneg %p102
        %p245 = pneg %p99
        %p246 = pneg %p123
        %p247 = pneg %p120
        %p248 = pneg %p144
        %p249 = pneg %p141
        %p250 = pneg %p170
        %p251 = pneg %p167
        %p252 = scmp.lt.s32.totalorder %s18, 1
        %s253 = scalar_select %p252, %s18, 1
        %s254 = smul.addr %s253, 8
        %s255 = smul.addr %s254, 8
        %s256 = scalar_lea.vmem %s6, %s255
        %p257 = scmp.lt.s32.totalorder %s18, 1
        %s258 = scalar_select %p257, %s18, 1
        %s259 = smul.addr %s258, 8
        %s260 = smul.addr %s259, 8
        %s261 = scalar_lea.vmem %s0, %s260
        %p262 = scmp.lt.s32.totalorder %s18, 1
        %s263 = scalar_select %p262, %s18, 1
        %s264 = smul.addr %s263, 8
        %s265 = smul.addr %s264, 8
        %s266 = scalar_lea.vmem %s6, %s265
        %v267 = vld [vmem:[%s261] sm:$0xff]
        %v268 = vld [vmem:[%s261 + $0x8] sm:$0xff]
        %v269 = vld [vmem:[%s261 + $0x10] sm:$0xff]
        %v270 = vld [vmem:[%s261 + $0x18] sm:$0xff]
        %v271 = vld [vmem:[%s261 + $0x20] sm:$0xff]
        %v272 = vld [vmem:[%s261 + $0x28] sm:$0xff]
        %v273 = vld [vmem:[%s261 + $0x30] sm:$0xff]
        %v274 = vld [vmem:[%s261 + $0x38] sm:$0xff]
        %v275 = vld [vmem:[%s1] sm:$0xff]
        %v276 = vld [vmem:[%s1 + $0x8] sm:$0xff]
        %v277 = vld [vmem:[%s1 + $0x10] sm:$0xff]
        %v278 = vld [vmem:[%s1 + $0x18] sm:$0xff]
        %v279 = vld [vmem:[%s2] sm:$0x1]
        %v281 = vlaneseq
        %v282 = vshrl.u32 %v281, 7
        %v283 = vsub.s32 0, %v282
        %v284 = vrot.slane %v279, %v283
        %vm286 = vcmask 261120
        %v288 = vsel %vm286, %v267, 0
        %v291 = vsel %vm286, %v268, 0
        %v294 = vsel %vm286, %v269, 0
        %v297 = vsel %vm286, %v270, 0
        %v300 = vsel %vm286, %v271, 0
        %v303 = vsel %vm286, %v272, 0
        %v306 = vsel %vm286, %v273, 0
        %v309 = vsel %vm286, %v274, 0
        %311 = vmatprep.subr.mxu0 0.0
        %312 = vmatpush1.msra.mxu0 %v275
        %313 = vmatprep.subr.mxu0 0.0
        %314 = vmatpush1.msra.mxu0 %v276
        %315 = vmatprep.subr.mxu0 0.0
        %316 = vmatpush1.msra.mxu0 %v277
        %317 = vmatprep.subr.mxu0 0.0
        %318 = vmatpush1.msra.mxu0 %v278
        %319 = vmatprep.subr.mxu0 0.0
        %320 = vmatpush1.msra.mxu0 0.0
        %321 = vmatprep.subr.mxu0 0.0
        %322 = vmatpush1.msra.mxu0 0.0
        %323 = vmatprep.subr.mxu0 0.0
        %324 = vmatpush1.msra.mxu0 0.0
        %325 = vmatprep.subr.mxu0 0.0
        %326 = vmatpush1.msra.mxu0 0.0
        %327 = vmatprep.subr.mxu0 0.0
        %328 = vmatpush1.msra.mxu0 0.0
        %329 = vmatprep.subr.mxu0 0.0
        %330 = vmatpush1.msra.mxu0 0.0
        %331 = vmatprep.subr.mxu0 0.0
        %332 = vmatpush1.msra.mxu0 0.0
        %333 = vmatprep.subr.mxu0 0.0
        %334 = vmatpush1.msra.mxu0 0.0
        %335 = vmatprep.subr.mxu0 0.0
        %336 = vmatpush1.msra.mxu0 0.0
        %337 = vmatprep.subr.mxu0 0.0
        %338 = vmatpush1.msra.mxu0 0.0
        %339 = vmatprep.subr.mxu0 0.0
        %340 = vmatpush1.msra.mxu0 0.0
        %341 = vmatprep.subr.mxu0 0.0
        %342 = vmatpush1.msra.mxu0 0.0
        %343 = vmatprep.subr.mxu0 0.0
        %344 = vmatpush1.msra.mxu0 0.0
        %345 = vmatprep.subr.mxu0 0.0
        %346 = vmatpush1.msra.mxu0 0.0
        %347 = vmatprep.subr.mxu0 0.0
        %348 = vmatpush1.msra.mxu0 0.0
        %349 = vmatprep.subr.mxu0 0.0
        %350 = vmatpush1.msra.mxu0 0.0
        %351 = vmatprep.subr.mxu0 0.0
        %352 = vmatpush1.msra.mxu0 0.0
        %353 = vmatprep.subr.mxu0 0.0
        %354 = vmatpush1.msra.mxu0 0.0
        %355 = vmatprep.subr.mxu0 0.0
        %356 = vmatpush1.msra.mxu0 0.0
        %357 = vmatprep.subr.mxu0 0.0
        %358 = vmatpush1.msra.mxu0 0.0
        %359 = vmatprep.subr.mxu0 0.0
        %360 = vmatpush1.msra.mxu0 0.0
        %361 = vmatprep.subr.mxu0 0.0
        %362 = vmatpush1.msra.mxu0 0.0
        %363 = vmatprep.subr.mxu0 0.0
        %364 = vmatpush1.msra.mxu0 0.0
        %365 = vmatprep.subr.mxu0 0.0
        %366 = vmatpush1.msra.mxu0 0.0
        %367 = vmatprep.subr.mxu0 0.0
        %368 = vmatpush1.msra.mxu0 0.0
        %369 = vmatprep.subr.mxu0 0.0
        %370 = vmatpush1.msra.mxu0 0.0
        %371 = vmatprep.subr.mxu0 0.0
        %372 = vmatpush1.msra.mxu0 0.0
        %373 = vmatprep.subr.mxu0 0.0
        %374 = vmatpush1.msra.mxu0 0.0
        %375 = vmatprep.mubr.f32.mxu0 0.0
        %376 = vmatmul.mubr.f32.gmra.mrb[0].mxu0 %v288
        %v377 = vpop.f32.mrb[0].mxu0
        %v378 = vadd.f32 %v284, %v377
        %v379 = vpop.f32.mrb[0].mxu0
        %380 = vmatprep.mubr.f32.mxu0 0.0
        %381 = vmatmul.mubr.f32.gmra.mrb[0].mxu0 %v291
        %v382 = vpop.f32.mrb[0].mxu0
        %v383 = vadd.f32 %v284, %v382
        %v384 = vpop.f32.mrb[0].mxu0
        %385 = vmatprep.mubr.f32.mxu0 0.0
        %386 = vmatmul.mubr.f32.gmra.mrb[0].mxu0 %v294
        %v387 = vpop.f32.mrb[0].mxu0
        %v388 = vadd.f32 %v284, %v387
        %v389 = vpop.f32.mrb[0].mxu0
        %390 = vmatprep.mubr.f32.mxu0 0.0
        %391 = vmatmul.mubr.f32.gmra.mrb[0].mxu0 %v297
        %v392 = vpop.f32.mrb[0].mxu0
        %v393 = vadd.f32 %v284, %v392
        %v394 = vpop.f32.mrb[0].mxu0
        %395 = vmatprep.mubr.f32.mxu0 0.0
        %396 = vmatmul.mubr.f32.gmra.mrb[0].mxu0 %v300
        %v397 = vpop.f32.mrb[0].mxu0
        %v398 = vadd.f32 %v284, %v397
        %v399 = vpop.f32.mrb[0].mxu0
        %400 = vmatprep.mubr.f32.mxu0 0.0
        %401 = vmatmul.mubr.f32.gmra.mrb[0].mxu0 %v303
        %v402 = vpop.f32.mrb[0].mxu0
        %v403 = vadd.f32 %v284, %v402
        %v404 = vpop.f32.mrb[0].mxu0
        %405 = vmatprep.mubr.f32.mxu0 0.0
        %406 = vmatmul.mubr.f32.gmra.mrb[0].mxu0 %v306
        %v407 = vpop.f32.mrb[0].mxu0
        %v408 = vadd.f32 %v284, %v407
        %v409 = vpop.f32.mrb[0].mxu0
        %410 = vmatprep.mubr.f32.mxu0 0.0
        %411 = vmatmul.mubr.f32.gmra.mrb[0].mxu0 %v309
        %v412 = vpop.f32.mrb[0].mxu0
        %v413 = vadd.f32 %v284, %v412
        %v414 = vpop.f32.mrb[0].mxu0
        %415 = vdwg.mxu0
        %v416 = vld [vmem:[#allocation2] sm:$0xff]
        %v417 = vld [vmem:[#allocation2 + $0x8] sm:$0xff]
        %v418 = vld [vmem:[#allocation2 + $0x10] sm:$0xff]
        %v419 = vld [vmem:[#allocation2 + $0x18] sm:$0xff]
        %v420 = vld [vmem:[#allocation2 + $0x20] sm:$0xff]
        %v421 = vld [vmem:[#allocation2 + $0x28] sm:$0xff]
        %v422 = vld [vmem:[#allocation2 + $0x30] sm:$0xff]
        %v423 = vld [vmem:[#allocation2 + $0x38] sm:$0xff]
        %v424 = vld [vmem:[#allocation2 + $0x40] sm:$0xff]
        %v425 = vld [vmem:[#allocation2 + $0x48] sm:$0xff]
        %v426 = vld [vmem:[#allocation2 + $0x50] sm:$0xff]
        %v427 = vld [vmem:[#allocation2 + $0x58] sm:$0xff]
        %v428 = vld [vmem:[#allocation2 + $0x60] sm:$0xff]
        %v429 = vld [vmem:[#allocation2 + $0x68] sm:$0xff]
        %v430 = vld [vmem:[#allocation2 + $0x70] sm:$0xff]
        %v431 = vld [vmem:[#allocation2 + $0x78] sm:$0xff]
        %v432 = vld [vmem:[#allocation2 + $0x80] sm:$0xff]
        %v433 = vld [vmem:[#allocation2 + $0x88] sm:$0xff]
        %v434 = vld [vmem:[#allocation2 + $0x90] sm:$0xff]
        %v435 = vld [vmem:[#allocation2 + $0x98] sm:$0xff]
        %v436 = vld [vmem:[#allocation2 + $0xa0] sm:$0xff]
        %v437 = vld [vmem:[#allocation2 + $0xa8] sm:$0xff]
        %v438 = vld [vmem:[#allocation2 + $0xb0] sm:$0xff]
        %v439 = vld [vmem:[#allocation2 + $0xb8] sm:$0xff]
        %v440 = vld [vmem:[#allocation2 + $0xc0] sm:$0xff]
        %v441 = vld [vmem:[#allocation2 + $0xc8] sm:$0xff]
        %v442 = vld [vmem:[#allocation2 + $0xd0] sm:$0xff]
        %v443 = vld [vmem:[#allocation2 + $0xd8] sm:$0xff]
        %v444 = vld [vmem:[#allocation2 + $0xe0] sm:$0xff]
        %v445 = vld [vmem:[#allocation2 + $0xe8] sm:$0xff]
        %v446 = vld [vmem:[#allocation2 + $0xf0] sm:$0xff]
        %v447 = vld [vmem:[#allocation2 + $0xf8] sm:$0xff]
        %v448 = vld [vmem:[%s3] sm:$0xff]
        %v449 = vld [vmem:[%s3 + $0x8] sm:$0xff]
        %v450 = vld [vmem:[%s3 + $0x10] sm:$0xff]
        %v451 = vld [vmem:[%s3 + $0x18] sm:$0xff]
        %v452 = vmul.f32 %v378, 0.35355338
        %v453 = vmul.f32 %v383, 0.35355338
        %v454 = vmul.f32 %v388, 0.35355338
        %v455 = vmul.f32 %v393, 0.35355338
        %v456 = vmul.f32 %v398, 0.35355338
        %v457 = vmul.f32 %v403, 0.35355338
        %v458 = vmul.f32 %v408, 0.35355338
        %v459 = vmul.f32 %v413, 0.35355338
        %462 = vrot.lane.b32.xlu0 %v378, 96
        %v463 = vpop.permute.xlu0 %462
        %464 = vrot.lane.b32.xlu0 %v383, 96
        %v465 = vpop.permute.xlu0 %464
        %vm466 = vcmask 64512
        %v468 = vsel %vm466, %v452, 0
        %v471 = vsel %vm466, %v453, 0
        %v473 = vsel %vm466, %v463, 0
        %v475 = vsel %vm466, %v465, 0
        %477 = vmatprep.subr.mxu0 0.0
        %478 = vmatpush1.xpose.msra.mxu0 %v473
        %479 = vmatprep.subr.mxu0 0.0
        %480 = vmatpush1.xpose.msra.mxu0 %v475
        %481 = vmatprep.subr.mxu0 0.0
        %482 = vmatpush1.xpose.msra.mxu0 0.0
        %483 = vmatprep.subr.mxu0 0.0
        %484 = vmatpush1.xpose.msra.mxu0 0.0
        %485 = vmatprep.subr.mxu0 0.0
        %486 = vmatpush1.xpose.msra.mxu0 0.0
        %487 = vmatprep.subr.mxu0 0.0
        %488 = vmatpush1.xpose.msra.mxu0 0.0
        %489 = vmatprep.subr.mxu0 0.0
        %490 = vmatpush1.xpose.msra.mxu0 0.0
        %491 = vmatprep.subr.mxu0 0.0
        %492 = vmatpush1.xpose.msra.mxu0 0.0
        %493 = vmatprep.subr.mxu0 0.0
        %494 = vmatpush1.xpose.msra.mxu0 0.0
        %495 = vmatprep.subr.mxu0 0.0
        %496 = vmatpush1.xpose.msra.mxu0 0.0
        %497 = vmatprep.subr.mxu0 0.0
        %498 = vmatpush1.xpose.msra.mxu0 0.0
        %499 = vmatprep.subr.mxu0 0.0
        %500 = vmatpush1.xpose.msra.mxu0 0.0
        %501 = vmatprep.subr.mxu0 0.0
        %502 = vmatpush1.xpose.msra.mxu0 0.0
        %503 = vmatprep.subr.mxu0 0.0
        %504 = vmatpush1.xpose.msra.mxu0 0.0
        %505 = vmatprep.subr.mxu0 0.0
        %506 = vmatpush1.xpose.msra.mxu0 0.0
        %507 = vmatprep.subr.mxu0 0.0
        %508 = vmatpush1.xpose.msra.mxu0 0.0
        %509 = vmatprep.subr.mxu0 0.0
        %510 = vmatpush1.xpose.msra.mxu0 0.0
        %511 = vmatprep.subr.mxu0 0.0
        %512 = vmatpush1.xpose.msra.mxu0 0.0
        %513 = vmatprep.subr.mxu0 0.0
        %514 = vmatpush1.xpose.msra.mxu0 0.0
        %515 = vmatprep.subr.mxu0 0.0
        %516 = vmatpush1.xpose.msra.mxu0 0.0
        %517 = vmatprep.subr.mxu0 0.0
        %518 = vmatpush1.xpose.msra.mxu0 0.0
        %519 = vmatprep.subr.mxu0 0.0
        %520 = vmatpush1.xpose.msra.mxu0 0.0
        %521 = vmatprep.subr.mxu0 0.0
        %522 = vmatpush1.xpose.msra.mxu0 0.0
        %523 = vmatprep.subr.mxu0 0.0
        %524 = vmatpush1.xpose.msra.mxu0 0.0
        %525 = vmatprep.subr.mxu0 0.0
        %526 = vmatpush1.xpose.msra.mxu0 0.0
        %527 = vmatprep.subr.mxu0 0.0
        %528 = vmatpush1.xpose.msra.mxu0 0.0
        %529 = vmatprep.subr.mxu0 0.0
        %530 = vmatpush1.xpose.msra.mxu0 0.0
        %531 = vmatprep.subr.mxu0 0.0
        %532 = vmatpush1.xpose.msra.mxu0 0.0
        %533 = vmatprep.subr.mxu0 0.0
        %534 = vmatpush1.xpose.msra.mxu0 0.0
        %535 = vmatprep.subr.mxu0 0.0
        %536 = vmatpush1.xpose.msra.mxu0 0.0
        %537 = vmatprep.subr.mxu0 0.0
        %538 = vmatpush1.xpose.msra.mxu0 0.0
        %539 = vmatprep.subr.mxu0 0.0
        %540 = vmatpush1.xpose.msra.mxu0 0.0
        %541 = vmatprep.mubr.f32.mxu0 0.0
        %542 = vmatmul.mubr.f32.gmra.mrb[0].mxu0 %v468
        %v543 = vpop.f32.mrb[0].mxu0
        %v544 = vadd.f32 %v416, %v543
        %v545 = vpop.f32.mrb[0].mxu0
        %546 = vmatprep.mubr.f32.mxu0 0.0
        %547 = vmatmul.mubr.f32.gmra.mrb[0].mxu0 %v471
        %v548 = vpop.f32.mrb[0].mxu0
        %v549 = vadd.f32 %v417, %v548
        %v550 = vpop.f32.mrb[0].mxu0
        %551 = vdwg.mxu0
        %554 = vrot.lane.b32.xlu0 %v388, 96
        %v555 = vpop.permute.xlu0 %554
        %556 = vrot.lane.b32.xlu0 %v393, 96
        %v557 = vpop.permute.xlu0 %556
        %v559 = vsel %vm466, %v454, 0
        %v562 = vsel %vm466, %v455, 0
        %v564 = vsel %vm466, %v555, 0
        %v566 = vsel %vm466, %v557, 0
        %568 = vmatprep.subr.mxu0 0.0
        %569 = vmatpush1.xpose.msra.mxu0 %v564
        %570 = vmatprep.subr.mxu0 0.0
        %571 = vmatpush1.xpose.msra.mxu0 %v566
        %572 = vmatprep.subr.mxu0 0.0
        %573 = vmatpush1.xpose.msra.mxu0 0.0
        %574 = vmatprep.subr.mxu0 0.0
        %575 = vmatpush1.xpose.msra.mxu0 0.0
        %576 = vmatprep.subr.mxu0 0.0
        %577 = vmatpush1.xpose.msra.mxu0 0.0
        %578 = vmatprep.subr.mxu0 0.0
        %579 = vmatpush1.xpose.msra.mxu0 0.0
        %580 = vmatprep.subr.mxu0 0.0
        %581 = vmatpush1.xpose.msra.mxu0 0.0
        %582 = vmatprep.subr.mxu0 0.0
        %583 = vmatpush1.xpose.msra.mxu0 0.0
        %584 = vmatprep.subr.mxu0 0.0
        %585 = vmatpush1.xpose.msra.mxu0 0.0
        %586 = vmatprep.subr.mxu0 0.0
        %587 = vmatpush1.xpose.msra.mxu0 0.0
        %588 = vmatprep.subr.mxu0 0.0
        %589 = vmatpush1.xpose.msra.mxu0 0.0
        %590 = vmatprep.subr.mxu0 0.0
        %591 = vmatpush1.xpose.msra.mxu0 0.0
        %592 = vmatprep.subr.mxu0 0.0
        %593 = vmatpush1.xpose.msra.mxu0 0.0
        %594 = vmatprep.subr.mxu0 0.0
        %595 = vmatpush1.xpose.msra.mxu0 0.0
        %596 = vmatprep.subr.mxu0 0.0
        %597 = vmatpush1.xpose.msra.mxu0 0.0
        %598 = vmatprep.subr.mxu0 0.0
        %599 = vmatpush1.xpose.msra.mxu0 0.0
        %600 = vmatprep.subr.mxu0 0.0
        %601 = vmatpush1.xpose.msra.mxu0 0.0
        %602 = vmatprep.subr.mxu0 0.0
        %603 = vmatpush1.xpose.msra.mxu0 0.0
        %604 = vmatprep.subr.mxu0 0.0
        %605 = vmatpush1.xpose.msra.mxu0 0.0
        %606 = vmatprep.subr.mxu0 0.0
        %607 = vmatpush1.xpose.msra.mxu0 0.0
        %608 = vmatprep.subr.mxu0 0.0
        %609 = vmatpush1.xpose.msra.mxu0 0.0
        %610 = vmatprep.subr.mxu0 0.0
        %611 = vmatpush1.xpose.msra.mxu0 0.0
        %612 = vmatprep.subr.mxu0 0.0
        %613 = vmatpush1.xpose.msra.mxu0 0.0
        %614 = vmatprep.subr.mxu0 0.0
        %615 = vmatpush1.xpose.msra.mxu0 0.0
        %616 = vmatprep.subr.mxu0 0.0
        %617 = vmatpush1.xpose.msra.mxu0 0.0
        %618 = vmatprep.subr.mxu0 0.0
        %619 = vmatpush1.xpose.msra.mxu0 0.0
        %620 = vmatprep.subr.mxu0 0.0
        %621 = vmatpush1.xpose.msra.mxu0 0.0
        %622 = vmatprep.subr.mxu0 0.0
        %623 = vmatpush1.xpose.msra.mxu0 0.0
        %624 = vmatprep.subr.mxu0 0.0
        %625 = vmatpush1.xpose.msra.mxu0 0.0
        %626 = vmatprep.subr.mxu0 0.0
        %627 = vmatpush1.xpose.msra.mxu0 0.0
        %628 = vmatprep.subr.mxu0 0.0
        %629 = vmatpush1.xpose.msra.mxu0 0.0
        %630 = vmatprep.subr.mxu0 0.0
        %631 = vmatpush1.xpose.msra.mxu0 0.0
        %632 = vmatprep.mubr.f32.mxu0 0.0
        %633 = vmatmul.mubr.f32.gmra.mrb[0].mxu0 %v559
        %v634 = vpop.f32.mrb[0].mxu0
        %v635 = vadd.f32 %v424, %v634
        %v636 = vpop.f32.mrb[0].mxu0
        %637 = vmatprep.mubr.f32.mxu0 0.0
        %638 = vmatmul.mubr.f32.gmra.mrb[0].mxu0 %v562
        %v639 = vpop.f32.mrb[0].mxu0
        %v640 = vadd.f32 %v425, %v639
        %v641 = vpop.f32.mrb[0].mxu0
        %642 = vdwg.mxu0
        %645 = vrot.lane.b32.xlu0 %v398, 96
        %v646 = vpop.permute.xlu0 %645
        %647 = vrot.lane.b32.xlu0 %v403, 96
        %v648 = vpop.permute.xlu0 %647
        %v650 = vsel %vm466, %v456, 0
        %v653 = vsel %vm466, %v457, 0
        %v655 = vsel %vm466, %v646, 0
        %v657 = vsel %vm466, %v648, 0
        %659 = vmatprep.subr.mxu0 0.0
        %660 = vmatpush1.xpose.msra.mxu0 %v655
        %661 = vmatprep.subr.mxu0 0.0
        %662 = vmatpush1.xpose.msra.mxu0 %v657
        %663 = vmatprep.subr.mxu0 0.0
        %664 = vmatpush1.xpose.msra.mxu0 0.0
        %665 = vmatprep.subr.mxu0 0.0
        %666 = vmatpush1.xpose.msra.mxu0 0.0
        %667 = vmatprep.subr.mxu0 0.0
        %668 = vmatpush1.xpose.msra.mxu0 0.0
        %669 = vmatprep.subr.mxu0 0.0
        %670 = vmatpush1.xpose.msra.mxu0 0.0
        %671 = vmatprep.subr.mxu0 0.0
        %672 = vmatpush1.xpose.msra.mxu0 0.0
        %673 = vmatprep.subr.mxu0 0.0
        %674 = vmatpush1.xpose.msra.mxu0 0.0
        %675 = vmatprep.subr.mxu0 0.0
        %676 = vmatpush1.xpose.msra.mxu0 0.0
        %677 = vmatprep.subr.mxu0 0.0
        %678 = vmatpush1.xpose.msra.mxu0 0.0
        %679 = vmatprep.subr.mxu0 0.0
        %680 = vmatpush1.xpose.msra.mxu0 0.0
        %681 = vmatprep.subr.mxu0 0.0
        %682 = vmatpush1.xpose.msra.mxu0 0.0
        %683 = vmatprep.subr.mxu0 0.0
        %684 = vmatpush1.xpose.msra.mxu0 0.0
        %685 = vmatprep.subr.mxu0 0.0
        %686 = vmatpush1.xpose.msra.mxu0 0.0
        %687 = vmatprep.subr.mxu0 0.0
        %688 = vmatpush1.xpose.msra.mxu0 0.0
        %689 = vmatprep.subr.mxu0 0.0
        %690 = vmatpush1.xpose.msra.mxu0 0.0
        %691 = vmatprep.subr.mxu0 0.0
        %692 = vmatpush1.xpose.msra.mxu0 0.0
        %693 = vmatprep.subr.mxu0 0.0
        %694 = vmatpush1.xpose.msra.mxu0 0.0
        %695 = vmatprep.subr.mxu0 0.0
        %696 = vmatpush1.xpose.msra.mxu0 0.0
        %697 = vmatprep.subr.mxu0 0.0
        %698 = vmatpush1.xpose.msra.mxu0 0.0
        %699 = vmatprep.subr.mxu0 0.0
        %700 = vmatpush1.xpose.msra.mxu0 0.0
        %701 = vmatprep.subr.mxu0 0.0
        %702 = vmatpush1.xpose.msra.mxu0 0.0
        %703 = vmatprep.subr.mxu0 0.0
        %704 = vmatpush1.xpose.msra.mxu0 0.0
        %705 = vmatprep.subr.mxu0 0.0
        %706 = vmatpush1.xpose.msra.mxu0 0.0
        %707 = vmatprep.subr.mxu0 0.0
        %708 = vmatpush1.xpose.msra.mxu0 0.0
        %709 = vmatprep.subr.mxu0 0.0
        %710 = vmatpush1.xpose.msra.mxu0 0.0
        %711 = vmatprep.subr.mxu0 0.0
        %712 = vmatpush1.xpose.msra.mxu0 0.0
        %713 = vmatprep.subr.mxu0 0.0
        %714 = vmatpush1.xpose.msra.mxu0 0.0
        %715 = vmatprep.subr.mxu0 0.0
        %716 = vmatpush1.xpose.msra.mxu0 0.0
        %717 = vmatprep.subr.mxu0 0.0
        %718 = vmatpush1.xpose.msra.mxu0 0.0
        %719 = vmatprep.subr.mxu0 0.0
        %720 = vmatpush1.xpose.msra.mxu0 0.0
        %721 = vmatprep.subr.mxu0 0.0
        %722 = vmatpush1.xpose.msra.mxu0 0.0
        %723 = vmatprep.mubr.f32.mxu0 0.0
        %724 = vmatmul.mubr.f32.gmra.mrb[0].mxu0 %v650
        %v725 = vpop.f32.mrb[0].mxu0
        %v726 = vadd.f32 %v432, %v725
        %v727 = vpop.f32.mrb[0].mxu0
        %728 = vmatprep.mubr.f32.mxu0 0.0
        %729 = vmatmul.mubr.f32.gmra.mrb[0].mxu0 %v653
        %v730 = vpop.f32.mrb[0].mxu0
        %v731 = vadd.f32 %v433, %v730
        %v732 = vpop.f32.mrb[0].mxu0
        %733 = vdwg.mxu0
        %736 = vrot.lane.b32.xlu0 %v408, 96
        %v737 = vpop.permute.xlu0 %736
        %738 = vrot.lane.b32.xlu0 %v413, 96
        %v739 = vpop.permute.xlu0 %738
        %v741 = vsel %vm466, %v458, 0
        %v744 = vsel %vm466, %v459, 0
        %v746 = vsel %vm466, %v737, 0
        %v748 = vsel %vm466, %v739, 0
        %750 = vmatprep.subr.mxu0 0.0
        %751 = vmatpush1.xpose.msra.mxu0 %v746
        %752 = vmatprep.subr.mxu0 0.0
        %753 = vmatpush1.xpose.msra.mxu0 %v748
        %754 = vmatprep.subr.mxu0 0.0
        %755 = vmatpush1.xpose.msra.mxu0 0.0
        %756 = vmatprep.subr.mxu0 0.0
        %757 = vmatpush1.xpose.msra.mxu0 0.0
        %758 = vmatprep.subr.mxu0 0.0
        %759 = vmatpush1.xpose.msra.mxu0 0.0
        %760 = vmatprep.subr.mxu0 0.0
        %761 = vmatpush1.xpose.msra.mxu0 0.0
        %762 = vmatprep.subr.mxu0 0.0
        %763 = vmatpush1.xpose.msra.mxu0 0.0
        %764 = vmatprep.subr.mxu0 0.0
        %765 = vmatpush1.xpose.msra.mxu0 0.0
        %766 = vmatprep.subr.mxu0 0.0
        %767 = vmatpush1.xpose.msra.mxu0 0.0
        %768 = vmatprep.subr.mxu0 0.0
        %769 = vmatpush1.xpose.msra.mxu0 0.0
        %770 = vmatprep.subr.mxu0 0.0
        %771 = vmatpush1.xpose.msra.mxu0 0.0
        %772 = vmatprep.subr.mxu0 0.0
        %773 = vmatpush1.xpose.msra.mxu0 0.0
        %774 = vmatprep.subr.mxu0 0.0
        %775 = vmatpush1.xpose.msra.mxu0 0.0
        %776 = vmatprep.subr.mxu0 0.0
        %777 = vmatpush1.xpose.msra.mxu0 0.0
        %778 = vmatprep.subr.mxu0 0.0
        %779 = vmatpush1.xpose.msra.mxu0 0.0
        %780 = vmatprep.subr.mxu0 0.0
        %781 = vmatpush1.xpose.msra.mxu0 0.0
        %782 = vmatprep.subr.mxu0 0.0
        %783 = vmatpush1.xpose.msra.mxu0 0.0
        %784 = vmatprep.subr.mxu0 0.0
        %785 = vmatpush1.xpose.msra.mxu0 0.0
        %786 = vmatprep.subr.mxu0 0.0
        %787 = vmatpush1.xpose.msra.mxu0 0.0
        %788 = vmatprep.subr.mxu0 0.0
        %789 = vmatpush1.xpose.msra.mxu0 0.0
        %790 = vmatprep.subr.mxu0 0.0
        %791 = vmatpush1.xpose.msra.mxu0 0.0
        %792 = vmatprep.subr.mxu0 0.0
        %793 = vmatpush1.xpose.msra.mxu0 0.0
        %794 = vmatprep.subr.mxu0 0.0
        %795 = vmatpush1.xpose.msra.mxu0 0.0
        %796 = vmatprep.subr.mxu0 0.0
        %797 = vmatpush1.xpose.msra.mxu0 0.0
        %798 = vmatprep.subr.mxu0 0.0
        %799 = vmatpush1.xpose.msra.mxu0 0.0
        %800 = vmatprep.subr.mxu0 0.0
        %801 = vmatpush1.xpose.msra.mxu0 0.0
        %802 = vmatprep.subr.mxu0 0.0
        %803 = vmatpush1.xpose.msra.mxu0 0.0
        %804 = vmatprep.subr.mxu0 0.0
        %805 = vmatpush1.xpose.msra.mxu0 0.0
        %806 = vmatprep.subr.mxu0 0.0
        %807 = vmatpush1.xpose.msra.mxu0 0.0
        %808 = vmatprep.subr.mxu0 0.0
        %809 = vmatpush1.xpose.msra.mxu0 0.0
        %810 = vmatprep.subr.mxu0 0.0
        %811 = vmatpush1.xpose.msra.mxu0 0.0
        %812 = vmatprep.subr.mxu0 0.0
        %813 = vmatpush1.xpose.msra.mxu0 0.0
        %814 = vmatprep.mubr.f32.mxu0 0.0
        %815 = vmatmul.mubr.f32.gmra.mrb[0].mxu0 %v741
        %v816 = vpop.f32.mrb[0].mxu0
        %v817 = vadd.f32 %v440, %v816
        %v818 = vpop.f32.mrb[0].mxu0
        %819 = vmatprep.mubr.f32.mxu0 0.0
        %820 = vmatmul.mubr.f32.gmra.mrb[0].mxu0 %v744
        %v821 = vpop.f32.mrb[0].mxu0
        %v822 = vadd.f32 %v441, %v821
        %v823 = vpop.f32.mrb[0].mxu0
        %824 = vdwg.mxu0
        %vm825 = vcmask 130048
        %v826 = vsel %vm825, %v544, -inf
        %827 = vmax.xlane.f32.xlu0 %v826
        %v828 = vpop.xlane.xlu0 %827
        %v829 = vsel %vm825, %v549, -inf
        %830 = vmax.xlane.f32.xlu0 %v829
        %v831 = vpop.xlane.xlu0 %830
        %v832 = vsel %vm825, %v635, -inf
        %833 = vmax.xlane.f32.xlu0 %v832
        %v834 = vpop.xlane.xlu0 %833
        %v835 = vsel %vm825, %v640, -inf
        %836 = vmax.xlane.f32.xlu0 %v835
        %v837 = vpop.xlane.xlu0 %836
        %v838 = vsel %vm825, %v726, -inf
        %839 = vmax.xlane.f32.xlu0 %v838
        %v840 = vpop.xlane.xlu0 %839
        %v841 = vsel %vm825, %v731, -inf
        %842 = vmax.xlane.f32.xlu0 %v841
        %v843 = vpop.xlane.xlu0 %842
        %v844 = vsel %vm825, %v817, -inf
        %845 = vmax.xlane.f32.xlu0 %v844
        %v846 = vpop.xlane.xlu0 %845
        %v847 = vsel %vm825, %v822, -inf
        %848 = vmax.xlane.f32.xlu0 %v847
        %v849 = vpop.xlane.xlu0 %848
        %v850 = vsub.f32 %v544, %v828
        %v851 = vsub.f32 %v549, %v831
        %v852 = vsub.f32 %v635, %v834
        %v853 = vsub.f32 %v640, %v837
        %v854 = vsub.f32 %v726, %v840
        %v855 = vsub.f32 %v731, %v843
        %v856 = vsub.f32 %v817, %v846
        %v857 = vsub.f32 %v822, %v849
        %v858 = vmul.f32 %v850, 1.442695
        %v859 = vpow.pop %v858
        %v860 = vmul.f32 %v851, 1.442695
        %v861 = vpow.pop %v860
        %v862 = vmul.f32 %v852, 1.442695
        %v863 = vpow.pop %v862
        %v864 = vmul.f32 %v853, 1.442695
        %v865 = vpow.pop %v864
        %v866 = vmul.f32 %v854, 1.442695
        %v867 = vpow.pop %v866
        %v868 = vmul.f32 %v855, 1.442695
        %v869 = vpow.pop %v868
        %v870 = vmul.f32 %v856, 1.442695
        %v871 = vpow.pop %v870
        %v872 = vmul.f32 %v857, 1.442695
        %v873 = vpow.pop %v872
        %v874 = vsel %vm825, %v859, 0.0
        %875 = vadd.xlane.f32.xlu0 %v874
        %v876 = vpop.xlane.xlu0 %875
        %v877 = vsel %vm825, %v861, 0.0
        %878 = vadd.xlane.f32.xlu0 %v877
        %v879 = vpop.xlane.xlu0 %878
        %v880 = vsel %vm825, %v863, 0.0
        %881 = vadd.xlane.f32.xlu0 %v880
        %v882 = vpop.xlane.xlu0 %881
        %v883 = vsel %vm825, %v865, 0.0
        %884 = vadd.xlane.f32.xlu0 %v883
        %v885 = vpop.xlane.xlu0 %884
        %v886 = vsel %vm825, %v867, 0.0
        %887 = vadd.xlane.f32.xlu0 %v886
        %v888 = vpop.xlane.xlu0 %887
        %v889 = vsel %vm825, %v869, 0.0
        %890 = vadd.xlane.f32.xlu0 %v889
        %v891 = vpop.xlane.xlu0 %890
        %v892 = vsel %vm825, %v871, 0.0
        %893 = vadd.xlane.f32.xlu0 %v892
        %v894 = vpop.xlane.xlu0 %893
        %v895 = vsel %vm825, %v873, 0.0
        %896 = vadd.xlane.f32.xlu0 %v895
        %v897 = vpop.xlane.xlu0 %896
        %v898 = vrcp.pop %v876
        %v899 = vrcp.pop %v879
        %v900 = vrcp.pop %v882
        %v901 = vrcp.pop %v885
        %v902 = vrcp.pop %v888
        %v903 = vrcp.pop %v891
        %v904 = vrcp.pop %v894
        %v905 = vrcp.pop %v897
        %v906 = vmul.f32 %v859, %v898
        %v907 = vmul.f32 %v861, %v899
        %v908 = vmul.f32 %v863, %v900
        %v909 = vmul.f32 %v865, %v901
        %v910 = vmul.f32 %v867, %v902
        %v911 = vmul.f32 %v869, %v903
        %v912 = vmul.f32 %v871, %v904
        %v913 = vmul.f32 %v873, %v905
        %914 = vrot.lane.b32.xlu0 %v378, 64
        %v915 = vpop.permute.xlu0 %914
        %916 = vrot.lane.b32.xlu0 %v383, 64
        %v917 = vpop.permute.xlu0 %916
        %v921 = vsel %vm825, %v906, 0
        %v924 = vsel %vm825, %v907, 0
        %926 = vmatprep.subr.mxu0 0.0
        %927 = vmatpush1.msra.mxu0 %v915
        %928 = vmatprep.subr.mxu0 0.0
        %929 = vmatpush1.msra.mxu0 %v917
        %930 = vmatprep.subr.mxu0 0.0
        %931 = vmatpush1.msra.mxu0 0.0
        %932 = vmatprep.subr.mxu0 0.0
        %933 = vmatpush1.msra.mxu0 0.0
        %934 = vmatprep.subr.mxu0 0.0
        %935 = vmatpush1.msra.mxu0 0.0
        %936 = vmatprep.subr.mxu0 0.0
        %937 = vmatpush1.msra.mxu0 0.0
        %938 = vmatprep.subr.mxu0 0.0
        %939 = vmatpush1.msra.mxu0 0.0
        %940 = vmatprep.subr.mxu0 0.0
        %941 = vmatpush1.msra.mxu0 0.0
        %942 = vmatprep.subr.mxu0 0.0
        %943 = vmatpush1.msra.mxu0 0.0
        %944 = vmatprep.subr.mxu0 0.0
        %945 = vmatpush1.msra.mxu0 0.0
        %946 = vmatprep.subr.mxu0 0.0
        %947 = vmatpush1.msra.mxu0 0.0
        %948 = vmatprep.subr.mxu0 0.0
        %949 = vmatpush1.msra.mxu0 0.0
        %950 = vmatprep.subr.mxu0 0.0
        %951 = vmatpush1.msra.mxu0 0.0
        %952 = vmatprep.subr.mxu0 0.0
        %953 = vmatpush1.msra.mxu0 0.0
        %954 = vmatprep.subr.mxu0 0.0
        %955 = vmatpush1.msra.mxu0 0.0
        %956 = vmatprep.subr.mxu0 0.0
        %957 = vmatpush1.msra.mxu0 0.0
        %958 = vmatprep.subr.mxu0 0.0
        %959 = vmatpush1.msra.mxu0 0.0
        %960 = vmatprep.subr.mxu0 0.0
        %961 = vmatpush1.msra.mxu0 0.0
        %962 = vmatprep.subr.mxu0 0.0
        %963 = vmatpush1.msra.mxu0 0.0
        %964 = vmatprep.subr.mxu0 0.0
        %965 = vmatpush1.msra.mxu0 0.0
        %966 = vmatprep.subr.mxu0 0.0
        %967 = vmatpush1.msra.mxu0 0.0
        %968 = vmatprep.subr.mxu0 0.0
        %969 = vmatpush1.msra.mxu0 0.0
        %970 = vmatprep.subr.mxu0 0.0
        %971 = vmatpush1.msra.mxu0 0.0
        %972 = vmatprep.subr.mxu0 0.0
        %973 = vmatpush1.msra.mxu0 0.0
        %974 = vmatprep.subr.mxu0 0.0
        %975 = vmatpush1.msra.mxu0 0.0
        %976 = vmatprep.subr.mxu0 0.0
        %977 = vmatpush1.msra.mxu0 0.0
        %978 = vmatprep.subr.mxu0 0.0
        %979 = vmatpush1.msra.mxu0 0.0
        %980 = vmatprep.subr.mxu0 0.0
        %981 = vmatpush1.msra.mxu0 0.0
        %982 = vmatprep.subr.mxu0 0.0
        %983 = vmatpush1.msra.mxu0 0.0
        %984 = vmatprep.subr.mxu0 0.0
        %985 = vmatpush1.msra.mxu0 0.0
        %986 = vmatprep.subr.mxu0 0.0
        %987 = vmatpush1.msra.mxu0 0.0
        %988 = vmatprep.subr.mxu0 0.0
        %989 = vmatpush1.msra.mxu0 0.0
        %990 = vmatprep.mubr.f32.mxu0 0.0
        %991 = vmatmul.mubr.f32.gmra.mrb[0].mxu0 %v921
        %v992 = vpop.f32.mrb[0].mxu0
        %v993 = vadd.f32 0.0, %v992
        %v994 = vpop.f32.mrb[0].mxu0
        %995 = vmatprep.mubr.f32.mxu0 0.0
        %996 = vmatmul.mubr.f32.gmra.mrb[0].mxu0 %v924
        %v997 = vpop.f32.mrb[0].mxu0
        %v998 = vadd.f32 0.0, %v997
        %v999 = vpop.f32.mrb[0].mxu0
        %1000 = vdwg.mxu0
        %1001 = vrot.lane.b32.xlu0 %v388, 64
        %v1002 = vpop.permute.xlu0 %1001
        %1003 = vrot.lane.b32.xlu0 %v393, 64
        %v1004 = vpop.permute.xlu0 %1003
        %v1008 = vsel %vm825, %v908, 0
        %v1011 = vsel %vm825, %v909, 0
        %1013 = vmatprep.subr.mxu0 0.0
        %1014 = vmatpush1.msra.mxu0 %v1002
        %1015 = vmatprep.subr.mxu0 0.0
        %1016 = vmatpush1.msra.mxu0 %v1004
        %1017 = vmatprep.subr.mxu0 0.0
        %1018 = vmatpush1.msra.mxu0 0.0
        %1019 = vmatprep.subr.mxu0 0.0
        %1020 = vmatpush1.msra.mxu0 0.0
        %1021 = vmatprep.subr.mxu0 0.0
        %1022 = vmatpush1.msra.mxu0 0.0
        %1023 = vmatprep.subr.mxu0 0.0
        %1024 = vmatpush1.msra.mxu0 0.0
        %1025 = vmatprep.subr.mxu0 0.0
        %1026 = vmatpush1.msra.mxu0 0.0
        %1027 = vmatprep.subr.mxu0 0.0
        %1028 = vmatpush1.msra.mxu0 0.0
        %1029 = vmatprep.subr.mxu0 0.0
        %1030 = vmatpush1.msra.mxu0 0.0
        %1031 = vmatprep.subr.mxu0 0.0
        %1032 = vmatpush1.msra.mxu0 0.0
        %1033 = vmatprep.subr.mxu0 0.0
        %1034 = vmatpush1.msra.mxu0 0.0
        %1035 = vmatprep.subr.mxu0 0.0
        %1036 = vmatpush1.msra.mxu0 0.0
        %1037 = vmatprep.subr.mxu0 0.0
        %1038 = vmatpush1.msra.mxu0 0.0
        %1039 = vmatprep.subr.mxu0 0.0
        %1040 = vmatpush1.msra.mxu0 0.0
        %1041 = vmatprep.subr.mxu0 0.0
        %1042 = vmatpush1.msra.mxu0 0.0
        %1043 = vmatprep.subr.mxu0 0.0
        %1044 = vmatpush1.msra.mxu0 0.0
        %1045 = vmatprep.subr.mxu0 0.0
        %1046 = vmatpush1.msra.mxu0 0.0
        %1047 = vmatprep.subr.mxu0 0.0
        %1048 = vmatpush1.msra.mxu0 0.0
        %1049 = vmatprep.subr.mxu0 0.0
        %1050 = vmatpush1.msra.mxu0 0.0
        %1051 = vmatprep.subr.mxu0 0.0
        %1052 = vmatpush1.msra.mxu0 0.0
        %1053 = vmatprep.subr.mxu0 0.0
        %1054 = vmatpush1.msra.mxu0 0.0
        %1055 = vmatprep.subr.mxu0 0.0
        %1056 = vmatpush1.msra.mxu0 0.0
        %1057 = vmatprep.subr.mxu0 0.0
        %1058 = vmatpush1.msra.mxu0 0.0
        %1059 = vmatprep.subr.mxu0 0.0
        %1060 = vmatpush1.msra.mxu0 0.0
        %1061 = vmatprep.subr.mxu0 0.0
        %1062 = vmatpush1.msra.mxu0 0.0
        %1063 = vmatprep.subr.mxu0 0.0
        %1064 = vmatpush1.msra.mxu0 0.0
        %1065 = vmatprep.subr.mxu0 0.0
        %1066 = vmatpush1.msra.mxu0 0.0
        %1067 = vmatprep.subr.mxu0 0.0
        %1068 = vmatpush1.msra.mxu0 0.0
        %1069 = vmatprep.subr.mxu0 0.0
        %1070 = vmatpush1.msra.mxu0 0.0
        %1071 = vmatprep.subr.mxu0 0.0
        %1072 = vmatpush1.msra.mxu0 0.0
        %1073 = vmatprep.subr.mxu0 0.0
        %1074 = vmatpush1.msra.mxu0 0.0
        %1075 = vmatprep.subr.mxu0 0.0
        %1076 = vmatpush1.msra.mxu0 0.0
        %1077 = vmatprep.mubr.f32.mxu0 0.0
        %1078 = vmatmul.mubr.f32.gmra.mrb[0].mxu0 %v1008
        %v1079 = vpop.f32.mrb[0].mxu0
        %v1080 = vadd.f32 0.0, %v1079
        %v1081 = vpop.f32.mrb[0].mxu0
        %1082 = vmatprep.mubr.f32.mxu0 0.0
        %1083 = vmatmul.mubr.f32.gmra.mrb[0].mxu0 %v1011
        %v1084 = vpop.f32.mrb[0].mxu0
        %v1085 = vadd.f32 0.0, %v1084
        %v1086 = vpop.f32.mrb[0].mxu0
        %1087 = vdwg.mxu0
        %1088 = vrot.lane.b32.xlu0 %v398, 64
        %v1089 = vpop.permute.xlu0 %1088
        %1090 = vrot.lane.b32.xlu0 %v403, 64
        %v1091 = vpop.permute.xlu0 %1090
        %v1095 = vsel %vm825, %v910, 0
        %v1098 = vsel %vm825, %v911, 0
        %1100 = vmatprep.subr.mxu0 0.0
        %1101 = vmatpush1.msra.mxu0 %v1089
        %1102 = vmatprep.subr.mxu0 0.0
        %1103 = vmatpush1.msra.mxu0 %v1091
        %1104 = vmatprep.subr.mxu0 0.0
        %1105 = vmatpush1.msra.mxu0 0.0
        %1106 = vmatprep.subr.mxu0 0.0
        %1107 = vmatpush1.msra.mxu0 0.0
        %1108 = vmatprep.subr.mxu0 0.0
        %1109 = vmatpush1.msra.mxu0 0.0
        %1110 = vmatprep.subr.mxu0 0.0
        %1111 = vmatpush1.msra.mxu0 0.0
        %1112 = vmatprep.subr.mxu0 0.0
        %1113 = vmatpush1.msra.mxu0 0.0
        %1114 = vmatprep.subr.mxu0 0.0
        %1115 = vmatpush1.msra.mxu0 0.0
        %1116 = vmatprep.subr.mxu0 0.0
        %1117 = vmatpush1.msra.mxu0 0.0
        %1118 = vmatprep.subr.mxu0 0.0
        %1119 = vmatpush1.msra.mxu0 0.0
        %1120 = vmatprep.subr.mxu0 0.0
        %1121 = vmatpush1.msra.mxu0 0.0
        %1122 = vmatprep.subr.mxu0 0.0
        %1123 = vmatpush1.msra.mxu0 0.0
        %1124 = vmatprep.subr.mxu0 0.0
        %1125 = vmatpush1.msra.mxu0 0.0
        %1126 = vmatprep.subr.mxu0 0.0
        %1127 = vmatpush1.msra.mxu0 0.0
        %1128 = vmatprep.subr.mxu0 0.0
        %1129 = vmatpush1.msra.mxu0 0.0
        %1130 = vmatprep.subr.mxu0 0.0
        %1131 = vmatpush1.msra.mxu0 0.0
        %1132 = vmatprep.subr.mxu0 0.0
        %1133 = vmatpush1.msra.mxu0 0.0
        %1134 = vmatprep.subr.mxu0 0.0
        %1135 = vmatpush1.msra.mxu0 0.0
        %1136 = vmatprep.subr.mxu0 0.0
        %1137 = vmatpush1.msra.mxu0 0.0
        %1138 = vmatprep.subr.mxu0 0.0
        %1139 = vmatpush1.msra.mxu0 0.0
        %1140 = vmatprep.subr.mxu0 0.0
        %1141 = vmatpush1.msra.mxu0 0.0
        %1142 = vmatprep.subr.mxu0 0.0
        %1143 = vmatpush1.msra.mxu0 0.0
        %1144 = vmatprep.subr.mxu0 0.0
        %1145 = vmatpush1.msra.mxu0 0.0
        %1146 = vmatprep.subr.mxu0 0.0
        %1147 = vmatpush1.msra.mxu0 0.0
        %1148 = vmatprep.subr.mxu0 0.0
        %1149 = vmatpush1.msra.mxu0 0.0
        %1150 = vmatprep.subr.mxu0 0.0
        %1151 = vmatpush1.msra.mxu0 0.0
        %1152 = vmatprep.subr.mxu0 0.0
        %1153 = vmatpush1.msra.mxu0 0.0
        %1154 = vmatprep.subr.mxu0 0.0
        %1155 = vmatpush1.msra.mxu0 0.0
        %1156 = vmatprep.subr.mxu0 0.0
        %1157 = vmatpush1.msra.mxu0 0.0
        %1158 = vmatprep.subr.mxu0 0.0
        %1159 = vmatpush1.msra.mxu0 0.0
        %1160 = vmatprep.subr.mxu0 0.0
        %1161 = vmatpush1.msra.mxu0 0.0
        %1162 = vmatprep.subr.mxu0 0.0
        %1163 = vmatpush1.msra.mxu0 0.0
        %1164 = vmatprep.mubr.f32.mxu0 0.0
        %1165 = vmatmul.mubr.f32.gmra.mrb[0].mxu0 %v1095
        %v1166 = vpop.f32.mrb[0].mxu0
        %v1167 = vadd.f32 0.0, %v1166
        %v1168 = vpop.f32.mrb[0].mxu0
        %1169 = vmatprep.mubr.f32.mxu0 0.0
        %1170 = vmatmul.mubr.f32.gmra.mrb[0].mxu0 %v1098
        %v1171 = vpop.f32.mrb[0].mxu0
        %v1172 = vadd.f32 0.0, %v1171
        %v1173 = vpop.f32.mrb[0].mxu0
        %1174 = vdwg.mxu0
        %1175 = vrot.lane.b32.xlu0 %v408, 64
        %v1176 = vpop.permute.xlu0 %1175
        %1177 = vrot.lane.b32.xlu0 %v413, 64
        %v1178 = vpop.permute.xlu0 %1177
        %v1182 = vsel %vm825, %v912, 0
        %v1185 = vsel %vm825, %v913, 0
        %1187 = vmatprep.subr.mxu0 0.0
        %1188 = vmatpush1.msra.mxu0 %v1176
        %1189 = vmatprep.subr.mxu0 0.0
        %1190 = vmatpush1.msra.mxu0 %v1178
        %1191 = vmatprep.subr.mxu0 0.0
        %1192 = vmatpush1.msra.mxu0 0.0
        %1193 = vmatprep.subr.mxu0 0.0
        %1194 = vmatpush1.msra.mxu0 0.0
        %1195 = vmatprep.subr.mxu0 0.0
        %1196 = vmatpush1.msra.mxu0 0.0
        %1197 = vmatprep.subr.mxu0 0.0
        %1198 = vmatpush1.msra.mxu0 0.0
        %1199 = vmatprep.subr.mxu0 0.0
        %1200 = vmatpush1.msra.mxu0 0.0
        %1201 = vmatprep.subr.mxu0 0.0
        %1202 = vmatpush1.msra.mxu0 0.0
        %1203 = vmatprep.subr.mxu0 0.0
        %1204 = vmatpush1.msra.mxu0 0.0
        %1205 = vmatprep.subr.mxu0 0.0
        %1206 = vmatpush1.msra.mxu0 0.0
        %1207 = vmatprep.subr.mxu0 0.0
        %1208 = vmatpush1.msra.mxu0 0.0
        %1209 = vmatprep.subr.mxu0 0.0
        %1210 = vmatpush1.msra.mxu0 0.0
        %1211 = vmatprep.subr.mxu0 0.0
        %1212 = vmatpush1.msra.mxu0 0.0
        %1213 = vmatprep.subr.mxu0 0.0
        %1214 = vmatpush1.msra.mxu0 0.0
        %1215 = vmatprep.subr.mxu0 0.0
        %1216 = vmatpush1.msra.mxu0 0.0
        %1217 = vmatprep.subr.mxu0 0.0
        %1218 = vmatpush1.msra.mxu0 0.0
        %1219 = vmatprep.subr.mxu0 0.0
        %1220 = vmatpush1.msra.mxu0 0.0
        %1221 = vmatprep.subr.mxu0 0.0
        %1222 = vmatpush1.msra.mxu0 0.0
        %1223 = vmatprep.subr.mxu0 0.0
        %1224 = vmatpush1.msra.mxu0 0.0
        %1225 = vmatprep.subr.mxu0 0.0
        %1226 = vmatpush1.msra.mxu0 0.0
        %1227 = vmatprep.subr.mxu0 0.0
        %1228 = vmatpush1.msra.mxu0 0.0
        %1229 = vmatprep.subr.mxu0 0.0
        %1230 = vmatpush1.msra.mxu0 0.0
        %1231 = vmatprep.subr.mxu0 0.0
        %1232 = vmatpush1.msra.mxu0 0.0
        %1233 = vmatprep.subr.mxu0 0.0
        %1234 = vmatpush1.msra.mxu0 0.0
        %1235 = vmatprep.subr.mxu0 0.0
        %1236 = vmatpush1.msra.mxu0 0.0
        %1237 = vmatprep.subr.mxu0 0.0
        %1238 = vmatpush1.msra.mxu0 0.0
        %1239 = vmatprep.subr.mxu0 0.0
        %1240 = vmatpush1.msra.mxu0 0.0
        %1241 = vmatprep.subr.mxu0 0.0
        %1242 = vmatpush1.msra.mxu0 0.0
        %1243 = vmatprep.subr.mxu0 0.0
        %1244 = vmatpush1.msra.mxu0 0.0
        %1245 = vmatprep.subr.mxu0 0.0
        %1246 = vmatpush1.msra.mxu0 0.0
        %1247 = vmatprep.subr.mxu0 0.0
        %1248 = vmatpush1.msra.mxu0 0.0
        %1249 = vmatprep.subr.mxu0 0.0
        %1250 = vmatpush1.msra.mxu0 0.0
        %1251 = vmatprep.mubr.f32.mxu0 0.0
        %1252 = vmatmul.mubr.f32.gmra.mrb[0].mxu0 %v1182
        %v1253 = vpop.f32.mrb[0].mxu0
        %v1254 = vadd.f32 0.0, %v1253
        %v1255 = vpop.f32.mrb[0].mxu0
        %1256 = vmatprep.mubr.f32.mxu0 0.0
        %1257 = vmatmul.mubr.f32.gmra.mrb[0].mxu0 %v1185
        %v1258 = vpop.f32.mrb[0].mxu0
        %v1259 = vadd.f32 0.0, %v1258
        %v1260 = vpop.f32.mrb[0].mxu0
        %1261 = vdwg.mxu0
        %1262 = vrot.lane.b32.xlu0 %v452, 120
        %v1263 = vpop.permute.xlu0 %1262
        %1264 = vrot.lane.b32.xlu0 %v453, 120
        %v1265 = vpop.permute.xlu0 %1264
        %1266 = vrot.lane.b32.xlu0 %v378, 88
        %v1267 = vpop.permute.xlu0 %1266
        %1268 = vrot.lane.b32.xlu0 %v383, 88
        %v1269 = vpop.permute.xlu0 %1268
        %v1270 = vsel %vm466, %v1263, 0
        %v1272 = vsel %vm466, %v1265, 0
        %v1274 = vsel %vm466, %v1267, 0
        %v1276 = vsel %vm466, %v1269, 0
        %1278 = vmatprep.subr.mxu0 0.0
        %1279 = vmatpush1.xpose.msra.mxu0 %v1274
        %1280 = vmatprep.subr.mxu0 0.0
        %1281 = vmatpush1.xpose.msra.mxu0 %v1276
        %1282 = vmatprep.subr.mxu0 0.0
        %1283 = vmatpush1.xpose.msra.mxu0 0.0
        %1284 = vmatprep.subr.mxu0 0.0
        %1285 = vmatpush1.xpose.msra.mxu0 0.0
        %1286 = vmatprep.subr.mxu0 0.0
        %1287 = vmatpush1.xpose.msra.mxu0 0.0
        %1288 = vmatprep.subr.mxu0 0.0
        %1289 = vmatpush1.xpose.msra.mxu0 0.0
        %1290 = vmatprep.subr.mxu0 0.0
        %1291 = vmatpush1.xpose.msra.mxu0 0.0
        %1292 = vmatprep.subr.mxu0 0.0
        %1293 = vmatpush1.xpose.msra.mxu0 0.0
        %1294 = vmatprep.subr.mxu0 0.0
        %1295 = vmatpush1.xpose.msra.mxu0 0.0
        %1296 = vmatprep.subr.mxu0 0.0
        %1297 = vmatpush1.xpose.msra.mxu0 0.0
        %1298 = vmatprep.subr.mxu0 0.0
        %1299 = vmatpush1.xpose.msra.mxu0 0.0
        %1300 = vmatprep.subr.mxu0 0.0
        %1301 = vmatpush1.xpose.msra.mxu0 0.0
        %1302 = vmatprep.subr.mxu0 0.0
        %1303 = vmatpush1.xpose.msra.mxu0 0.0
        %1304 = vmatprep.subr.mxu0 0.0
        %1305 = vmatpush1.xpose.msra.mxu0 0.0
        %1306 = vmatprep.subr.mxu0 0.0
        %1307 = vmatpush1.xpose.msra.mxu0 0.0
        %1308 = vmatprep.subr.mxu0 0.0
        %1309 = vmatpush1.xpose.msra.mxu0 0.0
        %1310 = vmatprep.subr.mxu0 0.0
        %1311 = vmatpush1.xpose.msra.mxu0 0.0
        %1312 = vmatprep.subr.mxu0 0.0
        %1313 = vmatpush1.xpose.msra.mxu0 0.0
        %1314 = vmatprep.subr.mxu0 0.0
        %1315 = vmatpush1.xpose.msra.mxu0 0.0
        %1316 = vmatprep.subr.mxu0 0.0
        %1317 = vmatpush1.xpose.msra.mxu0 0.0
        %1318 = vmatprep.subr.mxu0 0.0
        %1319 = vmatpush1.xpose.msra.mxu0 0.0
        %1320 = vmatprep.subr.mxu0 0.0
        %1321 = vmatpush1.xpose.msra.mxu0 0.0
        %1322 = vmatprep.subr.mxu0 0.0
        %1323 = vmatpush1.xpose.msra.mxu0 0.0
        %1324 = vmatprep.subr.mxu0 0.0
        %1325 = vmatpush1.xpose.msra.mxu0 0.0
        %1326 = vmatprep.subr.mxu0 0.0
        %1327 = vmatpush1.xpose.msra.mxu0 0.0
        %1328 = vmatprep.subr.mxu0 0.0
        %1329 = vmatpush1.xpose.msra.mxu0 0.0
        %1330 = vmatprep.subr.mxu0 0.0
        %1331 = vmatpush1.xpose.msra.mxu0 0.0
        %1332 = vmatprep.subr.mxu0 0.0
        %1333 = vmatpush1.xpose.msra.mxu0 0.0
        %1334 = vmatprep.subr.mxu0 0.0
        %1335 = vmatpush1.xpose.msra.mxu0 0.0
        %1336 = vmatprep.subr.mxu0 0.0
        %1337 = vmatpush1.xpose.msra.mxu0 0.0
        %1338 = vmatprep.subr.mxu0 0.0
        %1339 = vmatpush1.xpose.msra.mxu0 0.0
        %1340 = vmatprep.subr.mxu0 0.0
        %1341 = vmatpush1.xpose.msra.mxu0 0.0
        %1342 = vmatprep.mubr.f32.mxu0 0.0
        %1343 = vmatmul.mubr.f32.gmra.mrb[0].mxu0 %v1270
        %v1344 = vpop.f32.mrb[0].mxu0
        %v1345 = vadd.f32 %v418, %v1344
        %v1346 = vpop.f32.mrb[0].mxu0
        %1347 = vmatprep.mubr.f32.mxu0 0.0
        %1348 = vmatmul.mubr.f32.gmra.mrb[0].mxu0 %v1272
        %v1349 = vpop.f32.mrb[0].mxu0
        %v1350 = vadd.f32 %v419, %v1349
        %v1351 = vpop.f32.mrb[0].mxu0
        %1352 = vdwg.mxu0
        %1353 = vrot.lane.b32.xlu0 %v454, 120
        %v1354 = vpop.permute.xlu0 %1353
        %1355 = vrot.lane.b32.xlu0 %v455, 120
        %v1356 = vpop.permute.xlu0 %1355
        %1357 = vrot.lane.b32.xlu0 %v388, 88
        %v1358 = vpop.permute.xlu0 %1357
        %1359 = vrot.lane.b32.xlu0 %v393, 88
        %v1360 = vpop.permute.xlu0 %1359
        %v1361 = vsel %vm466, %v1354, 0
        %v1363 = vsel %vm466, %v1356, 0
        %v1365 = vsel %vm466, %v1358, 0
        %v1367 = vsel %vm466, %v1360, 0
        %1369 = vmatprep.subr.mxu0 0.0
        %1370 = vmatpush1.xpose.msra.mxu0 %v1365
        %1371 = vmatprep.subr.mxu0 0.0
        %1372 = vmatpush1.xpose.msra.mxu0 %v1367
        %1373 = vmatprep.subr.mxu0 0.0
        %1374 = vmatpush1.xpose.msra.mxu0 0.0
        %1375 = vmatprep.subr.mxu0 0.0
        %1376 = vmatpush1.xpose.msra.mxu0 0.0
        %1377 = vmatprep.subr.mxu0 0.0
        %1378 = vmatpush1.xpose.msra.mxu0 0.0
        %1379 = vmatprep.subr.mxu0 0.0
        %1380 = vmatpush1.xpose.msra.mxu0 0.0
        %1381 = vmatprep.subr.mxu0 0.0
        %1382 = vmatpush1.xpose.msra.mxu0 0.0
        %1383 = vmatprep.subr.mxu0 0.0
        %1384 = vmatpush1.xpose.msra.mxu0 0.0
        %1385 = vmatprep.subr.mxu0 0.0
        %1386 = vmatpush1.xpose.msra.mxu0 0.0
        %1387 = vmatprep.subr.mxu0 0.0
        %1388 = vmatpush1.xpose.msra.mxu0 0.0
        %1389 = vmatprep.subr.mxu0 0.0
        %1390 = vmatpush1.xpose.msra.mxu0 0.0
        %1391 = vmatprep.subr.mxu0 0.0
        %1392 = vmatpush1.xpose.msra.mxu0 0.0
        %1393 = vmatprep.subr.mxu0 0.0
        %1394 = vmatpush1.xpose.msra.mxu0 0.0
        %1395 = vmatprep.subr.mxu0 0.0
        %1396 = vmatpush1.xpose.msra.mxu0 0.0
        %1397 = vmatprep.subr.mxu0 0.0
        %1398 = vmatpush1.xpose.msra.mxu0 0.0
        %1399 = vmatprep.subr.mxu0 0.0
        %1400 = vmatpush1.xpose.msra.mxu0 0.0
        %1401 = vmatprep.subr.mxu0 0.0
        %1402 = vmatpush1.xpose.msra.mxu0 0.0
        %1403 = vmatprep.subr.mxu0 0.0
        %1404 = vmatpush1.xpose.msra.mxu0 0.0
        %1405 = vmatprep.subr.mxu0 0.0
        %1406 = vmatpush1.xpose.msra.mxu0 0.0
        %1407 = vmatprep.subr.mxu0 0.0
        %1408 = vmatpush1.xpose.msra.mxu0 0.0
        %1409 = vmatprep.subr.mxu0 0.0
        %1410 = vmatpush1.xpose.msra.mxu0 0.0
        %1411 = vmatprep.subr.mxu0 0.0
        %1412 = vmatpush1.xpose.msra.mxu0 0.0
        %1413 = vmatprep.subr.mxu0 0.0
        %1414 = vmatpush1.xpose.msra.mxu0 0.0
        %1415 = vmatprep.subr.mxu0 0.0
        %1416 = vmatpush1.xpose.msra.mxu0 0.0
        %1417 = vmatprep.subr.mxu0 0.0
        %1418 = vmatpush1.xpose.msra.mxu0 0.0
        %1419 = vmatprep.subr.mxu0 0.0
        %1420 = vmatpush1.xpose.msra.mxu0 0.0
        %1421 = vmatprep.subr.mxu0 0.0
        %1422 = vmatpush1.xpose.msra.mxu0 0.0
        %1423 = vmatprep.subr.mxu0 0.0
        %1424 = vmatpush1.xpose.msra.mxu0 0.0
        %1425 = vmatprep.subr.mxu0 0.0
        %1426 = vmatpush1.xpose.msra.mxu0 0.0
        %1427 = vmatprep.subr.mxu0 0.0
        %1428 = vmatpush1.xpose.msra.mxu0 0.0
        %1429 = vmatprep.subr.mxu0 0.0
        %1430 = vmatpush1.xpose.msra.mxu0 0.0
        %1431 = vmatprep.subr.mxu0 0.0
        %1432 = vmatpush1.xpose.msra.mxu0 0.0
        %1433 = vmatprep.mubr.f32.mxu0 0.0
        %1434 = vmatmul.mubr.f32.gmra.mrb[0].mxu0 %v1361
        %v1435 = vpop.f32.mrb[0].mxu0
        %v1436 = vadd.f32 %v426, %v1435
        %v1437 = vpop.f32.mrb[0].mxu0
        %1438 = vmatprep.mubr.f32.mxu0 0.0
        %1439 = vmatmul.mubr.f32.gmra.mrb[0].mxu0 %v1363
        %v1440 = vpop.f32.mrb[0].mxu0
        %v1441 = vadd.f32 %v427, %v1440
        %v1442 = vpop.f32.mrb[0].mxu0
        %1443 = vdwg.mxu0
        %1444 = vrot.lane.b32.xlu0 %v456, 120
        %v1445 = vpop.permute.xlu0 %1444
        %1446 = vrot.lane.b32.xlu0 %v457, 120
        %v1447 = vpop.permute.xlu0 %1446
        %1448 = vrot.lane.b32.xlu0 %v398, 88
        %v1449 = vpop.permute.xlu0 %1448
        %1450 = vrot.lane.b32.xlu0 %v403, 88
        %v1451 = vpop.permute.xlu0 %1450
        %v1452 = vsel %vm466, %v1445, 0
        %v1454 = vsel %vm466, %v1447, 0
        %v1456 = vsel %vm466, %v1449, 0
        %v1458 = vsel %vm466, %v1451, 0
        %1460 = vmatprep.subr.mxu0 0.0
        %1461 = vmatpush1.xpose.msra.mxu0 %v1456
        %1462 = vmatprep.subr.mxu0 0.0
        %1463 = vmatpush1.xpose.msra.mxu0 %v1458
        %1464 = vmatprep.subr.mxu0 0.0
        %1465 = vmatpush1.xpose.msra.mxu0 0.0
        %1466 = vmatprep.subr.mxu0 0.0
        %1467 = vmatpush1.xpose.msra.mxu0 0.0
        %1468 = vmatprep.subr.mxu0 0.0
        %1469 = vmatpush1.xpose.msra.mxu0 0.0
        %1470 = vmatprep.subr.mxu0 0.0
        %1471 = vmatpush1.xpose.msra.mxu0 0.0
        %1472 = vmatprep.subr.mxu0 0.0
        %1473 = vmatpush1.xpose.msra.mxu0 0.0
        %1474 = vmatprep.subr.mxu0 0.0
        %1475 = vmatpush1.xpose.msra.mxu0 0.0
        %1476 = vmatprep.subr.mxu0 0.0
        %1477 = vmatpush1.xpose.msra.mxu0 0.0
        %1478 = vmatprep.subr.mxu0 0.0
        %1479 = vmatpush1.xpose.msra.mxu0 0.0
        %1480 = vmatprep.subr.mxu0 0.0
        %1481 = vmatpush1.xpose.msra.mxu0 0.0
        %1482 = vmatprep.subr.mxu0 0.0
        %1483 = vmatpush1.xpose.msra.mxu0 0.0
        %1484 = vmatprep.subr.mxu0 0.0
        %1485 = vmatpush1.xpose.msra.mxu0 0.0
        %1486 = vmatprep.subr.mxu0 0.0
        %1487 = vmatpush1.xpose.msra.mxu0 0.0
        %1488 = vmatprep.subr.mxu0 0.0
        %1489 = vmatpush1.xpose.msra.mxu0 0.0
        %1490 = vmatprep.subr.mxu0 0.0
        %1491 = vmatpush1.xpose.msra.mxu0 0.0
        %1492 = vmatprep.subr.mxu0 0.0
        %1493 = vmatpush1.xpose.msra.mxu0 0.0
        %1494 = vmatprep.subr.mxu0 0.0
        %1495 = vmatpush1.xpose.msra.mxu0 0.0
        %1496 = vmatprep.subr.mxu0 0.0
        %1497 = vmatpush1.xpose.msra.mxu0 0.0
        %1498 = vmatprep.subr.mxu0 0.0
        %1499 = vmatpush1.xpose.msra.mxu0 0.0
        %1500 = vmatprep.subr.mxu0 0.0
        %1501 = vmatpush1.xpose.msra.mxu0 0.0
        %1502 = vmatprep.subr.mxu0 0.0
        %1503 = vmatpush1.xpose.msra.mxu0 0.0
        %1504 = vmatprep.subr.mxu0 0.0
        %1505 = vmatpush1.xpose.msra.mxu0 0.0
        %1506 = vmatprep.subr.mxu0 0.0
        %1507 = vmatpush1.xpose.msra.mxu0 0.0
        %1508 = vmatprep.subr.mxu0 0.0
        %1509 = vmatpush1.xpose.msra.mxu0 0.0
        %1510 = vmatprep.subr.mxu0 0.0
        %1511 = vmatpush1.xpose.msra.mxu0 0.0
        %1512 = vmatprep.subr.mxu0 0.0
        %1513 = vmatpush1.xpose.msra.mxu0 0.0
        %1514 = vmatprep.subr.mxu0 0.0
        %1515 = vmatpush1.xpose.msra.mxu0 0.0
        %1516 = vmatprep.subr.mxu0 0.0
        %1517 = vmatpush1.xpose.msra.mxu0 0.0
        %1518 = vmatprep.subr.mxu0 0.0
        %1519 = vmatpush1.xpose.msra.mxu0 0.0
        %1520 = vmatprep.subr.mxu0 0.0
        %1521 = vmatpush1.xpose.msra.mxu0 0.0
        %1522 = vmatprep.subr.mxu0 0.0
        %1523 = vmatpush1.xpose.msra.mxu0 0.0
        %1524 = vmatprep.mubr.f32.mxu0 0.0
        %1525 = vmatmul.mubr.f32.gmra.mrb[0].mxu0 %v1452
        %v1526 = vpop.f32.mrb[0].mxu0
        %v1527 = vadd.f32 %v434, %v1526
        %v1528 = vpop.f32.mrb[0].mxu0
        %1529 = vmatprep.mubr.f32.mxu0 0.0
        %1530 = vmatmul.mubr.f32.gmra.mrb[0].mxu0 %v1454
        %v1531 = vpop.f32.mrb[0].mxu0
        %v1532 = vadd.f32 %v435, %v1531
        %v1533 = vpop.f32.mrb[0].mxu0
        %1534 = vdwg.mxu0
        %1535 = vrot.lane.b32.xlu0 %v458, 120
        %v1536 = vpop.permute.xlu0 %1535
        %1537 = vrot.lane.b32.xlu0 %v459, 120
        %v1538 = vpop.permute.xlu0 %1537
        %1539 = vrot.lane.b32.xlu0 %v408, 88
        %v1540 = vpop.permute.xlu0 %1539
        %1541 = vrot.lane.b32.xlu0 %v413, 88
        %v1542 = vpop.permute.xlu0 %1541
        %v1543 = vsel %vm466, %v1536, 0
        %v1545 = vsel %vm466, %v1538, 0
        %v1547 = vsel %vm466, %v1540, 0
        %v1549 = vsel %vm466, %v1542, 0
        %1551 = vmatprep.subr.mxu0 0.0
        %1552 = vmatpush1.xpose.msra.mxu0 %v1547
        %1553 = vmatprep.subr.mxu0 0.0
        %1554 = vmatpush1.xpose.msra.mxu0 %v1549
        %1555 = vmatprep.subr.mxu0 0.0
        %1556 = vmatpush1.xpose.msra.mxu0 0.0
        %1557 = vmatprep.subr.mxu0 0.0
        %1558 = vmatpush1.xpose.msra.mxu0 0.0
        %1559 = vmatprep.subr.mxu0 0.0
        %1560 = vmatpush1.xpose.msra.mxu0 0.0
        %1561 = vmatprep.subr.mxu0 0.0
        %1562 = vmatpush1.xpose.msra.mxu0 0.0
        %1563 = vmatprep.subr.mxu0 0.0
        %1564 = vmatpush1.xpose.msra.mxu0 0.0
        %1565 = vmatprep.subr.mxu0 0.0
        %1566 = vmatpush1.xpose.msra.mxu0 0.0
        %1567 = vmatprep.subr.mxu0 0.0
        %1568 = vmatpush1.xpose.msra.mxu0 0.0
        %1569 = vmatprep.subr.mxu0 0.0
        %1570 = vmatpush1.xpose.msra.mxu0 0.0
        %1571 = vmatprep.subr.mxu0 0.0
        %1572 = vmatpush1.xpose.msra.mxu0 0.0
        %1573 = vmatprep.subr.mxu0 0.0
        %1574 = vmatpush1.xpose.msra.mxu0 0.0
        %1575 = vmatprep.subr.mxu0 0.0
        %1576 = vmatpush1.xpose.msra.mxu0 0.0
        %1577 = vmatprep.subr.mxu0 0.0
        %1578 = vmatpush1.xpose.msra.mxu0 0.0
        %1579 = vmatprep.subr.mxu0 0.0
        %1580 = vmatpush1.xpose.msra.mxu0 0.0
        %1581 = vmatprep.subr.mxu0 0.0
        %1582 = vmatpush1.xpose.msra.mxu0 0.0
        %1583 = vmatprep.subr.mxu0 0.0
        %1584 = vmatpush1.xpose.msra.mxu0 0.0
        %1585 = vmatprep.subr.mxu0 0.0
        %1586 = vmatpush1.xpose.msra.mxu0 0.0
        %1587 = vmatprep.subr.mxu0 0.0
        %1588 = vmatpush1.xpose.msra.mxu0 0.0
        %1589 = vmatprep.subr.mxu0 0.0
        %1590 = vmatpush1.xpose.msra.mxu0 0.0
        %1591 = vmatprep.subr.mxu0 0.0
        %1592 = vmatpush1.xpose.msra.mxu0 0.0
        %1593 = vmatprep.subr.mxu0 0.0
        %1594 = vmatpush1.xpose.msra.mxu0 0.0
        %1595 = vmatprep.subr.mxu0 0.0
        %1596 = vmatpush1.xpose.msra.mxu0 0.0
        %1597 = vmatprep.subr.mxu0 0.0
        %1598 = vmatpush1.xpose.msra.mxu0 0.0
        %1599 = vmatprep.subr.mxu0 0.0
        %1600 = vmatpush1.xpose.msra.mxu0 0.0
        %1601 = vmatprep.subr.mxu0 0.0
        %1602 = vmatpush1.xpose.msra.mxu0 0.0
        %1603 = vmatprep.subr.mxu0 0.0
        %1604 = vmatpush1.xpose.msra.mxu0 0.0
        %1605 = vmatprep.subr.mxu0 0.0
        %1606 = vmatpush1.xpose.msra.mxu0 0.0
        %1607 = vmatprep.subr.mxu0 0.0
        %1608 = vmatpush1.xpose.msra.mxu0 0.0
        %1609 = vmatprep.subr.mxu0 0.0
        %1610 = vmatpush1.xpose.msra.mxu0 0.0
        %1611 = vmatprep.subr.mxu0 0.0
        %1612 = vmatpush1.xpose.msra.mxu0 0.0
        %1613 = vmatprep.subr.mxu0 0.0
        %1614 = vmatpush1.xpose.msra.mxu0 0.0
        %1615 = vmatprep.mubr.f32.mxu0 0.0
        %1616 = vmatmul.mubr.f32.gmra.mrb[0].mxu0 %v1543
        %v1617 = vpop.f32.mrb[0].mxu0
        %v1618 = vadd.f32 %v442, %v1617
        %v1619 = vpop.f32.mrb[0].mxu0
        %1620 = vmatprep.mubr.f32.mxu0 0.0
        %1621 = vmatmul.mubr.f32.gmra.mrb[0].mxu0 %v1545
        %v1622 = vpop.f32.mrb[0].mxu0
        %v1623 = vadd.f32 %v443, %v1622
        %v1624 = vpop.f32.mrb[0].mxu0
        %1625 = vdwg.mxu0
        %v1626 = vsel %vm825, %v1345, -inf
        %1627 = vmax.xlane.f32.xlu0 %v1626
        %v1628 = vpop.xlane.xlu0 %1627
        %v1629 = vsel %vm825, %v1350, -inf
        %1630 = vmax.xlane.f32.xlu0 %v1629
        %v1631 = vpop.xlane.xlu0 %1630
        %v1632 = vsel %vm825, %v1436, -inf
        %1633 = vmax.xlane.f32.xlu0 %v1632
        %v1634 = vpop.xlane.xlu0 %1633
        %v1635 = vsel %vm825, %v1441, -inf
        %1636 = vmax.xlane.f32.xlu0 %v1635
        %v1637 = vpop.xlane.xlu0 %1636
        %v1638 = vsel %vm825, %v1527, -inf
        %1639 = vmax.xlane.f32.xlu0 %v1638
        %v1640 = vpop.xlane.xlu0 %1639
        %v1641 = vsel %vm825, %v1532, -inf
        %1642 = vmax.xlane.f32.xlu0 %v1641
        %v1643 = vpop.xlane.xlu0 %1642
        %v1644 = vsel %vm825, %v1618, -inf
        %1645 = vmax.xlane.f32.xlu0 %v1644
        %v1646 = vpop.xlane.xlu0 %1645
        %v1647 = vsel %vm825, %v1623, -inf
        %1648 = vmax.xlane.f32.xlu0 %v1647
        %v1649 = vpop.xlane.xlu0 %1648
        %v1650 = vsub.f32 %v1345, %v1628
        %v1651 = vsub.f32 %v1350, %v1631
        %v1652 = vsub.f32 %v1436, %v1634
        %v1653 = vsub.f32 %v1441, %v1637
        %v1654 = vsub.f32 %v1527, %v1640
        %v1655 = vsub.f32 %v1532, %v1643
        %v1656 = vsub.f32 %v1618, %v1646
        %v1657 = vsub.f32 %v1623, %v1649
        %v1658 = vmul.f32 %v1650, 1.442695
        %v1659 = vpow.pop %v1658
        %v1660 = vmul.f32 %v1651, 1.442695
        %v1661 = vpow.pop %v1660
        %v1662 = vmul.f32 %v1652, 1.442695
        %v1663 = vpow.pop %v1662
        %v1664 = vmul.f32 %v1653, 1.442695
        %v1665 = vpow.pop %v1664
        %v1666 = vmul.f32 %v1654, 1.442695
        %v1667 = vpow.pop %v1666
        %v1668 = vmul.f32 %v1655, 1.442695
        %v1669 = vpow.pop %v1668
        %v1670 = vmul.f32 %v1656, 1.442695
        %v1671 = vpow.pop %v1670
        %v1672 = vmul.f32 %v1657, 1.442695
        %v1673 = vpow.pop %v1672
        %v1674 = vsel %vm825, %v1659, 0.0
        %1675 = vadd.xlane.f32.xlu0 %v1674
        %v1676 = vpop.xlane.xlu0 %1675
        %v1677 = vsel %vm825, %v1661, 0.0
        %1678 = vadd.xlane.f32.xlu0 %v1677
        %v1679 = vpop.xlane.xlu0 %1678
        %v1680 = vsel %vm825, %v1663, 0.0
        %1681 = vadd.xlane.f32.xlu0 %v1680
        %v1682 = vpop.xlane.xlu0 %1681
        %v1683 = vsel %vm825, %v1665, 0.0
        %1684 = vadd.xlane.f32.xlu0 %v1683
        %v1685 = vpop.xlane.xlu0 %1684
        %v1686 = vsel %vm825, %v1667, 0.0
        %1687 = vadd.xlane.f32.xlu0 %v1686
        %v1688 = vpop.xlane.xlu0 %1687
        %v1689 = vsel %vm825, %v1669, 0.0
        %1690 = vadd.xlane.f32.xlu0 %v1689
        %v1691 = vpop.xlane.xlu0 %1690
        %v1692 = vsel %vm825, %v1671, 0.0
        %1693 = vadd.xlane.f32.xlu0 %v1692
        %v1694 = vpop.xlane.xlu0 %1693
        %v1695 = vsel %vm825, %v1673, 0.0
        %1696 = vadd.xlane.f32.xlu0 %v1695
        %v1697 = vpop.xlane.xlu0 %1696
        %v1698 = vrcp.pop %v1676
        %v1699 = vrcp.pop %v1679
        %v1700 = vrcp.pop %v1682
        %v1701 = vrcp.pop %v1685
        %v1702 = vrcp.pop %v1688
        %v1703 = vrcp.pop %v1691
        %v1704 = vrcp.pop %v1694
        %v1705 = vrcp.pop %v1697
        %v1706 = vmul.f32 %v1659, %v1698
        %v1707 = vmul.f32 %v1661, %v1699
        %v1708 = vmul.f32 %v1663, %v1700
        %v1709 = vmul.f32 %v1665, %v1701
        %v1710 = vmul.f32 %v1667, %v1702
        %v1711 = vmul.f32 %v1669, %v1703
        %v1712 = vmul.f32 %v1671, %v1704
        %v1713 = vmul.f32 %v1673, %v1705
        %1714 = vrot.lane.b32.xlu0 %v378, 56
        %v1715 = vpop.permute.xlu0 %1714
        %1716 = vrot.lane.b32.xlu0 %v383, 56
        %v1717 = vpop.permute.xlu0 %1716
        %v1721 = vsel %vm825, %v1706, 0
        %v1724 = vsel %vm825, %v1707, 0
        %1726 = vmatprep.subr.mxu0 0.0
        %1727 = vmatpush1.msra.mxu0 %v1715
        %1728 = vmatprep.subr.mxu0 0.0
        %1729 = vmatpush1.msra.mxu0 %v1717
        %1730 = vmatprep.subr.mxu0 0.0
        %1731 = vmatpush1.msra.mxu0 0.0
        %1732 = vmatprep.subr.mxu0 0.0
        %1733 = vmatpush1.msra.mxu0 0.0
        %1734 = vmatprep.subr.mxu0 0.0
        %1735 = vmatpush1.msra.mxu0 0.0
        %1736 = vmatprep.subr.mxu0 0.0
        %1737 = vmatpush1.msra.mxu0 0.0
        %1738 = vmatprep.subr.mxu0 0.0
        %1739 = vmatpush1.msra.mxu0 0.0
        %1740 = vmatprep.subr.mxu0 0.0
        %1741 = vmatpush1.msra.mxu0 0.0
        %1742 = vmatprep.subr.mxu0 0.0
        %1743 = vmatpush1.msra.mxu0 0.0
        %1744 = vmatprep.subr.mxu0 0.0
        %1745 = vmatpush1.msra.mxu0 0.0
        %1746 = vmatprep.subr.mxu0 0.0
        %1747 = vmatpush1.msra.mxu0 0.0
        %1748 = vmatprep.subr.mxu0 0.0
        %1749 = vmatpush1.msra.mxu0 0.0
        %1750 = vmatprep.subr.mxu0 0.0
        %1751 = vmatpush1.msra.mxu0 0.0
        %1752 = vmatprep.subr.mxu0 0.0
        %1753 = vmatpush1.msra.mxu0 0.0
        %1754 = vmatprep.subr.mxu0 0.0
        %1755 = vmatpush1.msra.mxu0 0.0
        %1756 = vmatprep.subr.mxu0 0.0
        %1757 = vmatpush1.msra.mxu0 0.0
        %1758 = vmatprep.subr.mxu0 0.0
        %1759 = vmatpush1.msra.mxu0 0.0
        %1760 = vmatprep.subr.mxu0 0.0
        %1761 = vmatpush1.msra.mxu0 0.0
        %1762 = vmatprep.subr.mxu0 0.0
        %1763 = vmatpush1.msra.mxu0 0.0
        %1764 = vmatprep.subr.mxu0 0.0
        %1765 = vmatpush1.msra.mxu0 0.0
        %1766 = vmatprep.subr.mxu0 0.0
        %1767 = vmatpush1.msra.mxu0 0.0
        %1768 = vmatprep.subr.mxu0 0.0
        %1769 = vmatpush1.msra.mxu0 0.0
        %1770 = vmatprep.subr.mxu0 0.0
        %1771 = vmatpush1.msra.mxu0 0.0
        %1772 = vmatprep.subr.mxu0 0.0
        %1773 = vmatpush1.msra.mxu0 0.0
        %1774 = vmatprep.subr.mxu0 0.0
        %1775 = vmatpush1.msra.mxu0 0.0
        %1776 = vmatprep.subr.mxu0 0.0
        %1777 = vmatpush1.msra.mxu0 0.0
        %1778 = vmatprep.subr.mxu0 0.0
        %1779 = vmatpush1.msra.mxu0 0.0
        %1780 = vmatprep.subr.mxu0 0.0
        %1781 = vmatpush1.msra.mxu0 0.0
        %1782 = vmatprep.subr.mxu0 0.0
        %1783 = vmatpush1.msra.mxu0 0.0
        %1784 = vmatprep.subr.mxu0 0.0
        %1785 = vmatpush1.msra.mxu0 0.0
        %1786 = vmatprep.subr.mxu0 0.0
        %1787 = vmatpush1.msra.mxu0 0.0
        %1788 = vmatprep.subr.mxu0 0.0
        %1789 = vmatpush1.msra.mxu0 0.0
        %1790 = vmatprep.mubr.f32.mxu0 0.0
        %1791 = vmatmul.mubr.f32.gmra.mrb[0].mxu0 %v1721
        %v1792 = vpop.f32.mrb[0].mxu0
        %v1793 = vadd.f32 0.0, %v1792
        %v1794 = vpop.f32.mrb[0].mxu0
        %1795 = vmatprep.mubr.f32.mxu0 0.0
        %1796 = vmatmul.mubr.f32.gmra.mrb[0].mxu0 %v1724
        %v1797 = vpop.f32.mrb[0].mxu0
        %v1798 = vadd.f32 0.0, %v1797
        %v1799 = vpop.f32.mrb[0].mxu0
        %1800 = vdwg.mxu0
        %1801 = vrot.lane.b32.xlu0 %v388, 56
        %v1802 = vpop.permute.xlu0 %1801
        %1803 = vrot.lane.b32.xlu0 %v393, 56
        %v1804 = vpop.permute.xlu0 %1803
        %v1808 = vsel %vm825, %v1708, 0
        %v1811 = vsel %vm825, %v1709, 0
        %1813 = vmatprep.subr.mxu0 0.0
        %1814 = vmatpush1.msra.mxu0 %v1802
        %1815 = vmatprep.subr.mxu0 0.0
        %1816 = vmatpush1.msra.mxu0 %v1804
        %1817 = vmatprep.subr.mxu0 0.0
        %1818 = vmatpush1.msra.mxu0 0.0
        %1819 = vmatprep.subr.mxu0 0.0
        %1820 = vmatpush1.msra.mxu0 0.0
        %1821 = vmatprep.subr.mxu0 0.0
        %1822 = vmatpush1.msra.mxu0 0.0
        %1823 = vmatprep.subr.mxu0 0.0
        %1824 = vmatpush1.msra.mxu0 0.0
        %1825 = vmatprep.subr.mxu0 0.0
        %1826 = vmatpush1.msra.mxu0 0.0
        %1827 = vmatprep.subr.mxu0 0.0
        %1828 = vmatpush1.msra.mxu0 0.0
        %1829 = vmatprep.subr.mxu0 0.0
        %1830 = vmatpush1.msra.mxu0 0.0
        %1831 = vmatprep.subr.mxu0 0.0
        %1832 = vmatpush1.msra.mxu0 0.0
        %1833 = vmatprep.subr.mxu0 0.0
        %1834 = vmatpush1.msra.mxu0 0.0
        %1835 = vmatprep.subr.mxu0 0.0
        %1836 = vmatpush1.msra.mxu0 0.0
        %1837 = vmatprep.subr.mxu0 0.0
        %1838 = vmatpush1.msra.mxu0 0.0
        %1839 = vmatprep.subr.mxu0 0.0
        %1840 = vmatpush1.msra.mxu0 0.0
        %1841 = vmatprep.subr.mxu0 0.0
        %1842 = vmatpush1.msra.mxu0 0.0
        %1843 = vmatprep.subr.mxu0 0.0
        %1844 = vmatpush1.msra.mxu0 0.0
        %1845 = vmatprep.subr.mxu0 0.0
        %1846 = vmatpush1.msra.mxu0 0.0
        %1847 = vmatprep.subr.mxu0 0.0
        %1848 = vmatpush1.msra.mxu0 0.0
        %1849 = vmatprep.subr.mxu0 0.0
        %1850 = vmatpush1.msra.mxu0 0.0
        %1851 = vmatprep.subr.mxu0 0.0
        %1852 = vmatpush1.msra.mxu0 0.0
        %1853 = vmatprep.subr.mxu0 0.0
        %1854 = vmatpush1.msra.mxu0 0.0
        %1855 = vmatprep.subr.mxu0 0.0
        %1856 = vmatpush1.msra.mxu0 0.0
        %1857 = vmatprep.subr.mxu0 0.0
        %1858 = vmatpush1.msra.mxu0 0.0
        %1859 = vmatprep.subr.mxu0 0.0
        %1860 = vmatpush1.msra.mxu0 0.0
        %1861 = vmatprep.subr.mxu0 0.0
        %1862 = vmatpush1.msra.mxu0 0.0
        %1863 = vmatprep.subr.mxu0 0.0
        %1864 = vmatpush1.msra.mxu0 0.0
        %1865 = vmatprep.subr.mxu0 0.0
        %1866 = vmatpush1.msra.mxu0 0.0
        %1867 = vmatprep.subr.mxu0 0.0
        %1868 = vmatpush1.msra.mxu0 0.0
        %1869 = vmatprep.subr.mxu0 0.0
        %1870 = vmatpush1.msra.mxu0 0.0
        %1871 = vmatprep.subr.mxu0 0.0
        %1872 = vmatpush1.msra.mxu0 0.0
        %1873 = vmatprep.subr.mxu0 0.0
        %1874 = vmatpush1.msra.mxu0 0.0
        %1875 = vmatprep.subr.mxu0 0.0
        %1876 = vmatpush1.msra.mxu0 0.0
        %1877 = vmatprep.mubr.f32.mxu0 0.0
        %1878 = vmatmul.mubr.f32.gmra.mrb[0].mxu0 %v1808
        %v1879 = vpop.f32.mrb[0].mxu0
        %v1880 = vadd.f32 0.0, %v1879
        %v1881 = vpop.f32.mrb[0].mxu0
        %1882 = vmatprep.mubr.f32.mxu0 0.0
        %1883 = vmatmul.mubr.f32.gmra.mrb[0].mxu0 %v1811
        %v1884 = vpop.f32.mrb[0].mxu0
        %v1885 = vadd.f32 0.0, %v1884
        %v1886 = vpop.f32.mrb[0].mxu0
        %1887 = vdwg.mxu0
        %1888 = vrot.lane.b32.xlu0 %v398, 56
        %v1889 = vpop.permute.xlu0 %1888
        %1890 = vrot.lane.b32.xlu0 %v403, 56
        %v1891 = vpop.permute.xlu0 %1890
        %v1895 = vsel %vm825, %v1710, 0
        %v1898 = vsel %vm825, %v1711, 0
        %1900 = vmatprep.subr.mxu0 0.0
        %1901 = vmatpush1.msra.mxu0 %v1889
        %1902 = vmatprep.subr.mxu0 0.0
        %1903 = vmatpush1.msra.mxu0 %v1891
        %1904 = vmatprep.subr.mxu0 0.0
        %1905 = vmatpush1.msra.mxu0 0.0
        %1906 = vmatprep.subr.mxu0 0.0
        %1907 = vmatpush1.msra.mxu0 0.0
        %1908 = vmatprep.subr.mxu0 0.0
        %1909 = vmatpush1.msra.mxu0 0.0
        %1910 = vmatprep.subr.mxu0 0.0
        %1911 = vmatpush1.msra.mxu0 0.0
        %1912 = vmatprep.subr.mxu0 0.0
        %1913 = vmatpush1.msra.mxu0 0.0
        %1914 = vmatprep.subr.mxu0 0.0
        %1915 = vmatpush1.msra.mxu0 0.0
        %1916 = vmatprep.subr.mxu0 0.0
        %1917 = vmatpush1.msra.mxu0 0.0
        %1918 = vmatprep.subr.mxu0 0.0
        %1919 = vmatpush1.msra.mxu0 0.0
        %1920 = vmatprep.subr.mxu0 0.0
        %1921 = vmatpush1.msra.mxu0 0.0
        %1922 = vmatprep.subr.mxu0 0.0
        %1923 = vmatpush1.msra.mxu0 0.0
        %1924 = vmatprep.subr.mxu0 0.0
        %1925 = vmatpush1.msra.mxu0 0.0
        %1926 = vmatprep.subr.mxu0 0.0
        %1927 = vmatpush1.msra.mxu0 0.0
        %1928 = vmatprep.subr.mxu0 0.0
        %1929 = vmatpush1.msra.mxu0 0.0
        %1930 = vmatprep.subr.mxu0 0.0
        %1931 = vmatpush1.msra.mxu0 0.0
        %1932 = vmatprep.subr.mxu0 0.0
        %1933 = vmatpush1.msra.mxu0 0.0
        %1934 = vmatprep.subr.mxu0 0.0
        %1935 = vmatpush1.msra.mxu0 0.0
        %1936 = vmatprep.subr.mxu0 0.0
        %1937 = vmatpush1.msra.mxu0 0.0
        %1938 = vmatprep.subr.mxu0 0.0
        %1939 = vmatpush1.msra.mxu0 0.0
        %1940 = vmatprep.subr.mxu0 0.0
        %1941 = vmatpush1.msra.mxu0 0.0
        %1942 = vmatprep.subr.mxu0 0.0
        %1943 = vmatpush1.msra.mxu0 0.0
        %1944 = vmatprep.subr.mxu0 0.0
        %1945 = vmatpush1.msra.mxu0 0.0
        %1946 = vmatprep.subr.mxu0 0.0
        %1947 = vmatpush1.msra.mxu0 0.0
        %1948 = vmatprep.subr.mxu0 0.0
        %1949 = vmatpush1.msra.mxu0 0.0
        %1950 = vmatprep.subr.mxu0 0.0
        %1951 = vmatpush1.msra.mxu0 0.0
        %1952 = vmatprep.subr.mxu0 0.0
        %1953 = vmatpush1.msra.mxu0 0.0
        %1954 = vmatprep.subr.mxu0 0.0
        %1955 = vmatpush1.msra.mxu0 0.0
        %1956 = vmatprep.subr.mxu0 0.0
        %1957 = vmatpush1.msra.mxu0 0.0
        %1958 = vmatprep.subr.mxu0 0.0
        %1959 = vmatpush1.msra.mxu0 0.0
        %1960 = vmatprep.subr.mxu0 0.0
        %1961 = vmatpush1.msra.mxu0 0.0
        %1962 = vmatprep.subr.mxu0 0.0
        %1963 = vmatpush1.msra.mxu0 0.0
        %1964 = vmatprep.mubr.f32.mxu0 0.0
        %1965 = vmatmul.mubr.f32.gmra.mrb[0].mxu0 %v1895
        %v1966 = vpop.f32.mrb[0].mxu0
        %v1967 = vadd.f32 0.0, %v1966
        %v1968 = vpop.f32.mrb[0].mxu0
        %1969 = vmatprep.mubr.f32.mxu0 0.0
        %1970 = vmatmul.mubr.f32.gmra.mrb[0].mxu0 %v1898
        %v1971 = vpop.f32.mrb[0].mxu0
        %v1972 = vadd.f32 0.0, %v1971
        %v1973 = vpop.f32.mrb[0].mxu0
        %1974 = vdwg.mxu0
        %1975 = vrot.lane.b32.xlu0 %v408, 56
        %v1976 = vpop.permute.xlu0 %1975
        %1977 = vrot.lane.b32.xlu0 %v413, 56
        %v1978 = vpop.permute.xlu0 %1977
        %v1982 = vsel %vm825, %v1712, 0
        %v1985 = vsel %vm825, %v1713, 0
        %1987 = vmatprep.subr.mxu0 0.0
        %1988 = vmatpush1.msra.mxu0 %v1976
        %1989 = vmatprep.subr.mxu0 0.0
        %1990 = vmatpush1.msra.mxu0 %v1978
        %1991 = vmatprep.subr.mxu0 0.0
        %1992 = vmatpush1.msra.mxu0 0.0
        %1993 = vmatprep.subr.mxu0 0.0
        %1994 = vmatpush1.msra.mxu0 0.0
        %1995 = vmatprep.subr.mxu0 0.0
        %1996 = vmatpush1.msra.mxu0 0.0
        %1997 = vmatprep.subr.mxu0 0.0
        %1998 = vmatpush1.msra.mxu0 0.0
        %1999 = vmatprep.subr.mxu0 0.0
        %2000 = vmatpush1.msra.mxu0 0.0
        %2001 = vmatprep.subr.mxu0 0.0
        %2002 = vmatpush1.msra.mxu0 0.0
        %2003 = vmatprep.subr.mxu0 0.0
        %2004 = vmatpush1.msra.mxu0 0.0
        %2005 = vmatprep.subr.mxu0 0.0
        %2006 = vmatpush1.msra.mxu0 0.0
        %2007 = vmatprep.subr.mxu0 0.0
        %2008 = vmatpush1.msra.mxu0 0.0
        %2009 = vmatprep.subr.mxu0 0.0
        %2010 = vmatpush1.msra.mxu0 0.0
        %2011 = vmatprep.subr.mxu0 0.0
        %2012 = vmatpush1.msra.mxu0 0.0
        %2013 = vmatprep.subr.mxu0 0.0
        %2014 = vmatpush1.msra.mxu0 0.0
        %2015 = vmatprep.subr.mxu0 0.0
        %2016 = vmatpush1.msra.mxu0 0.0
        %2017 = vmatprep.subr.mxu0 0.0
        %2018 = vmatpush1.msra.mxu0 0.0
        %2019 = vmatprep.subr.mxu0 0.0
        %2020 = vmatpush1.msra.mxu0 0.0
        %2021 = vmatprep.subr.mxu0 0.0
        %2022 = vmatpush1.msra.mxu0 0.0
        %2023 = vmatprep.subr.mxu0 0.0
        %2024 = vmatpush1.msra.mxu0 0.0
        %2025 = vmatprep.subr.mxu0 0.0
        %2026 = vmatpush1.msra.mxu0 0.0
        %2027 = vmatprep.subr.mxu0 0.0
        %2028 = vmatpush1.msra.mxu0 0.0
        %2029 = vmatprep.subr.mxu0 0.0
        %2030 = vmatpush1.msra.mxu0 0.0
        %2031 = vmatprep.subr.mxu0 0.0
        %2032 = vmatpush1.msra.mxu0 0.0
        %2033 = vmatprep.subr.mxu0 0.0
        %2034 = vmatpush1.msra.mxu0 0.0
        %2035 = vmatprep.subr.mxu0 0.0
        %2036 = vmatpush1.msra.mxu0 0.0
        %2037 = vmatprep.subr.mxu0 0.0
        %2038 = vmatpush1.msra.mxu0 0.0
        %2039 = vmatprep.subr.mxu0 0.0
        %2040 = vmatpush1.msra.mxu0 0.0
        %2041 = vmatprep.subr.mxu0 0.0
        %2042 = vmatpush1.msra.mxu0 0.0
        %2043 = vmatprep.subr.mxu0 0.0
        %2044 = vmatpush1.msra.mxu0 0.0
        %2045 = vmatprep.subr.mxu0 0.0
        %2046 = vmatpush1.msra.mxu0 0.0
        %2047 = vmatprep.subr.mxu0 0.0
        %2048 = vmatpush1.msra.mxu0 0.0
        %2049 = vmatprep.subr.mxu0 0.0
        %2050 = vmatpush1.msra.mxu0 0.0
        %2051 = vmatprep.mubr.f32.mxu0 0.0
        %2052 = vmatmul.mubr.f32.gmra.mrb[0].mxu0 %v1982
        %v2053 = vpop.f32.mrb[0].mxu0
        %v2054 = vadd.f32 0.0, %v2053
        %v2055 = vpop.f32.mrb[0].mxu0
        %2056 = vmatprep.mubr.f32.mxu0 0.0
        %2057 = vmatmul.mubr.f32.gmra.mrb[0].mxu0 %v1985
        %v2058 = vpop.f32.mrb[0].mxu0
        %v2059 = vadd.f32 0.0, %v2058
        %v2060 = vpop.f32.mrb[0].mxu0
        %2061 = vdwg.mxu0
        %v2063 = vsel %vm466, %v1793, 0
        %v2066 = vsel %vm466, %v1798, 0
        %v2069 = vsel %vm466, %v1880, 0
        %v2072 = vsel %vm466, %v1885, 0
        %v2075 = vsel %vm466, %v1967, 0
        %v2078 = vsel %vm466, %v1972, 0
        %v2081 = vsel %vm466, %v2054, 0
        %v2084 = vsel %vm466, %v2059, 0
        %2086 = vmatprep.subr.mxu0 0.0
        %2087 = vmatpush1.msra.mxu0 %v449
        %2088 = vmatprep.subr.mxu0 0.0
        %2089 = vmatpush1.msra.mxu0 0.0
        %2090 = vmatprep.subr.mxu0 0.0
        %2091 = vmatpush1.msra.mxu0 0.0
        %2092 = vmatprep.subr.mxu0 0.0
        %2093 = vmatpush1.msra.mxu0 0.0
        %2094 = vmatprep.subr.mxu0 0.0
        %2095 = vmatpush1.msra.mxu0 0.0
        %2096 = vmatprep.subr.mxu0 0.0
        %2097 = vmatpush1.msra.mxu0 0.0
        %2098 = vmatprep.subr.mxu0 0.0
        %2099 = vmatpush1.msra.mxu0 0.0
        %2100 = vmatprep.subr.mxu0 0.0
        %2101 = vmatpush1.msra.mxu0 0.0
        %2102 = vmatprep.subr.mxu0 0.0
        %2103 = vmatpush1.msra.mxu0 0.0
        %2104 = vmatprep.subr.mxu0 0.0
        %2105 = vmatpush1.msra.mxu0 0.0
        %2106 = vmatprep.subr.mxu0 0.0
        %2107 = vmatpush1.msra.mxu0 0.0
        %2108 = vmatprep.subr.mxu0 0.0
        %2109 = vmatpush1.msra.mxu0 0.0
        %2110 = vmatprep.subr.mxu0 0.0
        %2111 = vmatpush1.msra.mxu0 0.0
        %2112 = vmatprep.subr.mxu0 0.0
        %2113 = vmatpush1.msra.mxu0 0.0
        %2114 = vmatprep.subr.mxu0 0.0
        %2115 = vmatpush1.msra.mxu0 0.0
        %2116 = vmatprep.subr.mxu0 0.0
        %2117 = vmatpush1.msra.mxu0 0.0
        %2118 = vmatprep.subr.mxu0 0.0
        %2119 = vmatpush1.msra.mxu0 0.0
        %2120 = vmatprep.subr.mxu0 0.0
        %2121 = vmatpush1.msra.mxu0 0.0
        %2122 = vmatprep.subr.mxu0 0.0
        %2123 = vmatpush1.msra.mxu0 0.0
        %2124 = vmatprep.subr.mxu0 0.0
        %2125 = vmatpush1.msra.mxu0 0.0
        %2126 = vmatprep.subr.mxu0 0.0
        %2127 = vmatpush1.msra.mxu0 0.0
        %2128 = vmatprep.subr.mxu0 0.0
        %2129 = vmatpush1.msra.mxu0 0.0
        %2130 = vmatprep.subr.mxu0 0.0
        %2131 = vmatpush1.msra.mxu0 0.0
        %2132 = vmatprep.subr.mxu0 0.0
        %2133 = vmatpush1.msra.mxu0 0.0
        %2134 = vmatprep.subr.mxu0 0.0
        %2135 = vmatpush1.msra.mxu0 0.0
        %2136 = vmatprep.subr.mxu0 0.0
        %2137 = vmatpush1.msra.mxu0 0.0
        %2138 = vmatprep.subr.mxu0 0.0
        %2139 = vmatpush1.msra.mxu0 0.0
        %2140 = vmatprep.subr.mxu0 0.0
        %2141 = vmatpush1.msra.mxu0 0.0
        %2142 = vmatprep.subr.mxu0 0.0
        %2143 = vmatpush1.msra.mxu0 0.0
        %2144 = vmatprep.subr.mxu0 0.0
        %2145 = vmatpush1.msra.mxu0 0.0
        %2146 = vmatprep.subr.mxu0 0.0
        %2147 = vmatpush1.msra.mxu0 0.0
        %2148 = vmatprep.subr.mxu0 0.0
        %2149 = vmatpush1.msra.mxu0 0.0
        %2150 = vmatprep.mubr.f32.mxu0 0.0
        %2151 = vmatmul.mubr.f32.gmra.mrb[0].mxu0 %v2063
        %v2152 = vpop.f32.mrb[0].mxu0
        %v2153 = vadd.f32 0.0, %v2152
        %v2154 = vpop.f32.mrb[0].mxu0
        %2155 = vmatprep.mubr.f32.mxu0 0.0
        %2156 = vmatmul.mubr.f32.gmra.mrb[0].mxu0 %v2066
        %v2157 = vpop.f32.mrb[0].mxu0
        %v2158 = vadd.f32 0.0, %v2157
        %v2159 = vpop.f32.mrb[0].mxu0
        %2160 = vmatprep.mubr.f32.mxu0 0.0
        %2161 = vmatmul.mubr.f32.gmra.mrb[0].mxu0 %v2069
        %v2162 = vpop.f32.mrb[0].mxu0
        %v2163 = vadd.f32 0.0, %v2162
        %v2164 = vpop.f32.mrb[0].mxu0
        %2165 = vmatprep.mubr.f32.mxu0 0.0
        %2166 = vmatmul.mubr.f32.gmra.mrb[0].mxu0 %v2072
        %v2167 = vpop.f32.mrb[0].mxu0
        %v2168 = vadd.f32 0.0, %v2167
        %v2169 = vpop.f32.mrb[0].mxu0
        %2170 = vmatprep.mubr.f32.mxu0 0.0
        %2171 = vmatmul.mubr.f32.gmra.mrb[0].mxu0 %v2075
        %v2172 = vpop.f32.mrb[0].mxu0
        %v2173 = vadd.f32 0.0, %v2172
        %v2174 = vpop.f32.mrb[0].mxu0
        %2175 = vmatprep.mubr.f32.mxu0 0.0
        %2176 = vmatmul.mubr.f32.gmra.mrb[0].mxu0 %v2078
        %v2177 = vpop.f32.mrb[0].mxu0
        %v2178 = vadd.f32 0.0, %v2177
        %v2179 = vpop.f32.mrb[0].mxu0
        %2180 = vmatprep.mubr.f32.mxu0 0.0
        %2181 = vmatmul.mubr.f32.gmra.mrb[0].mxu0 %v2081
        %v2182 = vpop.f32.mrb[0].mxu0
        %v2183 = vadd.f32 0.0, %v2182
        %v2184 = vpop.f32.mrb[0].mxu0
        %2185 = vmatprep.mubr.f32.mxu0 0.0
        %2186 = vmatmul.mubr.f32.gmra.mrb[0].mxu0 %v2084
        %v2187 = vpop.f32.mrb[0].mxu0
        %v2188 = vadd.f32 0.0, %v2187
        %v2189 = vpop.f32.mrb[0].mxu0
        %2190 = vdwg.mxu0
        %v2192 = vsel %vm466, %v993, 0
        %v2195 = vsel %vm466, %v998, 0
        %v2198 = vsel %vm466, %v1080, 0
        %v2201 = vsel %vm466, %v1085, 0
        %v2204 = vsel %vm466, %v1167, 0
        %v2207 = vsel %vm466, %v1172, 0
        %v2210 = vsel %vm466, %v1254, 0
        %v2213 = vsel %vm466, %v1259, 0
        %2215 = vmatprep.subr.mxu0 0.0
        %2216 = vmatpush1.msra.mxu0 %v448
        %2217 = vmatprep.subr.mxu0 0.0
        %2218 = vmatpush1.msra.mxu0 0.0
        %2219 = vmatprep.subr.mxu0 0.0
        %2220 = vmatpush1.msra.mxu0 0.0
        %2221 = vmatprep.subr.mxu0 0.0
        %2222 = vmatpush1.msra.mxu0 0.0
        %2223 = vmatprep.subr.mxu0 0.0
        %2224 = vmatpush1.msra.mxu0 0.0
        %2225 = vmatprep.subr.mxu0 0.0
        %2226 = vmatpush1.msra.mxu0 0.0
        %2227 = vmatprep.subr.mxu0 0.0
        %2228 = vmatpush1.msra.mxu0 0.0
        %2229 = vmatprep.subr.mxu0 0.0
        %2230 = vmatpush1.msra.mxu0 0.0
        %2231 = vmatprep.subr.mxu0 0.0
        %2232 = vmatpush1.msra.mxu0 0.0
        %2233 = vmatprep.subr.mxu0 0.0
        %2234 = vmatpush1.msra.mxu0 0.0
        %2235 = vmatprep.subr.mxu0 0.0
        %2236 = vmatpush1.msra.mxu0 0.0
        %2237 = vmatprep.subr.mxu0 0.0
        %2238 = vmatpush1.msra.mxu0 0.0
        %2239 = vmatprep.subr.mxu0 0.0
        %2240 = vmatpush1.msra.mxu0 0.0
        %2241 = vmatprep.subr.mxu0 0.0
        %2242 = vmatpush1.msra.mxu0 0.0
        %2243 = vmatprep.subr.mxu0 0.0
        %2244 = vmatpush1.msra.mxu0 0.0
        %2245 = vmatprep.subr.mxu0 0.0
        %2246 = vmatpush1.msra.mxu0 0.0
        %2247 = vmatprep.subr.mxu0 0.0
        %2248 = vmatpush1.msra.mxu0 0.0
        %2249 = vmatprep.subr.mxu0 0.0
        %2250 = vmatpush1.msra.mxu0 0.0
        %2251 = vmatprep.subr.mxu0 0.0
        %2252 = vmatpush1.msra.mxu0 0.0
        %2253 = vmatprep.subr.mxu0 0.0
        %2254 = vmatpush1.msra.mxu0 0.0
        %2255 = vmatprep.subr.mxu0 0.0
        %2256 = vmatpush1.msra.mxu0 0.0
        %2257 = vmatprep.subr.mxu0 0.0
        %2258 = vmatpush1.msra.mxu0 0.0
        %2259 = vmatprep.subr.mxu0 0.0
        %2260 = vmatpush1.msra.mxu0 0.0
        %2261 = vmatprep.subr.mxu0 0.0
        %2262 = vmatpush1.msra.mxu0 0.0
        %2263 = vmatprep.subr.mxu0 0.0
        %2264 = vmatpush1.msra.mxu0 0.0
        %2265 = vmatprep.subr.mxu0 0.0
        %2266 = vmatpush1.msra.mxu0 0.0
        %2267 = vmatprep.subr.mxu0 0.0
        %2268 = vmatpush1.msra.mxu0 0.0
        %2269 = vmatprep.subr.mxu0 0.0
        %2270 = vmatpush1.msra.mxu0 0.0
        %2271 = vmatprep.subr.mxu0 0.0
        %2272 = vmatpush1.msra.mxu0 0.0
        %2273 = vmatprep.subr.mxu0 0.0
        %2274 = vmatpush1.msra.mxu0 0.0
        %2275 = vmatprep.subr.mxu0 0.0
        %2276 = vmatpush1.msra.mxu0 0.0
        %2277 = vmatprep.subr.mxu0 0.0
        %2278 = vmatpush1.msra.mxu0 0.0
        %2279 = vmatprep.mubr.f32.mxu0 0.0
        %2280 = vmatmul.mubr.f32.gmra.mrb[0].mxu0 %v2192
        %v2281 = vpop.f32.mrb[0].mxu0
        %v2282 = vadd.f32 %v2153, %v2281
        %v2283 = vpop.f32.mrb[0].mxu0
        %2284 = vmatprep.mubr.f32.mxu0 0.0
        %2285 = vmatmul.mubr.f32.gmra.mrb[0].mxu0 %v2195
        %v2286 = vpop.f32.mrb[0].mxu0
        %v2287 = vadd.f32 %v2158, %v2286
        %v2288 = vpop.f32.mrb[0].mxu0
        %2289 = vmatprep.mubr.f32.mxu0 0.0
        %2290 = vmatmul.mubr.f32.gmra.mrb[0].mxu0 %v2198
        %v2291 = vpop.f32.mrb[0].mxu0
        %v2292 = vadd.f32 %v2163, %v2291
        %v2293 = vpop.f32.mrb[0].mxu0
        %2294 = vmatprep.mubr.f32.mxu0 0.0
        %2295 = vmatmul.mubr.f32.gmra.mrb[0].mxu0 %v2201
        %v2296 = vpop.f32.mrb[0].mxu0
        %v2297 = vadd.f32 %v2168, %v2296
        %v2298 = vpop.f32.mrb[0].mxu0
        %2299 = vmatprep.mubr.f32.mxu0 0.0
        %2300 = vmatmul.mubr.f32.gmra.mrb[0].mxu0 %v2204
        %v2301 = vpop.f32.mrb[0].mxu0
        %v2302 = vadd.f32 %v2173, %v2301
        %v2303 = vpop.f32.mrb[0].mxu0
        %2304 = vmatprep.mubr.f32.mxu0 0.0
        %2305 = vmatmul.mubr.f32.gmra.mrb[0].mxu0 %v2207
        %v2306 = vpop.f32.mrb[0].mxu0
        %v2307 = vadd.f32 %v2178, %v2306
        %v2308 = vpop.f32.mrb[0].mxu0
        %2309 = vmatprep.mubr.f32.mxu0 0.0
        %2310 = vmatmul.mubr.f32.gmra.mrb[0].mxu0 %v2210
        %v2311 = vpop.f32.mrb[0].mxu0
        %v2312 = vadd.f32 %v2183, %v2311
        %v2313 = vpop.f32.mrb[0].mxu0
        %2314 = vmatprep.mubr.f32.mxu0 0.0
        %2315 = vmatmul.mubr.f32.gmra.mrb[0].mxu0 %v2213
        %v2316 = vpop.f32.mrb[0].mxu0
        %v2317 = vadd.f32 %v2188, %v2316
        %v2318 = vpop.f32.mrb[0].mxu0
        %2319 = vdwg.mxu0
        %2320 = vrot.lane.b32.xlu0 %v452, 112
        %v2321 = vpop.permute.xlu0 %2320
        %2322 = vrot.lane.b32.xlu0 %v453, 112
        %v2323 = vpop.permute.xlu0 %2322
        %2324 = vrot.lane.b32.xlu0 %v378, 80
        %v2325 = vpop.permute.xlu0 %2324
        %2326 = vrot.lane.b32.xlu0 %v383, 80
        %v2327 = vpop.permute.xlu0 %2326
        %v2328 = vsel %vm466, %v2321, 0
        %v2330 = vsel %vm466, %v2323, 0
        %v2332 = vsel %vm466, %v2325, 0
        %v2334 = vsel %vm466, %v2327, 0
        %2336 = vmatprep.subr.mxu0 0.0
        %2337 = vmatpush1.xpose.msra.mxu0 %v2332
        %2338 = vmatprep.subr.mxu0 0.0
        %2339 = vmatpush1.xpose.msra.mxu0 %v2334
        %2340 = vmatprep.subr.mxu0 0.0
        %2341 = vmatpush1.xpose.msra.mxu0 0.0
        %2342 = vmatprep.subr.mxu0 0.0
        %2343 = vmatpush1.xpose.msra.mxu0 0.0
        %2344 = vmatprep.subr.mxu0 0.0
        %2345 = vmatpush1.xpose.msra.mxu0 0.0
        %2346 = vmatprep.subr.mxu0 0.0
        %2347 = vmatpush1.xpose.msra.mxu0 0.0
        %2348 = vmatprep.subr.mxu0 0.0
        %2349 = vmatpush1.xpose.msra.mxu0 0.0
        %2350 = vmatprep.subr.mxu0 0.0
        %2351 = vmatpush1.xpose.msra.mxu0 0.0
        %2352 = vmatprep.subr.mxu0 0.0
        %2353 = vmatpush1.xpose.msra.mxu0 0.0
        %2354 = vmatprep.subr.mxu0 0.0
        %2355 = vmatpush1.xpose.msra.mxu0 0.0
        %2356 = vmatprep.subr.mxu0 0.0
        %2357 = vmatpush1.xpose.msra.mxu0 0.0
        %2358 = vmatprep.subr.mxu0 0.0
        %2359 = vmatpush1.xpose.msra.mxu0 0.0
        %2360 = vmatprep.subr.mxu0 0.0
        %2361 = vmatpush1.xpose.msra.mxu0 0.0
        %2362 = vmatprep.subr.mxu0 0.0
        %2363 = vmatpush1.xpose.msra.mxu0 0.0
        %2364 = vmatprep.subr.mxu0 0.0
        %2365 = vmatpush1.xpose.msra.mxu0 0.0
        %2366 = vmatprep.subr.mxu0 0.0
        %2367 = vmatpush1.xpose.msra.mxu0 0.0
        %2368 = vmatprep.subr.mxu0 0.0
        %2369 = vmatpush1.xpose.msra.mxu0 0.0
        %2370 = vmatprep.subr.mxu0 0.0
        %2371 = vmatpush1.xpose.msra.mxu0 0.0
        %2372 = vmatprep.subr.mxu0 0.0
        %2373 = vmatpush1.xpose.msra.mxu0 0.0
        %2374 = vmatprep.subr.mxu0 0.0
        %2375 = vmatpush1.xpose.msra.mxu0 0.0
        %2376 = vmatprep.subr.mxu0 0.0
        %2377 = vmatpush1.xpose.msra.mxu0 0.0
        %2378 = vmatprep.subr.mxu0 0.0
        %2379 = vmatpush1.xpose.msra.mxu0 0.0
        %2380 = vmatprep.subr.mxu0 0.0
        %2381 = vmatpush1.xpose.msra.mxu0 0.0
        %2382 = vmatprep.subr.mxu0 0.0
        %2383 = vmatpush1.xpose.msra.mxu0 0.0
        %2384 = vmatprep.subr.mxu0 0.0
        %2385 = vmatpush1.xpose.msra.mxu0 0.0
        %2386 = vmatprep.subr.mxu0 0.0
        %2387 = vmatpush1.xpose.msra.mxu0 0.0
        %2388 = vmatprep.subr.mxu0 0.0
        %2389 = vmatpush1.xpose.msra.mxu0 0.0
        %2390 = vmatprep.subr.mxu0 0.0
        %2391 = vmatpush1.xpose.msra.mxu0 0.0
        %2392 = vmatprep.subr.mxu0 0.0
        %2393 = vmatpush1.xpose.msra.mxu0 0.0
        %2394 = vmatprep.subr.mxu0 0.0
        %2395 = vmatpush1.xpose.msra.mxu0 0.0
        %2396 = vmatprep.subr.mxu0 0.0
        %2397 = vmatpush1.xpose.msra.mxu0 0.0
        %2398 = vmatprep.subr.mxu0 0.0
        %2399 = vmatpush1.xpose.msra.mxu0 0.0
        %2400 = vmatprep.mubr.f32.mxu0 0.0
        %2401 = vmatmul.mubr.f32.gmra.mrb[0].mxu0 %v2328
        %v2402 = vpop.f32.mrb[0].mxu0
        %v2403 = vadd.f32 %v420, %v2402
        %v2404 = vpop.f32.mrb[0].mxu0
        %2405 = vmatprep.mubr.f32.mxu0 0.0
        %2406 = vmatmul.mubr.f32.gmra.mrb[0].mxu0 %v2330
        %v2407 = vpop.f32.mrb[0].mxu0
        %v2408 = vadd.f32 %v421, %v2407
        %v2409 = vpop.f32.mrb[0].mxu0
        %2410 = vdwg.mxu0
        %2411 = vrot.lane.b32.xlu0 %v454, 112
        %v2412 = vpop.permute.xlu0 %2411
        %2413 = vrot.lane.b32.xlu0 %v455, 112
        %v2414 = vpop.permute.xlu0 %2413
        %2415 = vrot.lane.b32.xlu0 %v388, 80
        %v2416 = vpop.permute.xlu0 %2415
        %2417 = vrot.lane.b32.xlu0 %v393, 80
        %v2418 = vpop.permute.xlu0 %2417
        %v2419 = vsel %vm466, %v2412, 0
        %v2421 = vsel %vm466, %v2414, 0
        %v2423 = vsel %vm466, %v2416, 0
        %v2425 = vsel %vm466, %v2418, 0
        %2427 = vmatprep.subr.mxu0 0.0
        %2428 = vmatpush1.xpose.msra.mxu0 %v2423
        %2429 = vmatprep.subr.mxu0 0.0
        %2430 = vmatpush1.xpose.msra.mxu0 %v2425
        %2431 = vmatprep.subr.mxu0 0.0
        %2432 = vmatpush1.xpose.msra.mxu0 0.0
        %2433 = vmatprep.subr.mxu0 0.0
        %2434 = vmatpush1.xpose.msra.mxu0 0.0
        %2435 = vmatprep.subr.mxu0 0.0
        %2436 = vmatpush1.xpose.msra.mxu0 0.0
        %2437 = vmatprep.subr.mxu0 0.0
        %2438 = vmatpush1.xpose.msra.mxu0 0.0
        %2439 = vmatprep.subr.mxu0 0.0
        %2440 = vmatpush1.xpose.msra.mxu0 0.0
        %2441 = vmatprep.subr.mxu0 0.0
        %2442 = vmatpush1.xpose.msra.mxu0 0.0
        %2443 = vmatprep.subr.mxu0 0.0
        %2444 = vmatpush1.xpose.msra.mxu0 0.0
        %2445 = vmatprep.subr.mxu0 0.0
        %2446 = vmatpush1.xpose.msra.mxu0 0.0
        %2447 = vmatprep.subr.mxu0 0.0
        %2448 = vmatpush1.xpose.msra.mxu0 0.0
        %2449 = vmatprep.subr.mxu0 0.0
        %2450 = vmatpush1.xpose.msra.mxu0 0.0
        %2451 = vmatprep.subr.mxu0 0.0
        %2452 = vmatpush1.xpose.msra.mxu0 0.0
        %2453 = vmatprep.subr.mxu0 0.0
        %2454 = vmatpush1.xpose.msra.mxu0 0.0
        %2455 = vmatprep.subr.mxu0 0.0
        %2456 = vmatpush1.xpose.msra.mxu0 0.0
        %2457 = vmatprep.subr.mxu0 0.0
        %2458 = vmatpush1.xpose.msra.mxu0 0.0
        %2459 = vmatprep.subr.mxu0 0.0
        %2460 = vmatpush1.xpose.msra.mxu0 0.0
        %2461 = vmatprep.subr.mxu0 0.0
        %2462 = vmatpush1.xpose.msra.mxu0 0.0
        %2463 = vmatprep.subr.mxu0 0.0
        %2464 = vmatpush1.xpose.msra.mxu0 0.0
        %2465 = vmatprep.subr.mxu0 0.0
        %2466 = vmatpush1.xpose.msra.mxu0 0.0
        %2467 = vmatprep.subr.mxu0 0.0
        %2468 = vmatpush1.xpose.msra.mxu0 0.0
        %2469 = vmatprep.subr.mxu0 0.0
        %2470 = vmatpush1.xpose.msra.mxu0 0.0
        %2471 = vmatprep.subr.mxu0 0.0
        %2472 = vmatpush1.xpose.msra.mxu0 0.0
        %2473 = vmatprep.subr.mxu0 0.0
        %2474 = vmatpush1.xpose.msra.mxu0 0.0
        %2475 = vmatprep.subr.mxu0 0.0
        %2476 = vmatpush1.xpose.msra.mxu0 0.0
        %2477 = vmatprep.subr.mxu0 0.0
        %2478 = vmatpush1.xpose.msra.mxu0 0.0
        %2479 = vmatprep.subr.mxu0 0.0
        %2480 = vmatpush1.xpose.msra.mxu0 0.0
        %2481 = vmatprep.subr.mxu0 0.0
        %2482 = vmatpush1.xpose.msra.mxu0 0.0
        %2483 = vmatprep.subr.mxu0 0.0
        %2484 = vmatpush1.xpose.msra.mxu0 0.0
        %2485 = vmatprep.subr.mxu0 0.0
        %2486 = vmatpush1.xpose.msra.mxu0 0.0
        %2487 = vmatprep.subr.mxu0 0.0
        %2488 = vmatpush1.xpose.msra.mxu0 0.0
        %2489 = vmatprep.subr.mxu0 0.0
        %2490 = vmatpush1.xpose.msra.mxu0 0.0
        %2491 = vmatprep.mubr.f32.mxu0 0.0
        %2492 = vmatmul.mubr.f32.gmra.mrb[0].mxu0 %v2419
        %v2493 = vpop.f32.mrb[0].mxu0
        %v2494 = vadd.f32 %v428, %v2493
        %v2495 = vpop.f32.mrb[0].mxu0
        %2496 = vmatprep.mubr.f32.mxu0 0.0
        %2497 = vmatmul.mubr.f32.gmra.mrb[0].mxu0 %v2421
        %v2498 = vpop.f32.mrb[0].mxu0
        %v2499 = vadd.f32 %v429, %v2498
        %v2500 = vpop.f32.mrb[0].mxu0
        %2501 = vdwg.mxu0
        %2502 = vrot.lane.b32.xlu0 %v456, 112
        %v2503 = vpop.permute.xlu0 %2502
        %2504 = vrot.lane.b32.xlu0 %v457, 112
        %v2505 = vpop.permute.xlu0 %2504
        %2506 = vrot.lane.b32.xlu0 %v398, 80
        %v2507 = vpop.permute.xlu0 %2506
        %2508 = vrot.lane.b32.xlu0 %v403, 80
        %v2509 = vpop.permute.xlu0 %2508
        %v2510 = vsel %vm466, %v2503, 0
        %v2512 = vsel %vm466, %v2505, 0
        %v2514 = vsel %vm466, %v2507, 0
        %v2516 = vsel %vm466, %v2509, 0
        %2518 = vmatprep.subr.mxu0 0.0
        %2519 = vmatpush1.xpose.msra.mxu0 %v2514
        %2520 = vmatprep.subr.mxu0 0.0
        %2521 = vmatpush1.xpose.msra.mxu0 %v2516
        %2522 = vmatprep.subr.mxu0 0.0
        %2523 = vmatpush1.xpose.msra.mxu0 0.0
        %2524 = vmatprep.subr.mxu0 0.0
        %2525 = vmatpush1.xpose.msra.mxu0 0.0
        %2526 = vmatprep.subr.mxu0 0.0
        %2527 = vmatpush1.xpose.msra.mxu0 0.0
        %2528 = vmatprep.subr.mxu0 0.0
        %2529 = vmatpush1.xpose.msra.mxu0 0.0
        %2530 = vmatprep.subr.mxu0 0.0
        %2531 = vmatpush1.xpose.msra.mxu0 0.0
        %2532 = vmatprep.subr.mxu0 0.0
        %2533 = vmatpush1.xpose.msra.mxu0 0.0
        %2534 = vmatprep.subr.mxu0 0.0
        %2535 = vmatpush1.xpose.msra.mxu0 0.0
        %2536 = vmatprep.subr.mxu0 0.0
        %2537 = vmatpush1.xpose.msra.mxu0 0.0
        %2538 = vmatprep.subr.mxu0 0.0
        %2539 = vmatpush1.xpose.msra.mxu0 0.0
        %2540 = vmatprep.subr.mxu0 0.0
        %2541 = vmatpush1.xpose.msra.mxu0 0.0
        %2542 = vmatprep.subr.mxu0 0.0
        %2543 = vmatpush1.xpose.msra.mxu0 0.0
        %2544 = vmatprep.subr.mxu0 0.0
        %2545 = vmatpush1.xpose.msra.mxu0 0.0
        %2546 = vmatprep.subr.mxu0 0.0
        %2547 = vmatpush1.xpose.msra.mxu0 0.0
        %2548 = vmatprep.subr.mxu0 0.0
        %2549 = vmatpush1.xpose.msra.mxu0 0.0
        %2550 = vmatprep.subr.mxu0 0.0
        %2551 = vmatpush1.xpose.msra.mxu0 0.0
        %2552 = vmatprep.subr.mxu0 0.0
        %2553 = vmatpush1.xpose.msra.mxu0 0.0
        %2554 = vmatprep.subr.mxu0 0.0
        %2555 = vmatpush1.xpose.msra.mxu0 0.0
        %2556 = vmatprep.subr.mxu0 0.0
        %2557 = vmatpush1.xpose.msra.mxu0 0.0
        %2558 = vmatprep.subr.mxu0 0.0
        %2559 = vmatpush1.xpose.msra.mxu0 0.0
        %2560 = vmatprep.subr.mxu0 0.0
        %2561 = vmatpush1.xpose.msra.mxu0 0.0
        %2562 = vmatprep.subr.mxu0 0.0
        %2563 = vmatpush1.xpose.msra.mxu0 0.0
        %2564 = vmatprep.subr.mxu0 0.0
        %2565 = vmatpush1.xpose.msra.mxu0 0.0
        %2566 = vmatprep.subr.mxu0 0.0
        %2567 = vmatpush1.xpose.msra.mxu0 0.0
        %2568 = vmatprep.subr.mxu0 0.0
        %2569 = vmatpush1.xpose.msra.mxu0 0.0
        %2570 = vmatprep.subr.mxu0 0.0
        %2571 = vmatpush1.xpose.msra.mxu0 0.0
        %2572 = vmatprep.subr.mxu0 0.0
        %2573 = vmatpush1.xpose.msra.mxu0 0.0
        %2574 = vmatprep.subr.mxu0 0.0
        %2575 = vmatpush1.xpose.msra.mxu0 0.0
        %2576 = vmatprep.subr.mxu0 0.0
        %2577 = vmatpush1.xpose.msra.mxu0 0.0
        %2578 = vmatprep.subr.mxu0 0.0
        %2579 = vmatpush1.xpose.msra.mxu0 0.0
        %2580 = vmatprep.subr.mxu0 0.0
        %2581 = vmatpush1.xpose.msra.mxu0 0.0
        %2582 = vmatprep.mubr.f32.mxu0 0.0
        %2583 = vmatmul.mubr.f32.gmra.mrb[0].mxu0 %v2510
        %v2584 = vpop.f32.mrb[0].mxu0
        %v2585 = vadd.f32 %v436, %v2584
        %v2586 = vpop.f32.mrb[0].mxu0
        %2587 = vmatprep.mubr.f32.mxu0 0.0
        %2588 = vmatmul.mubr.f32.gmra.mrb[0].mxu0 %v2512
        %v2589 = vpop.f32.mrb[0].mxu0
        %v2590 = vadd.f32 %v437, %v2589
        %v2591 = vpop.f32.mrb[0].mxu0
        %2592 = vdwg.mxu0
        %2593 = vrot.lane.b32.xlu0 %v458, 112
        %v2594 = vpop.permute.xlu0 %2593
        %2595 = vrot.lane.b32.xlu0 %v459, 112
        %v2596 = vpop.permute.xlu0 %2595
        %2597 = vrot.lane.b32.xlu0 %v408, 80
        %v2598 = vpop.permute.xlu0 %2597
        %2599 = vrot.lane.b32.xlu0 %v413, 80
        %v2600 = vpop.permute.xlu0 %2599
        %v2601 = vsel %vm466, %v2594, 0
        %v2603 = vsel %vm466, %v2596, 0
        %v2605 = vsel %vm466, %v2598, 0
        %v2607 = vsel %vm466, %v2600, 0
        %2609 = vmatprep.subr.mxu0 0.0
        %2610 = vmatpush1.xpose.msra.mxu0 %v2605
        %2611 = vmatprep.subr.mxu0 0.0
        %2612 = vmatpush1.xpose.msra.mxu0 %v2607
        %2613 = vmatprep.subr.mxu0 0.0
        %2614 = vmatpush1.xpose.msra.mxu0 0.0
        %2615 = vmatprep.subr.mxu0 0.0
        %2616 = vmatpush1.xpose.msra.mxu0 0.0
        %2617 = vmatprep.subr.mxu0 0.0
        %2618 = vmatpush1.xpose.msra.mxu0 0.0
        %2619 = vmatprep.subr.mxu0 0.0
        %2620 = vmatpush1.xpose.msra.mxu0 0.0
        %2621 = vmatprep.subr.mxu0 0.0
        %2622 = vmatpush1.xpose.msra.mxu0 0.0
        %2623 = vmatprep.subr.mxu0 0.0
        %2624 = vmatpush1.xpose.msra.mxu0 0.0
        %2625 = vmatprep.subr.mxu0 0.0
        %2626 = vmatpush1.xpose.msra.mxu0 0.0
        %2627 = vmatprep.subr.mxu0 0.0
        %2628 = vmatpush1.xpose.msra.mxu0 0.0
        %2629 = vmatprep.subr.mxu0 0.0
        %2630 = vmatpush1.xpose.msra.mxu0 0.0
        %2631 = vmatprep.subr.mxu0 0.0
        %2632 = vmatpush1.xpose.msra.mxu0 0.0
        %2633 = vmatprep.subr.mxu0 0.0
        %2634 = vmatpush1.xpose.msra.mxu0 0.0
        %2635 = vmatprep.subr.mxu0 0.0
        %2636 = vmatpush1.xpose.msra.mxu0 0.0
        %2637 = vmatprep.subr.mxu0 0.0
        %2638 = vmatpush1.xpose.msra.mxu0 0.0
        %2639 = vmatprep.subr.mxu0 0.0
        %2640 = vmatpush1.xpose.msra.mxu0 0.0
        %2641 = vmatprep.subr.mxu0 0.0
        %2642 = vmatpush1.xpose.msra.mxu0 0.0
        %2643 = vmatprep.subr.mxu0 0.0
        %2644 = vmatpush1.xpose.msra.mxu0 0.0
        %2645 = vmatprep.subr.mxu0 0.0
        %2646 = vmatpush1.xpose.msra.mxu0 0.0
        %2647 = vmatprep.subr.mxu0 0.0
        %2648 = vmatpush1.xpose.msra.mxu0 0.0
        %2649 = vmatprep.subr.mxu0 0.0
        %2650 = vmatpush1.xpose.msra.mxu0 0.0
        %2651 = vmatprep.subr.mxu0 0.0
        %2652 = vmatpush1.xpose.msra.mxu0 0.0
        %2653 = vmatprep.subr.mxu0 0.0
        %2654 = vmatpush1.xpose.msra.mxu0 0.0
        %2655 = vmatprep.subr.mxu0 0.0
        %2656 = vmatpush1.xpose.msra.mxu0 0.0
        %2657 = vmatprep.subr.mxu0 0.0
        %2658 = vmatpush1.xpose.msra.mxu0 0.0
        %2659 = vmatprep.subr.mxu0 0.0
        %2660 = vmatpush1.xpose.msra.mxu0 0.0
        %2661 = vmatprep.subr.mxu0 0.0
        %2662 = vmatpush1.xpose.msra.mxu0 0.0
        %2663 = vmatprep.subr.mxu0 0.0
        %2664 = vmatpush1.xpose.msra.mxu0 0.0
        %2665 = vmatprep.subr.mxu0 0.0
        %2666 = vmatpush1.xpose.msra.mxu0 0.0
        %2667 = vmatprep.subr.mxu0 0.0
        %2668 = vmatpush1.xpose.msra.mxu0 0.0
        %2669 = vmatprep.subr.mxu0 0.0
        %2670 = vmatpush1.xpose.msra.mxu0 0.0
        %2671 = vmatprep.subr.mxu0 0.0
        %2672 = vmatpush1.xpose.msra.mxu0 0.0
        %2673 = vmatprep.mubr.f32.mxu0 0.0
        %2674 = vmatmul.mubr.f32.gmra.mrb[0].mxu0 %v2601
        %v2675 = vpop.f32.mrb[0].mxu0
        %v2676 = vadd.f32 %v444, %v2675
        %v2677 = vpop.f32.mrb[0].mxu0
        %2678 = vmatprep.mubr.f32.mxu0 0.0
        %2679 = vmatmul.mubr.f32.gmra.mrb[0].mxu0 %v2603
        %v2680 = vpop.f32.mrb[0].mxu0
        %v2681 = vadd.f32 %v445, %v2680
        %v2682 = vpop.f32.mrb[0].mxu0
        %2683 = vdwg.mxu0
        %v2684 = vsel %vm825, %v2403, -inf
        %2685 = vmax.xlane.f32.xlu0 %v2684
        %v2686 = vpop.xlane.xlu0 %2685
        %v2687 = vsel %vm825, %v2408, -inf
        %2688 = vmax.xlane.f32.xlu0 %v2687
        %v2689 = vpop.xlane.xlu0 %2688
        %v2690 = vsel %vm825, %v2494, -inf
        %2691 = vmax.xlane.f32.xlu0 %v2690
        %v2692 = vpop.xlane.xlu0 %2691
        %v2693 = vsel %vm825, %v2499, -inf
        %2694 = vmax.xlane.f32.xlu0 %v2693
        %v2695 = vpop.xlane.xlu0 %2694
        %v2696 = vsel %vm825, %v2585, -inf
        %2697 = vmax.xlane.f32.xlu0 %v2696
        %v2698 = vpop.xlane.xlu0 %2697
        %v2699 = vsel %vm825, %v2590, -inf
        %2700 = vmax.xlane.f32.xlu0 %v2699
        %v2701 = vpop.xlane.xlu0 %2700
        %v2702 = vsel %vm825, %v2676, -inf
        %2703 = vmax.xlane.f32.xlu0 %v2702
        %v2704 = vpop.xlane.xlu0 %2703
        %v2705 = vsel %vm825, %v2681, -inf
        %2706 = vmax.xlane.f32.xlu0 %v2705
        %v2707 = vpop.xlane.xlu0 %2706
        %v2708 = vsub.f32 %v2403, %v2686
        %v2709 = vsub.f32 %v2408, %v2689
        %v2710 = vsub.f32 %v2494, %v2692
        %v2711 = vsub.f32 %v2499, %v2695
        %v2712 = vsub.f32 %v2585, %v2698
        %v2713 = vsub.f32 %v2590, %v2701
        %v2714 = vsub.f32 %v2676, %v2704
        %v2715 = vsub.f32 %v2681, %v2707
        %v2716 = vmul.f32 %v2708, 1.442695
        %v2717 = vpow.pop %v2716
        %v2718 = vmul.f32 %v2709, 1.442695
        %v2719 = vpow.pop %v2718
        %v2720 = vmul.f32 %v2710, 1.442695
        %v2721 = vpow.pop %v2720
        %v2722 = vmul.f32 %v2711, 1.442695
        %v2723 = vpow.pop %v2722
        %v2724 = vmul.f32 %v2712, 1.442695
        %v2725 = vpow.pop %v2724
        %v2726 = vmul.f32 %v2713, 1.442695
        %v2727 = vpow.pop %v2726
        %v2728 = vmul.f32 %v2714, 1.442695
        %v2729 = vpow.pop %v2728
        %v2730 = vmul.f32 %v2715, 1.442695
        %v2731 = vpow.pop %v2730
        %v2732 = vsel %vm825, %v2717, 0.0
        %2733 = vadd.xlane.f32.xlu0 %v2732
        %v2734 = vpop.xlane.xlu0 %2733
        %v2735 = vsel %vm825, %v2719, 0.0
        %2736 = vadd.xlane.f32.xlu0 %v2735
        %v2737 = vpop.xlane.xlu0 %2736
        %v2738 = vsel %vm825, %v2721, 0.0
        %2739 = vadd.xlane.f32.xlu0 %v2738
        %v2740 = vpop.xlane.xlu0 %2739
        %v2741 = vsel %vm825, %v2723, 0.0
        %2742 = vadd.xlane.f32.xlu0 %v2741
        %v2743 = vpop.xlane.xlu0 %2742
        %v2744 = vsel %vm825, %v2725, 0.0
        %2745 = vadd.xlane.f32.xlu0 %v2744
        %v2746 = vpop.xlane.xlu0 %2745
        %v2747 = vsel %vm825, %v2727, 0.0
        %2748 = vadd.xlane.f32.xlu0 %v2747
        %v2749 = vpop.xlane.xlu0 %2748
        %v2750 = vsel %vm825, %v2729, 0.0
        %2751 = vadd.xlane.f32.xlu0 %v2750
        %v2752 = vpop.xlane.xlu0 %2751
        %v2753 = vsel %vm825, %v2731, 0.0
        %2754 = vadd.xlane.f32.xlu0 %v2753
        %v2755 = vpop.xlane.xlu0 %2754
        %v2756 = vrcp.pop %v2734
        %v2757 = vrcp.pop %v2737
        %v2758 = vrcp.pop %v2740
        %v2759 = vrcp.pop %v2743
        %v2760 = vrcp.pop %v2746
        %v2761 = vrcp.pop %v2749
        %v2762 = vrcp.pop %v2752
        %v2763 = vrcp.pop %v2755
        %v2764 = vmul.f32 %v2717, %v2756
        %v2765 = vmul.f32 %v2719, %v2757
        %v2766 = vmul.f32 %v2721, %v2758
        %v2767 = vmul.f32 %v2723, %v2759
        %v2768 = vmul.f32 %v2725, %v2760
        %v2769 = vmul.f32 %v2727, %v2761
        %v2770 = vmul.f32 %v2729, %v2762
        %v2771 = vmul.f32 %v2731, %v2763
        %2772 = vrot.lane.b32.xlu0 %v378, 48
        %v2773 = vpop.permute.xlu0 %2772
        %2774 = vrot.lane.b32.xlu0 %v383, 48
        %v2775 = vpop.permute.xlu0 %2774
        %v2779 = vsel %vm825, %v2764, 0
        %v2782 = vsel %vm825, %v2765, 0
        %2784 = vmatprep.subr.mxu0 0.0
        %2785 = vmatpush1.msra.mxu0 %v2773
        %2786 = vmatprep.subr.mxu0 0.0
        %2787 = vmatpush1.msra.mxu0 %v2775
        %2788 = vmatprep.subr.mxu0 0.0
        %2789 = vmatpush1.msra.mxu0 0.0
        %2790 = vmatprep.subr.mxu0 0.0
        %2791 = vmatpush1.msra.mxu0 0.0
        %2792 = vmatprep.subr.mxu0 0.0
        %2793 = vmatpush1.msra.mxu0 0.0
        %2794 = vmatprep.subr.mxu0 0.0
        %2795 = vmatpush1.msra.mxu0 0.0
        %2796 = vmatprep.subr.mxu0 0.0
        %2797 = vmatpush1.msra.mxu0 0.0
        %2798 = vmatprep.subr.mxu0 0.0
        %2799 = vmatpush1.msra.mxu0 0.0
        %2800 = vmatprep.subr.mxu0 0.0
        %2801 = vmatpush1.msra.mxu0 0.0
        %2802 = vmatprep.subr.mxu0 0.0
        %2803 = vmatpush1.msra.mxu0 0.0
        %2804 = vmatprep.subr.mxu0 0.0
        %2805 = vmatpush1.msra.mxu0 0.0
        %2806 = vmatprep.subr.mxu0 0.0
        %2807 = vmatpush1.msra.mxu0 0.0
        %2808 = vmatprep.subr.mxu0 0.0
        %2809 = vmatpush1.msra.mxu0 0.0
        %2810 = vmatprep.subr.mxu0 0.0
        %2811 = vmatpush1.msra.mxu0 0.0
        %2812 = vmatprep.subr.mxu0 0.0
        %2813 = vmatpush1.msra.mxu0 0.0
        %2814 = vmatprep.subr.mxu0 0.0
        %2815 = vmatpush1.msra.mxu0 0.0
        %2816 = vmatprep.subr.mxu0 0.0
        %2817 = vmatpush1.msra.mxu0 0.0
        %2818 = vmatprep.subr.mxu0 0.0
        %2819 = vmatpush1.msra.mxu0 0.0
        %2820 = vmatprep.subr.mxu0 0.0
        %2821 = vmatpush1.msra.mxu0 0.0
        %2822 = vmatprep.subr.mxu0 0.0
        %2823 = vmatpush1.msra.mxu0 0.0
        %2824 = vmatprep.subr.mxu0 0.0
        %2825 = vmatpush1.msra.mxu0 0.0
        %2826 = vmatprep.subr.mxu0 0.0
        %2827 = vmatpush1.msra.mxu0 0.0
        %2828 = vmatprep.subr.mxu0 0.0
        %2829 = vmatpush1.msra.mxu0 0.0
        %2830 = vmatprep.subr.mxu0 0.0
        %2831 = vmatpush1.msra.mxu0 0.0
        %2832 = vmatprep.subr.mxu0 0.0
        %2833 = vmatpush1.msra.mxu0 0.0
        %2834 = vmatprep.subr.mxu0 0.0
        %2835 = vmatpush1.msra.mxu0 0.0
        %2836 = vmatprep.subr.mxu0 0.0
        %2837 = vmatpush1.msra.mxu0 0.0
        %2838 = vmatprep.subr.mxu0 0.0
        %2839 = vmatpush1.msra.mxu0 0.0
        %2840 = vmatprep.subr.mxu0 0.0
        %2841 = vmatpush1.msra.mxu0 0.0
        %2842 = vmatprep.subr.mxu0 0.0
        %2843 = vmatpush1.msra.mxu0 0.0
        %2844 = vmatprep.subr.mxu0 0.0
        %2845 = vmatpush1.msra.mxu0 0.0
        %2846 = vmatprep.subr.mxu0 0.0
        %2847 = vmatpush1.msra.mxu0 0.0
        %2848 = vmatprep.mubr.f32.mxu0 0.0
        %2849 = vmatmul.mubr.f32.gmra.mrb[0].mxu0 %v2779
        %v2850 = vpop.f32.mrb[0].mxu0
        %v2851 = vadd.f32 0.0, %v2850
        %v2852 = vpop.f32.mrb[0].mxu0
        %2853 = vmatprep.mubr.f32.mxu0 0.0
        %2854 = vmatmul.mubr.f32.gmra.mrb[0].mxu0 %v2782
        %v2855 = vpop.f32.mrb[0].mxu0
        %v2856 = vadd.f32 0.0, %v2855
        %v2857 = vpop.f32.mrb[0].mxu0
        %2858 = vdwg.mxu0
        %2859 = vrot.lane.b32.xlu0 %v388, 48
        %v2860 = vpop.permute.xlu0 %2859
        %2861 = vrot.lane.b32.xlu0 %v393, 48
        %v2862 = vpop.permute.xlu0 %2861
        %v2866 = vsel %vm825, %v2766, 0
        %v2869 = vsel %vm825, %v2767, 0
        %2871 = vmatprep.subr.mxu0 0.0
        %2872 = vmatpush1.msra.mxu0 %v2860
        %2873 = vmatprep.subr.mxu0 0.0
        %2874 = vmatpush1.msra.mxu0 %v2862
        %2875 = vmatprep.subr.mxu0 0.0
        %2876 = vmatpush1.msra.mxu0 0.0
        %2877 = vmatprep.subr.mxu0 0.0
        %2878 = vmatpush1.msra.mxu0 0.0
        %2879 = vmatprep.subr.mxu0 0.0
        %2880 = vmatpush1.msra.mxu0 0.0
        %2881 = vmatprep.subr.mxu0 0.0
        %2882 = vmatpush1.msra.mxu0 0.0
        %2883 = vmatprep.subr.mxu0 0.0
        %2884 = vmatpush1.msra.mxu0 0.0
        %2885 = vmatprep.subr.mxu0 0.0
        %2886 = vmatpush1.msra.mxu0 0.0
        %2887 = vmatprep.subr.mxu0 0.0
        %2888 = vmatpush1.msra.mxu0 0.0
        %2889 = vmatprep.subr.mxu0 0.0
        %2890 = vmatpush1.msra.mxu0 0.0
        %2891 = vmatprep.subr.mxu0 0.0
        %2892 = vmatpush1.msra.mxu0 0.0
        %2893 = vmatprep.subr.mxu0 0.0
        %2894 = vmatpush1.msra.mxu0 0.0
        %2895 = vmatprep.subr.mxu0 0.0
        %2896 = vmatpush1.msra.mxu0 0.0
        %2897 = vmatprep.subr.mxu0 0.0
        %2898 = vmatpush1.msra.mxu0 0.0
        %2899 = vmatprep.subr.mxu0 0.0
        %2900 = vmatpush1.msra.mxu0 0.0
        %2901 = vmatprep.subr.mxu0 0.0
        %2902 = vmatpush1.msra.mxu0 0.0
        %2903 = vmatprep.subr.mxu0 0.0
        %2904 = vmatpush1.msra.mxu0 0.0
        %2905 = vmatprep.subr.mxu0 0.0
        %2906 = vmatpush1.msra.mxu0 0.0
        %2907 = vmatprep.subr.mxu0 0.0
        %2908 = vmatpush1.msra.mxu0 0.0
        %2909 = vmatprep.subr.mxu0 0.0
        %2910 = vmatpush1.msra.mxu0 0.0
        %2911 = vmatprep.subr.mxu0 0.0
        %2912 = vmatpush1.msra.mxu0 0.0
        %2913 = vmatprep.subr.mxu0 0.0
        %2914 = vmatpush1.msra.mxu0 0.0
        %2915 = vmatprep.subr.mxu0 0.0
        %2916 = vmatpush1.msra.mxu0 0.0
        %2917 = vmatprep.subr.mxu0 0.0
        %2918 = vmatpush1.msra.mxu0 0.0
        %2919 = vmatprep.subr.mxu0 0.0
        %2920 = vmatpush1.msra.mxu0 0.0
        %2921 = vmatprep.subr.mxu0 0.0
        %2922 = vmatpush1.msra.mxu0 0.0
        %2923 = vmatprep.subr.mxu0 0.0
        %2924 = vmatpush1.msra.mxu0 0.0
        %2925 = vmatprep.subr.mxu0 0.0
        %2926 = vmatpush1.msra.mxu0 0.0
        %2927 = vmatprep.subr.mxu0 0.0
        %2928 = vmatpush1.msra.mxu0 0.0
        %2929 = vmatprep.subr.mxu0 0.0
        %2930 = vmatpush1.msra.mxu0 0.0
        %2931 = vmatprep.subr.mxu0 0.0
        %2932 = vmatpush1.msra.mxu0 0.0
        %2933 = vmatprep.subr.mxu0 0.0
        %2934 = vmatpush1.msra.mxu0 0.0
        %2935 = vmatprep.mubr.f32.mxu0 0.0
        %2936 = vmatmul.mubr.f32.gmra.mrb[0].mxu0 %v2866
        %v2937 = vpop.f32.mrb[0].mxu0
        %v2938 = vadd.f32 0.0, %v2937
        %v2939 = vpop.f32.mrb[0].mxu0
        %2940 = vmatprep.mubr.f32.mxu0 0.0
        %2941 = vmatmul.mubr.f32.gmra.mrb[0].mxu0 %v2869
        %v2942 = vpop.f32.mrb[0].mxu0
        %v2943 = vadd.f32 0.0, %v2942
        %v2944 = vpop.f32.mrb[0].mxu0
        %2945 = vdwg.mxu0
        %2946 = vrot.lane.b32.xlu0 %v398, 48
        %v2947 = vpop.permute.xlu0 %2946
        %2948 = vrot.lane.b32.xlu0 %v403, 48
        %v2949 = vpop.permute.xlu0 %2948
        %v2953 = vsel %vm825, %v2768, 0
        %v2956 = vsel %vm825, %v2769, 0
        %2958 = vmatprep.subr.mxu0 0.0
        %2959 = vmatpush1.msra.mxu0 %v2947
        %2960 = vmatprep.subr.mxu0 0.0
        %2961 = vmatpush1.msra.mxu0 %v2949
        %2962 = vmatprep.subr.mxu0 0.0
        %2963 = vmatpush1.msra.mxu0 0.0
        %2964 = vmatprep.subr.mxu0 0.0
        %2965 = vmatpush1.msra.mxu0 0.0
        %2966 = vmatprep.subr.mxu0 0.0
        %2967 = vmatpush1.msra.mxu0 0.0
        %2968 = vmatprep.subr.mxu0 0.0
        %2969 = vmatpush1.msra.mxu0 0.0
        %2970 = vmatprep.subr.mxu0 0.0
        %2971 = vmatpush1.msra.mxu0 0.0
        %2972 = vmatprep.subr.mxu0 0.0
        %2973 = vmatpush1.msra.mxu0 0.0
        %2974 = vmatprep.subr.mxu0 0.0
        %2975 = vmatpush1.msra.mxu0 0.0
        %2976 = vmatprep.subr.mxu0 0.0
        %2977 = vmatpush1.msra.mxu0 0.0
        %2978 = vmatprep.subr.mxu0 0.0
        %2979 = vmatpush1.msra.mxu0 0.0
        %2980 = vmatprep.subr.mxu0 0.0
        %2981 = vmatpush1.msra.mxu0 0.0
        %2982 = vmatprep.subr.mxu0 0.0
        %2983 = vmatpush1.msra.mxu0 0.0
        %2984 = vmatprep.subr.mxu0 0.0
        %2985 = vmatpush1.msra.mxu0 0.0
        %2986 = vmatprep.subr.mxu0 0.0
        %2987 = vmatpush1.msra.mxu0 0.0
        %2988 = vmatprep.subr.mxu0 0.0
        %2989 = vmatpush1.msra.mxu0 0.0
        %2990 = vmatprep.subr.mxu0 0.0
        %2991 = vmatpush1.msra.mxu0 0.0
        %2992 = vmatprep.subr.mxu0 0.0
        %2993 = vmatpush1.msra.mxu0 0.0
        %2994 = vmatprep.subr.mxu0 0.0
        %2995 = vmatpush1.msra.mxu0 0.0
        %2996 = vmatprep.subr.mxu0 0.0
        %2997 = vmatpush1.msra.mxu0 0.0
        %2998 = vmatprep.subr.mxu0 0.0
        %2999 = vmatpush1.msra.mxu0 0.0
        %3000 = vmatprep.subr.mxu0 0.0
        %3001 = vmatpush1.msra.mxu0 0.0
        %3002 = vmatprep.subr.mxu0 0.0
        %3003 = vmatpush1.msra.mxu0 0.0
        %3004 = vmatprep.subr.mxu0 0.0
        %3005 = vmatpush1.msra.mxu0 0.0
        %3006 = vmatprep.subr.mxu0 0.0
        %3007 = vmatpush1.msra.mxu0 0.0
        %3008 = vmatprep.subr.mxu0 0.0
        %3009 = vmatpush1.msra.mxu0 0.0
        %3010 = vmatprep.subr.mxu0 0.0
        %3011 = vmatpush1.msra.mxu0 0.0
        %3012 = vmatprep.subr.mxu0 0.0
        %3013 = vmatpush1.msra.mxu0 0.0
        %3014 = vmatprep.subr.mxu0 0.0
        %3015 = vmatpush1.msra.mxu0 0.0
        %3016 = vmatprep.subr.mxu0 0.0
        %3017 = vmatpush1.msra.mxu0 0.0
        %3018 = vmatprep.subr.mxu0 0.0
        %3019 = vmatpush1.msra.mxu0 0.0
        %3020 = vmatprep.subr.mxu0 0.0
        %3021 = vmatpush1.msra.mxu0 0.0
        %3022 = vmatprep.mubr.f32.mxu0 0.0
        %3023 = vmatmul.mubr.f32.gmra.mrb[0].mxu0 %v2953
        %v3024 = vpop.f32.mrb[0].mxu0
        %v3025 = vadd.f32 0.0, %v3024
        %v3026 = vpop.f32.mrb[0].mxu0
        %3027 = vmatprep.mubr.f32.mxu0 0.0
        %3028 = vmatmul.mubr.f32.gmra.mrb[0].mxu0 %v2956
        %v3029 = vpop.f32.mrb[0].mxu0
        %v3030 = vadd.f32 0.0, %v3029
        %v3031 = vpop.f32.mrb[0].mxu0
        %3032 = vdwg.mxu0
        %3033 = vrot.lane.b32.xlu0 %v408, 48
        %v3034 = vpop.permute.xlu0 %3033
        %3035 = vrot.lane.b32.xlu0 %v413, 48
        %v3036 = vpop.permute.xlu0 %3035
        %v3040 = vsel %vm825, %v2770, 0
        %v3043 = vsel %vm825, %v2771, 0
        %3045 = vmatprep.subr.mxu0 0.0
        %3046 = vmatpush1.msra.mxu0 %v3034
        %3047 = vmatprep.subr.mxu0 0.0
        %3048 = vmatpush1.msra.mxu0 %v3036
        %3049 = vmatprep.subr.mxu0 0.0
        %3050 = vmatpush1.msra.mxu0 0.0
        %3051 = vmatprep.subr.mxu0 0.0
        %3052 = vmatpush1.msra.mxu0 0.0
        %3053 = vmatprep.subr.mxu0 0.0
        %3054 = vmatpush1.msra.mxu0 0.0
        %3055 = vmatprep.subr.mxu0 0.0
        %3056 = vmatpush1.msra.mxu0 0.0
        %3057 = vmatprep.subr.mxu0 0.0
        %3058 = vmatpush1.msra.mxu0 0.0
        %3059 = vmatprep.subr.mxu0 0.0
        %3060 = vmatpush1.msra.mxu0 0.0
        %3061 = vmatprep.subr.mxu0 0.0
        %3062 = vmatpush1.msra.mxu0 0.0
        %3063 = vmatprep.subr.mxu0 0.0
        %3064 = vmatpush1.msra.mxu0 0.0
        %3065 = vmatprep.subr.mxu0 0.0
        %3066 = vmatpush1.msra.mxu0 0.0
        %3067 = vmatprep.subr.mxu0 0.0
        %3068 = vmatpush1.msra.mxu0 0.0
        %3069 = vmatprep.subr.mxu0 0.0
        %3070 = vmatpush1.msra.mxu0 0.0
        %3071 = vmatprep.subr.mxu0 0.0
        %3072 = vmatpush1.msra.mxu0 0.0
        %3073 = vmatprep.subr.mxu0 0.0
        %3074 = vmatpush1.msra.mxu0 0.0
        %3075 = vmatprep.subr.mxu0 0.0
        %3076 = vmatpush1.msra.mxu0 0.0
        %3077 = vmatprep.subr.mxu0 0.0
        %3078 = vmatpush1.msra.mxu0 0.0
        %3079 = vmatprep.subr.mxu0 0.0
        %3080 = vmatpush1.msra.mxu0 0.0
        %3081 = vmatprep.subr.mxu0 0.0
        %3082 = vmatpush1.msra.mxu0 0.0
        %3083 = vmatprep.subr.mxu0 0.0
        %3084 = vmatpush1.msra.mxu0 0.0
        %3085 = vmatprep.subr.mxu0 0.0
        %3086 = vmatpush1.msra.mxu0 0.0
        %3087 = vmatprep.subr.mxu0 0.0
        %3088 = vmatpush1.msra.mxu0 0.0
        %3089 = vmatprep.subr.mxu0 0.0
        %3090 = vmatpush1.msra.mxu0 0.0
        %3091 = vmatprep.subr.mxu0 0.0
        %3092 = vmatpush1.msra.mxu0 0.0
        %3093 = vmatprep.subr.mxu0 0.0
        %3094 = vmatpush1.msra.mxu0 0.0
        %3095 = vmatprep.subr.mxu0 0.0
        %3096 = vmatpush1.msra.mxu0 0.0
        %3097 = vmatprep.subr.mxu0 0.0
        %3098 = vmatpush1.msra.mxu0 0.0
        %3099 = vmatprep.subr.mxu0 0.0
        %3100 = vmatpush1.msra.mxu0 0.0
        %3101 = vmatprep.subr.mxu0 0.0
        %3102 = vmatpush1.msra.mxu0 0.0
        %3103 = vmatprep.subr.mxu0 0.0
        %3104 = vmatpush1.msra.mxu0 0.0
        %3105 = vmatprep.subr.mxu0 0.0
        %3106 = vmatpush1.msra.mxu0 0.0
        %3107 = vmatprep.subr.mxu0 0.0
        %3108 = vmatpush1.msra.mxu0 0.0
        %3109 = vmatprep.mubr.f32.mxu0 0.0
        %3110 = vmatmul.mubr.f32.gmra.mrb[0].mxu0 %v3040
        %v3111 = vpop.f32.mrb[0].mxu0
        %v3112 = vadd.f32 0.0, %v3111
        %v3113 = vpop.f32.mrb[0].mxu0
        %3114 = vmatprep.mubr.f32.mxu0 0.0
        %3115 = vmatmul.mubr.f32.gmra.mrb[0].mxu0 %v3043
        %v3116 = vpop.f32.mrb[0].mxu0
        %v3117 = vadd.f32 0.0, %v3116
        %v3118 = vpop.f32.mrb[0].mxu0
        %3119 = vdwg.mxu0
        %v3121 = vsel %vm466, %v2851, 0
        %v3124 = vsel %vm466, %v2856, 0
        %v3127 = vsel %vm466, %v2938, 0
        %v3130 = vsel %vm466, %v2943, 0
        %v3133 = vsel %vm466, %v3025, 0
        %v3136 = vsel %vm466, %v3030, 0
        %v3139 = vsel %vm466, %v3112, 0
        %v3142 = vsel %vm466, %v3117, 0
        %3144 = vmatprep.subr.mxu0 0.0
        %3145 = vmatpush1.msra.mxu0 %v450
        %3146 = vmatprep.subr.mxu0 0.0
        %3147 = vmatpush1.msra.mxu0 0.0
        %3148 = vmatprep.subr.mxu0 0.0
        %3149 = vmatpush1.msra.mxu0 0.0
        %3150 = vmatprep.subr.mxu0 0.0
        %3151 = vmatpush1.msra.mxu0 0.0
        %3152 = vmatprep.subr.mxu0 0.0
        %3153 = vmatpush1.msra.mxu0 0.0
        %3154 = vmatprep.subr.mxu0 0.0
        %3155 = vmatpush1.msra.mxu0 0.0
        %3156 = vmatprep.subr.mxu0 0.0
        %3157 = vmatpush1.msra.mxu0 0.0
        %3158 = vmatprep.subr.mxu0 0.0
        %3159 = vmatpush1.msra.mxu0 0.0
        %3160 = vmatprep.subr.mxu0 0.0
        %3161 = vmatpush1.msra.mxu0 0.0
        %3162 = vmatprep.subr.mxu0 0.0
        %3163 = vmatpush1.msra.mxu0 0.0
        %3164 = vmatprep.subr.mxu0 0.0
        %3165 = vmatpush1.msra.mxu0 0.0
        %3166 = vmatprep.subr.mxu0 0.0
        %3167 = vmatpush1.msra.mxu0 0.0
        %3168 = vmatprep.subr.mxu0 0.0
        %3169 = vmatpush1.msra.mxu0 0.0
        %3170 = vmatprep.subr.mxu0 0.0
        %3171 = vmatpush1.msra.mxu0 0.0
        %3172 = vmatprep.subr.mxu0 0.0
        %3173 = vmatpush1.msra.mxu0 0.0
        %3174 = vmatprep.subr.mxu0 0.0
        %3175 = vmatpush1.msra.mxu0 0.0
        %3176 = vmatprep.subr.mxu0 0.0
        %3177 = vmatpush1.msra.mxu0 0.0
        %3178 = vmatprep.subr.mxu0 0.0
        %3179 = vmatpush1.msra.mxu0 0.0
        %3180 = vmatprep.subr.mxu0 0.0
        %3181 = vmatpush1.msra.mxu0 0.0
        %3182 = vmatprep.subr.mxu0 0.0
        %3183 = vmatpush1.msra.mxu0 0.0
        %3184 = vmatprep.subr.mxu0 0.0
        %3185 = vmatpush1.msra.mxu0 0.0
        %3186 = vmatprep.subr.mxu0 0.0
        %3187 = vmatpush1.msra.mxu0 0.0
        %3188 = vmatprep.subr.mxu0 0.0
        %3189 = vmatpush1.msra.mxu0 0.0
        %3190 = vmatprep.subr.mxu0 0.0
        %3191 = vmatpush1.msra.mxu0 0.0
        %3192 = vmatprep.subr.mxu0 0.0
        %3193 = vmatpush1.msra.mxu0 0.0
        %3194 = vmatprep.subr.mxu0 0.0
        %3195 = vmatpush1.msra.mxu0 0.0
        %3196 = vmatprep.subr.mxu0 0.0
        %3197 = vmatpush1.msra.mxu0 0.0
        %3198 = vmatprep.subr.mxu0 0.0
        %3199 = vmatpush1.msra.mxu0 0.0
        %3200 = vmatprep.subr.mxu0 0.0
        %3201 = vmatpush1.msra.mxu0 0.0
        %3202 = vmatprep.subr.mxu0 0.0
        %3203 = vmatpush1.msra.mxu0 0.0
        %3204 = vmatprep.subr.mxu0 0.0
        %3205 = vmatpush1.msra.mxu0 0.0
        %3206 = vmatprep.subr.mxu0 0.0
        %3207 = vmatpush1.msra.mxu0 0.0
        %3208 = vmatprep.mubr.f32.mxu0 0.0
        %3209 = vmatmul.mubr.f32.gmra.mrb[0].mxu0 %v3121
        %v3210 = vpop.f32.mrb[0].mxu0
        %v3211 = vadd.f32 0.0, %v3210
        %v3212 = vpop.f32.mrb[0].mxu0
        %3213 = vmatprep.mubr.f32.mxu0 0.0
        %3214 = vmatmul.mubr.f32.gmra.mrb[0].mxu0 %v3124
        %v3215 = vpop.f32.mrb[0].mxu0
        %v3216 = vadd.f32 0.0, %v3215
        %v3217 = vpop.f32.mrb[0].mxu0
        %3218 = vmatprep.mubr.f32.mxu0 0.0
        %3219 = vmatmul.mubr.f32.gmra.mrb[0].mxu0 %v3127
        %v3220 = vpop.f32.mrb[0].mxu0
        %v3221 = vadd.f32 0.0, %v3220
        %v3222 = vpop.f32.mrb[0].mxu0
        %3223 = vmatprep.mubr.f32.mxu0 0.0
        %3224 = vmatmul.mubr.f32.gmra.mrb[0].mxu0 %v3130
        %v3225 = vpop.f32.mrb[0].mxu0
        %v3226 = vadd.f32 0.0, %v3225
        %v3227 = vpop.f32.mrb[0].mxu0
        %3228 = vmatprep.mubr.f32.mxu0 0.0
        %3229 = vmatmul.mubr.f32.gmra.mrb[0].mxu0 %v3133
        %v3230 = vpop.f32.mrb[0].mxu0
        %v3231 = vadd.f32 0.0, %v3230
        %v3232 = vpop.f32.mrb[0].mxu0
        %3233 = vmatprep.mubr.f32.mxu0 0.0
        %3234 = vmatmul.mubr.f32.gmra.mrb[0].mxu0 %v3136
        %v3235 = vpop.f32.mrb[0].mxu0
        %v3236 = vadd.f32 0.0, %v3235
        %v3237 = vpop.f32.mrb[0].mxu0
        %3238 = vmatprep.mubr.f32.mxu0 0.0
        %3239 = vmatmul.mubr.f32.gmra.mrb[0].mxu0 %v3139
        %v3240 = vpop.f32.mrb[0].mxu0
        %v3241 = vadd.f32 0.0, %v3240
        %v3242 = vpop.f32.mrb[0].mxu0
        %3243 = vmatprep.mubr.f32.mxu0 0.0
        %3244 = vmatmul.mubr.f32.gmra.mrb[0].mxu0 %v3142
        %v3245 = vpop.f32.mrb[0].mxu0
        %v3246 = vadd.f32 0.0, %v3245
        %v3247 = vpop.f32.mrb[0].mxu0
        %3248 = vdwg.mxu0
        %v3249 = vadd.f32 %v2282, %v3211
        %v3250 = vadd.f32 %v2287, %v3216
        %v3251 = vadd.f32 %v2292, %v3221
        %v3252 = vadd.f32 %v2297, %v3226
        %v3253 = vadd.f32 %v2302, %v3231
        %v3254 = vadd.f32 %v2307, %v3236
        %v3255 = vadd.f32 %v2312, %v3241
        %v3256 = vadd.f32 %v2317, %v3246
        %3257 = vrot.lane.b32.xlu0 %v452, 104
        %v3258 = vpop.permute.xlu0 %3257
        %3259 = vrot.lane.b32.xlu0 %v453, 104
        %v3260 = vpop.permute.xlu0 %3259
        %3261 = vrot.lane.b32.xlu0 %v378, 72
        %v3262 = vpop.permute.xlu0 %3261
        %3263 = vrot.lane.b32.xlu0 %v383, 72
        %v3264 = vpop.permute.xlu0 %3263
        %v3265 = vsel %vm466, %v3258, 0
        %v3267 = vsel %vm466, %v3260, 0
        %v3269 = vsel %vm466, %v3262, 0
        %v3271 = vsel %vm466, %v3264, 0
        %3273 = vmatprep.subr.mxu0 0.0
        %3274 = vmatpush1.xpose.msra.mxu0 %v3269
        %3275 = vmatprep.subr.mxu0 0.0
        %3276 = vmatpush1.xpose.msra.mxu0 %v3271
        %3277 = vmatprep.subr.mxu0 0.0
        %3278 = vmatpush1.xpose.msra.mxu0 0.0
        %3279 = vmatprep.subr.mxu0 0.0
        %3280 = vmatpush1.xpose.msra.mxu0 0.0
        %3281 = vmatprep.subr.mxu0 0.0
        %3282 = vmatpush1.xpose.msra.mxu0 0.0
        %3283 = vmatprep.subr.mxu0 0.0
        %3284 = vmatpush1.xpose.msra.mxu0 0.0
        %3285 = vmatprep.subr.mxu0 0.0
        %3286 = vmatpush1.xpose.msra.mxu0 0.0
        %3287 = vmatprep.subr.mxu0 0.0
        %3288 = vmatpush1.xpose.msra.mxu0 0.0
        %3289 = vmatprep.subr.mxu0 0.0
        %3290 = vmatpush1.xpose.msra.mxu0 0.0
        %3291 = vmatprep.subr.mxu0 0.0
        %3292 = vmatpush1.xpose.msra.mxu0 0.0
        %3293 = vmatprep.subr.mxu0 0.0
        %3294 = vmatpush1.xpose.msra.mxu0 0.0
        %3295 = vmatprep.subr.mxu0 0.0
        %3296 = vmatpush1.xpose.msra.mxu0 0.0
        %3297 = vmatprep.subr.mxu0 0.0
        %3298 = vmatpush1.xpose.msra.mxu0 0.0
        %3299 = vmatprep.subr.mxu0 0.0
        %3300 = vmatpush1.xpose.msra.mxu0 0.0
        %3301 = vmatprep.subr.mxu0 0.0
        %3302 = vmatpush1.xpose.msra.mxu0 0.0
        %3303 = vmatprep.subr.mxu0 0.0
        %3304 = vmatpush1.xpose.msra.mxu0 0.0
        %3305 = vmatprep.subr.mxu0 0.0
        %3306 = vmatpush1.xpose.msra.mxu0 0.0
        %3307 = vmatprep.subr.mxu0 0.0
        %3308 = vmatpush1.xpose.msra.mxu0 0.0
        %3309 = vmatprep.subr.mxu0 0.0
        %3310 = vmatpush1.xpose.msra.mxu0 0.0
        %3311 = vmatprep.subr.mxu0 0.0
        %3312 = vmatpush1.xpose.msra.mxu0 0.0
        %3313 = vmatprep.subr.mxu0 0.0
        %3314 = vmatpush1.xpose.msra.mxu0 0.0
        %3315 = vmatprep.subr.mxu0 0.0
        %3316 = vmatpush1.xpose.msra.mxu0 0.0
        %3317 = vmatprep.subr.mxu0 0.0
        %3318 = vmatpush1.xpose.msra.mxu0 0.0
        %3319 = vmatprep.subr.mxu0 0.0
        %3320 = vmatpush1.xpose.msra.mxu0 0.0
        %3321 = vmatprep.subr.mxu0 0.0
        %3322 = vmatpush1.xpose.msra.mxu0 0.0
        %3323 = vmatprep.subr.mxu0 0.0
        %3324 = vmatpush1.xpose.msra.mxu0 0.0
        %3325 = vmatprep.subr.mxu0 0.0
        %3326 = vmatpush1.xpose.msra.mxu0 0.0
        %3327 = vmatprep.subr.mxu0 0.0
        %3328 = vmatpush1.xpose.msra.mxu0 0.0
        %3329 = vmatprep.subr.mxu0 0.0
        %3330 = vmatpush1.xpose.msra.mxu0 0.0
        %3331 = vmatprep.subr.mxu0 0.0
        %3332 = vmatpush1.xpose.msra.mxu0 0.0
        %3333 = vmatprep.subr.mxu0 0.0
        %3334 = vmatpush1.xpose.msra.mxu0 0.0
        %3335 = vmatprep.subr.mxu0 0.0
        %3336 = vmatpush1.xpose.msra.mxu0 0.0
        %3337 = vmatprep.mubr.f32.mxu0 0.0
        %3338 = vmatmul.mubr.f32.gmra.mrb[0].mxu0 %v3265
        %v3339 = vpop.f32.mrb[0].mxu0
        %v3340 = vadd.f32 %v422, %v3339
        %v3341 = vpop.f32.mrb[0].mxu0
        %3342 = vmatprep.mubr.f32.mxu0 0.0
        %3343 = vmatmul.mubr.f32.gmra.mrb[0].mxu0 %v3267
        %v3344 = vpop.f32.mrb[0].mxu0
        %v3345 = vadd.f32 %v423, %v3344
        %v3346 = vpop.f32.mrb[0].mxu0
        %3347 = vdwg.mxu0
        %3348 = vrot.lane.b32.xlu0 %v454, 104
        %v3349 = vpop.permute.xlu0 %3348
        %3350 = vrot.lane.b32.xlu0 %v455, 104
        %v3351 = vpop.permute.xlu0 %3350
        %3352 = vrot.lane.b32.xlu0 %v388, 72
        %v3353 = vpop.permute.xlu0 %3352
        %3354 = vrot.lane.b32.xlu0 %v393, 72
        %v3355 = vpop.permute.xlu0 %3354
        %v3356 = vsel %vm466, %v3349, 0
        %v3358 = vsel %vm466, %v3351, 0
        %v3360 = vsel %vm466, %v3353, 0
        %v3362 = vsel %vm466, %v3355, 0
        %3364 = vmatprep.subr.mxu0 0.0
        %3365 = vmatpush1.xpose.msra.mxu0 %v3360
        %3366 = vmatprep.subr.mxu0 0.0
        %3367 = vmatpush1.xpose.msra.mxu0 %v3362
        %3368 = vmatprep.subr.mxu0 0.0
        %3369 = vmatpush1.xpose.msra.mxu0 0.0
        %3370 = vmatprep.subr.mxu0 0.0
        %3371 = vmatpush1.xpose.msra.mxu0 0.0
        %3372 = vmatprep.subr.mxu0 0.0
        %3373 = vmatpush1.xpose.msra.mxu0 0.0
        %3374 = vmatprep.subr.mxu0 0.0
        %3375 = vmatpush1.xpose.msra.mxu0 0.0
        %3376 = vmatprep.subr.mxu0 0.0
        %3377 = vmatpush1.xpose.msra.mxu0 0.0
        %3378 = vmatprep.subr.mxu0 0.0
        %3379 = vmatpush1.xpose.msra.mxu0 0.0
        %3380 = vmatprep.subr.mxu0 0.0
        %3381 = vmatpush1.xpose.msra.mxu0 0.0
        %3382 = vmatprep.subr.mxu0 0.0
        %3383 = vmatpush1.xpose.msra.mxu0 0.0
        %3384 = vmatprep.subr.mxu0 0.0
        %3385 = vmatpush1.xpose.msra.mxu0 0.0
        %3386 = vmatprep.subr.mxu0 0.0
        %3387 = vmatpush1.xpose.msra.mxu0 0.0
        %3388 = vmatprep.subr.mxu0 0.0
        %3389 = vmatpush1.xpose.msra.mxu0 0.0
        %3390 = vmatprep.subr.mxu0 0.0
        %3391 = vmatpush1.xpose.msra.mxu0 0.0
        %3392 = vmatprep.subr.mxu0 0.0
        %3393 = vmatpush1.xpose.msra.mxu0 0.0
        %3394 = vmatprep.subr.mxu0 0.0
        %3395 = vmatpush1.xpose.msra.mxu0 0.0
        %3396 = vmatprep.subr.mxu0 0.0
        %3397 = vmatpush1.xpose.msra.mxu0 0.0
        %3398 = vmatprep.subr.mxu0 0.0
        %3399 = vmatpush1.xpose.msra.mxu0 0.0
        %3400 = vmatprep.subr.mxu0 0.0
        %3401 = vmatpush1.xpose.msra.mxu0 0.0
        %3402 = vmatprep.subr.mxu0 0.0
        %3403 = vmatpush1.xpose.msra.mxu0 0.0
        %3404 = vmatprep.subr.mxu0 0.0
        %3405 = vmatpush1.xpose.msra.mxu0 0.0
        %3406 = vmatprep.subr.mxu0 0.0
        %3407 = vmatpush1.xpose.msra.mxu0 0.0
        %3408 = vmatprep.subr.mxu0 0.0
        %3409 = vmatpush1.xpose.msra.mxu0 0.0
        %3410 = vmatprep.subr.mxu0 0.0
        %3411 = vmatpush1.xpose.msra.mxu0 0.0
        %3412 = vmatprep.subr.mxu0 0.0
        %3413 = vmatpush1.xpose.msra.mxu0 0.0
        %3414 = vmatprep.subr.mxu0 0.0
        %3415 = vmatpush1.xpose.msra.mxu0 0.0
        %3416 = vmatprep.subr.mxu0 0.0
        %3417 = vmatpush1.xpose.msra.mxu0 0.0
        %3418 = vmatprep.subr.mxu0 0.0
        %3419 = vmatpush1.xpose.msra.mxu0 0.0
        %3420 = vmatprep.subr.mxu0 0.0
        %3421 = vmatpush1.xpose.msra.mxu0 0.0
        %3422 = vmatprep.subr.mxu0 0.0
        %3423 = vmatpush1.xpose.msra.mxu0 0.0
        %3424 = vmatprep.subr.mxu0 0.0
        %3425 = vmatpush1.xpose.msra.mxu0 0.0
        %3426 = vmatprep.subr.mxu0 0.0
        %3427 = vmatpush1.xpose.msra.mxu0 0.0
        %3428 = vmatprep.mubr.f32.mxu0 0.0
        %3429 = vmatmul.mubr.f32.gmra.mrb[0].mxu0 %v3356
        %v3430 = vpop.f32.mrb[0].mxu0
        %v3431 = vadd.f32 %v430, %v3430
        %v3432 = vpop.f32.mrb[0].mxu0
        %3433 = vmatprep.mubr.f32.mxu0 0.0
        %3434 = vmatmul.mubr.f32.gmra.mrb[0].mxu0 %v3358
        %v3435 = vpop.f32.mrb[0].mxu0
        %v3436 = vadd.f32 %v431, %v3435
        %v3437 = vpop.f32.mrb[0].mxu0
        %3438 = vdwg.mxu0
        %3439 = vrot.lane.b32.xlu0 %v456, 104
        %v3440 = vpop.permute.xlu0 %3439
        %3441 = vrot.lane.b32.xlu0 %v457, 104
        %v3442 = vpop.permute.xlu0 %3441
        %3443 = vrot.lane.b32.xlu0 %v398, 72
        %v3444 = vpop.permute.xlu0 %3443
        %3445 = vrot.lane.b32.xlu0 %v403, 72
        %v3446 = vpop.permute.xlu0 %3445
        %v3447 = vsel %vm466, %v3440, 0
        %v3449 = vsel %vm466, %v3442, 0
        %v3451 = vsel %vm466, %v3444, 0
        %v3453 = vsel %vm466, %v3446, 0
        %3455 = vmatprep.subr.mxu0 0.0
        %3456 = vmatpush1.xpose.msra.mxu0 %v3451
        %3457 = vmatprep.subr.mxu0 0.0
        %3458 = vmatpush1.xpose.msra.mxu0 %v3453
        %3459 = vmatprep.subr.mxu0 0.0
        %3460 = vmatpush1.xpose.msra.mxu0 0.0
        %3461 = vmatprep.subr.mxu0 0.0
        %3462 = vmatpush1.xpose.msra.mxu0 0.0
        %3463 = vmatprep.subr.mxu0 0.0
        %3464 = vmatpush1.xpose.msra.mxu0 0.0
        %3465 = vmatprep.subr.mxu0 0.0
        %3466 = vmatpush1.xpose.msra.mxu0 0.0
        %3467 = vmatprep.subr.mxu0 0.0
        %3468 = vmatpush1.xpose.msra.mxu0 0.0
        %3469 = vmatprep.subr.mxu0 0.0
        %3470 = vmatpush1.xpose.msra.mxu0 0.0
        %3471 = vmatprep.subr.mxu0 0.0
        %3472 = vmatpush1.xpose.msra.mxu0 0.0
        %3473 = vmatprep.subr.mxu0 0.0
        %3474 = vmatpush1.xpose.msra.mxu0 0.0
        %3475 = vmatprep.subr.mxu0 0.0
        %3476 = vmatpush1.xpose.msra.mxu0 0.0
        %3477 = vmatprep.subr.mxu0 0.0
        %3478 = vmatpush1.xpose.msra.mxu0 0.0
        %3479 = vmatprep.subr.mxu0 0.0
        %3480 = vmatpush1.xpose.msra.mxu0 0.0
        %3481 = vmatprep.subr.mxu0 0.0
        %3482 = vmatpush1.xpose.msra.mxu0 0.0
        %3483 = vmatprep.subr.mxu0 0.0
        %3484 = vmatpush1.xpose.msra.mxu0 0.0
        %3485 = vmatprep.subr.mxu0 0.0
        %3486 = vmatpush1.xpose.msra.mxu0 0.0
        %3487 = vmatprep.subr.mxu0 0.0
        %3488 = vmatpush1.xpose.msra.mxu0 0.0
        %3489 = vmatprep.subr.mxu0 0.0
        %3490 = vmatpush1.xpose.msra.mxu0 0.0
        %3491 = vmatprep.subr.mxu0 0.0
        %3492 = vmatpush1.xpose.msra.mxu0 0.0
        %3493 = vmatprep.subr.mxu0 0.0
        %3494 = vmatpush1.xpose.msra.mxu0 0.0
        %3495 = vmatprep.subr.mxu0 0.0
        %3496 = vmatpush1.xpose.msra.mxu0 0.0
        %3497 = vmatprep.subr.mxu0 0.0
        %3498 = vmatpush1.xpose.msra.mxu0 0.0
        %3499 = vmatprep.subr.mxu0 0.0
        %3500 = vmatpush1.xpose.msra.mxu0 0.0
        %3501 = vmatprep.subr.mxu0 0.0
        %3502 = vmatpush1.xpose.msra.mxu0 0.0
        %3503 = vmatprep.subr.mxu0 0.0
        %3504 = vmatpush1.xpose.msra.mxu0 0.0
        %3505 = vmatprep.subr.mxu0 0.0
        %3506 = vmatpush1.xpose.msra.mxu0 0.0
        %3507 = vmatprep.subr.mxu0 0.0
        %3508 = vmatpush1.xpose.msra.mxu0 0.0
        %3509 = vmatprep.subr.mxu0 0.0
        %3510 = vmatpush1.xpose.msra.mxu0 0.0
        %3511 = vmatprep.subr.mxu0 0.0
        %3512 = vmatpush1.xpose.msra.mxu0 0.0
        %3513 = vmatprep.subr.mxu0 0.0
        %3514 = vmatpush1.xpose.msra.mxu0 0.0
        %3515 = vmatprep.subr.mxu0 0.0
        %3516 = vmatpush1.xpose.msra.mxu0 0.0
        %3517 = vmatprep.subr.mxu0 0.0
        %3518 = vmatpush1.xpose.msra.mxu0 0.0
        %3519 = vmatprep.mubr.f32.mxu0 0.0
        %3520 = vmatmul.mubr.f32.gmra.mrb[0].mxu0 %v3447
        %v3521 = vpop.f32.mrb[0].mxu0
        %v3522 = vadd.f32 %v438, %v3521
        %v3523 = vpop.f32.mrb[0].mxu0
        %3524 = vmatprep.mubr.f32.mxu0 0.0
        %3525 = vmatmul.mubr.f32.gmra.mrb[0].mxu0 %v3449
        %v3526 = vpop.f32.mrb[0].mxu0
        %v3527 = vadd.f32 %v439, %v3526
        %v3528 = vpop.f32.mrb[0].mxu0
        %3529 = vdwg.mxu0
        %3530 = vrot.lane.b32.xlu0 %v458, 104
        %v3531 = vpop.permute.xlu0 %3530
        %3532 = vrot.lane.b32.xlu0 %v459, 104
        %v3533 = vpop.permute.xlu0 %3532
        %3534 = vrot.lane.b32.xlu0 %v408, 72
        %v3535 = vpop.permute.xlu0 %3534
        %3536 = vrot.lane.b32.xlu0 %v413, 72
        %v3537 = vpop.permute.xlu0 %3536
        %v3538 = vsel %vm466, %v3531, 0
        %v3540 = vsel %vm466, %v3533, 0
        %v3542 = vsel %vm466, %v3535, 0
        %v3544 = vsel %vm466, %v3537, 0
        %3546 = vmatprep.subr.mxu0 0.0
        %3547 = vmatpush1.xpose.msra.mxu0 %v3542
        %3548 = vmatprep.subr.mxu0 0.0
        %3549 = vmatpush1.xpose.msra.mxu0 %v3544
        %3550 = vmatprep.subr.mxu0 0.0
        %3551 = vmatpush1.xpose.msra.mxu0 0.0
        %3552 = vmatprep.subr.mxu0 0.0
        %3553 = vmatpush1.xpose.msra.mxu0 0.0
        %3554 = vmatprep.subr.mxu0 0.0
        %3555 = vmatpush1.xpose.msra.mxu0 0.0
        %3556 = vmatprep.subr.mxu0 0.0
        %3557 = vmatpush1.xpose.msra.mxu0 0.0
        %3558 = vmatprep.subr.mxu0 0.0
        %3559 = vmatpush1.xpose.msra.mxu0 0.0
        %3560 = vmatprep.subr.mxu0 0.0
        %3561 = vmatpush1.xpose.msra.mxu0 0.0
        %3562 = vmatprep.subr.mxu0 0.0
        %3563 = vmatpush1.xpose.msra.mxu0 0.0
        %3564 = vmatprep.subr.mxu0 0.0
        %3565 = vmatpush1.xpose.msra.mxu0 0.0
        %3566 = vmatprep.subr.mxu0 0.0
        %3567 = vmatpush1.xpose.msra.mxu0 0.0
        %3568 = vmatprep.subr.mxu0 0.0
        %3569 = vmatpush1.xpose.msra.mxu0 0.0
        %3570 = vmatprep.subr.mxu0 0.0
        %3571 = vmatpush1.xpose.msra.mxu0 0.0
        %3572 = vmatprep.subr.mxu0 0.0
        %3573 = vmatpush1.xpose.msra.mxu0 0.0
        %3574 = vmatprep.subr.mxu0 0.0
        %3575 = vmatpush1.xpose.msra.mxu0 0.0
        %3576 = vmatprep.subr.mxu0 0.0
        %3577 = vmatpush1.xpose.msra.mxu0 0.0
        %3578 = vmatprep.subr.mxu0 0.0
        %3579 = vmatpush1.xpose.msra.mxu0 0.0
        %3580 = vmatprep.subr.mxu0 0.0
        %3581 = vmatpush1.xpose.msra.mxu0 0.0
        %3582 = vmatprep.subr.mxu0 0.0
        %3583 = vmatpush1.xpose.msra.mxu0 0.0
        %3584 = vmatprep.subr.mxu0 0.0
        %3585 = vmatpush1.xpose.msra.mxu0 0.0
        %3586 = vmatprep.subr.mxu0 0.0
        %3587 = vmatpush1.xpose.msra.mxu0 0.0
        %3588 = vmatprep.subr.mxu0 0.0
        %3589 = vmatpush1.xpose.msra.mxu0 0.0
        %3590 = vmatprep.subr.mxu0 0.0
        %3591 = vmatpush1.xpose.msra.mxu0 0.0
        %3592 = vmatprep.subr.mxu0 0.0
        %3593 = vmatpush1.xpose.msra.mxu0 0.0
        %3594 = vmatprep.subr.mxu0 0.0
        %3595 = vmatpush1.xpose.msra.mxu0 0.0
        %3596 = vmatprep.subr.mxu0 0.0
        %3597 = vmatpush1.xpose.msra.mxu0 0.0
        %3598 = vmatprep.subr.mxu0 0.0
        %3599 = vmatpush1.xpose.msra.mxu0 0.0
        %3600 = vmatprep.subr.mxu0 0.0
        %3601 = vmatpush1.xpose.msra.mxu0 0.0
        %3602 = vmatprep.subr.mxu0 0.0
        %3603 = vmatpush1.xpose.msra.mxu0 0.0
        %3604 = vmatprep.subr.mxu0 0.0
        %3605 = vmatpush1.xpose.msra.mxu0 0.0
        %3606 = vmatprep.subr.mxu0 0.0
        %3607 = vmatpush1.xpose.msra.mxu0 0.0
        %3608 = vmatprep.subr.mxu0 0.0
        %3609 = vmatpush1.xpose.msra.mxu0 0.0
        %3610 = vmatprep.mubr.f32.mxu0 0.0
        %3611 = vmatmul.mubr.f32.gmra.mrb[0].mxu0 %v3538
        %v3612 = vpop.f32.mrb[0].mxu0
        %v3613 = vadd.f32 %v446, %v3612
        %v3614 = vpop.f32.mrb[0].mxu0
        %3615 = vmatprep.mubr.f32.mxu0 0.0
        %3616 = vmatmul.mubr.f32.gmra.mrb[0].mxu0 %v3540
        %v3617 = vpop.f32.mrb[0].mxu0
        %v3618 = vadd.f32 %v447, %v3617
        %v3619 = vpop.f32.mrb[0].mxu0
        %3620 = vdwg.mxu0
        %v3621 = vsel %vm825, %v3340, -inf
        %3622 = vmax.xlane.f32.xlu0 %v3621
        %v3623 = vpop.xlane.xlu0 %3622
        %v3624 = vsel %vm825, %v3345, -inf
        %3625 = vmax.xlane.f32.xlu0 %v3624
        %v3626 = vpop.xlane.xlu0 %3625
        %v3627 = vsel %vm825, %v3431, -inf
        %3628 = vmax.xlane.f32.xlu0 %v3627
        %v3629 = vpop.xlane.xlu0 %3628
        %v3630 = vsel %vm825, %v3436, -inf
        %3631 = vmax.xlane.f32.xlu0 %v3630
        %v3632 = vpop.xlane.xlu0 %3631
        %v3633 = vsel %vm825, %v3522, -inf
        %3634 = vmax.xlane.f32.xlu0 %v3633
        %v3635 = vpop.xlane.xlu0 %3634
        %v3636 = vsel %vm825, %v3527, -inf
        %3637 = vmax.xlane.f32.xlu0 %v3636
        %v3638 = vpop.xlane.xlu0 %3637
        %v3639 = vsel %vm825, %v3613, -inf
        %3640 = vmax.xlane.f32.xlu0 %v3639
        %v3641 = vpop.xlane.xlu0 %3640
        %v3642 = vsel %vm825, %v3618, -inf
        %3643 = vmax.xlane.f32.xlu0 %v3642
        %v3644 = vpop.xlane.xlu0 %3643
        %v3645 = vsub.f32 %v3340, %v3623
        %v3646 = vsub.f32 %v3345, %v3626
        %v3647 = vsub.f32 %v3431, %v3629
        %v3648 = vsub.f32 %v3436, %v3632
        %v3649 = vsub.f32 %v3522, %v3635
        %v3650 = vsub.f32 %v3527, %v3638
        %v3651 = vsub.f32 %v3613, %v3641
        %v3652 = vsub.f32 %v3618, %v3644
        %v3653 = vmul.f32 %v3645, 1.442695
        %v3654 = vpow.pop %v3653
        %v3655 = vmul.f32 %v3646, 1.442695
        %v3656 = vpow.pop %v3655
        %v3657 = vmul.f32 %v3647, 1.442695
        %v3658 = vpow.pop %v3657
        %v3659 = vmul.f32 %v3648, 1.442695
        %v3660 = vpow.pop %v3659
        %v3661 = vmul.f32 %v3649, 1.442695
        %v3662 = vpow.pop %v3661
        %v3663 = vmul.f32 %v3650, 1.442695
        %v3664 = vpow.pop %v3663
        %v3665 = vmul.f32 %v3651, 1.442695
        %v3666 = vpow.pop %v3665
        %v3667 = vmul.f32 %v3652, 1.442695
        %v3668 = vpow.pop %v3667
        %v3669 = vsel %vm825, %v3654, 0.0
        %3670 = vadd.xlane.f32.xlu0 %v3669
        %v3671 = vpop.xlane.xlu0 %3670
        %v3672 = vsel %vm825, %v3656, 0.0
        %3673 = vadd.xlane.f32.xlu0 %v3672
        %v3674 = vpop.xlane.xlu0 %3673
        %v3675 = vsel %vm825, %v3658, 0.0
        %3676 = vadd.xlane.f32.xlu0 %v3675
        %v3677 = vpop.xlane.xlu0 %3676
        %v3678 = vsel %vm825, %v3660, 0.0
        %3679 = vadd.xlane.f32.xlu0 %v3678
        %v3680 = vpop.xlane.xlu0 %3679
        %v3681 = vsel %vm825, %v3662, 0.0
        %3682 = vadd.xlane.f32.xlu0 %v3681
        %v3683 = vpop.xlane.xlu0 %3682
        %v3684 = vsel %vm825, %v3664, 0.0
        %3685 = vadd.xlane.f32.xlu0 %v3684
        %v3686 = vpop.xlane.xlu0 %3685
        %v3687 = vsel %vm825, %v3666, 0.0
        %3688 = vadd.xlane.f32.xlu0 %v3687
        %v3689 = vpop.xlane.xlu0 %3688
        %v3690 = vsel %vm825, %v3668, 0.0
        %3691 = vadd.xlane.f32.xlu0 %v3690
        %v3692 = vpop.xlane.xlu0 %3691
        %v3693 = vrcp.pop %v3671
        %v3694 = vrcp.pop %v3674
        %v3695 = vrcp.pop %v3677
        %v3696 = vrcp.pop %v3680
        %v3697 = vrcp.pop %v3683
        %v3698 = vrcp.pop %v3686
        %v3699 = vrcp.pop %v3689
        %v3700 = vrcp.pop %v3692
        %v3701 = vmul.f32 %v3654, %v3693
        %v3702 = vmul.f32 %v3656, %v3694
        %v3703 = vmul.f32 %v3658, %v3695
        %v3704 = vmul.f32 %v3660, %v3696
        %v3705 = vmul.f32 %v3662, %v3697
        %v3706 = vmul.f32 %v3664, %v3698
        %v3707 = vmul.f32 %v3666, %v3699
        %v3708 = vmul.f32 %v3668, %v3700
        %3709 = vrot.lane.b32.xlu0 %v378, 40
        %v3710 = vpop.permute.xlu0 %3709
        %3711 = vrot.lane.b32.xlu0 %v383, 40
        %v3712 = vpop.permute.xlu0 %3711
        %v3716 = vsel %vm825, %v3701, 0
        %v3719 = vsel %vm825, %v3702, 0
        %3721 = vmatprep.subr.mxu0 0.0
        %3722 = vmatpush1.msra.mxu0 %v3710
        %3723 = vmatprep.subr.mxu0 0.0
        %3724 = vmatpush1.msra.mxu0 %v3712
        %3725 = vmatprep.subr.mxu0 0.0
        %3726 = vmatpush1.msra.mxu0 0.0
        %3727 = vmatprep.subr.mxu0 0.0
        %3728 = vmatpush1.msra.mxu0 0.0
        %3729 = vmatprep.subr.mxu0 0.0
        %3730 = vmatpush1.msra.mxu0 0.0
        %3731 = vmatprep.subr.mxu0 0.0
        %3732 = vmatpush1.msra.mxu0 0.0
        %3733 = vmatprep.subr.mxu0 0.0
        %3734 = vmatpush1.msra.mxu0 0.0
        %3735 = vmatprep.subr.mxu0 0.0
        %3736 = vmatpush1.msra.mxu0 0.0
        %3737 = vmatprep.subr.mxu0 0.0
        %3738 = vmatpush1.msra.mxu0 0.0
        %3739 = vmatprep.subr.mxu0 0.0
        %3740 = vmatpush1.msra.mxu0 0.0
        %3741 = vmatprep.subr.mxu0 0.0
        %3742 = vmatpush1.msra.mxu0 0.0
        %3743 = vmatprep.subr.mxu0 0.0
        %3744 = vmatpush1.msra.mxu0 0.0
        %3745 = vmatprep.subr.mxu0 0.0
        %3746 = vmatpush1.msra.mxu0 0.0
        %3747 = vmatprep.subr.mxu0 0.0
        %3748 = vmatpush1.msra.mxu0 0.0
        %3749 = vmatprep.subr.mxu0 0.0
        %3750 = vmatpush1.msra.mxu0 0.0
        %3751 = vmatprep.subr.mxu0 0.0
        %3752 = vmatpush1.msra.mxu0 0.0
        %3753 = vmatprep.subr.mxu0 0.0
        %3754 = vmatpush1.msra.mxu0 0.0
        %3755 = vmatprep.subr.mxu0 0.0
        %3756 = vmatpush1.msra.mxu0 0.0
        %3757 = vmatprep.subr.mxu0 0.0
        %3758 = vmatpush1.msra.mxu0 0.0
        %3759 = vmatprep.subr.mxu0 0.0
        %3760 = vmatpush1.msra.mxu0 0.0
        %3761 = vmatprep.subr.mxu0 0.0
        %3762 = vmatpush1.msra.mxu0 0.0
        %3763 = vmatprep.subr.mxu0 0.0
        %3764 = vmatpush1.msra.mxu0 0.0
        %3765 = vmatprep.subr.mxu0 0.0
        %3766 = vmatpush1.msra.mxu0 0.0
        %3767 = vmatprep.subr.mxu0 0.0
        %3768 = vmatpush1.msra.mxu0 0.0
        %3769 = vmatprep.subr.mxu0 0.0
        %3770 = vmatpush1.msra.mxu0 0.0
        %3771 = vmatprep.subr.mxu0 0.0
        %3772 = vmatpush1.msra.mxu0 0.0
        %3773 = vmatprep.subr.mxu0 0.0
        %3774 = vmatpush1.msra.mxu0 0.0
        %3775 = vmatprep.subr.mxu0 0.0
        %3776 = vmatpush1.msra.mxu0 0.0
        %3777 = vmatprep.subr.mxu0 0.0
        %3778 = vmatpush1.msra.mxu0 0.0
        %3779 = vmatprep.subr.mxu0 0.0
        %3780 = vmatpush1.msra.mxu0 0.0
        %3781 = vmatprep.subr.mxu0 0.0
        %3782 = vmatpush1.msra.mxu0 0.0
        %3783 = vmatprep.subr.mxu0 0.0
        %3784 = vmatpush1.msra.mxu0 0.0
        %3785 = vmatprep.mubr.f32.mxu0 0.0
        %3786 = vmatmul.mubr.f32.gmra.mrb[0].mxu0 %v3716
        %v3787 = vpop.f32.mrb[0].mxu0
        %v3788 = vadd.f32 0.0, %v3787
        %v3789 = vpop.f32.mrb[0].mxu0
        %3790 = vmatprep.mubr.f32.mxu0 0.0
        %3791 = vmatmul.mubr.f32.gmra.mrb[0].mxu0 %v3719
        %v3792 = vpop.f32.mrb[0].mxu0
        %v3793 = vadd.f32 0.0, %v3792
        %v3794 = vpop.f32.mrb[0].mxu0
        %3795 = vdwg.mxu0
        %3796 = vrot.lane.b32.xlu0 %v388, 40
        %v3797 = vpop.permute.xlu0 %3796
        %3798 = vrot.lane.b32.xlu0 %v393, 40
        %v3799 = vpop.permute.xlu0 %3798
        %v3803 = vsel %vm825, %v3703, 0
        %v3806 = vsel %vm825, %v3704, 0
        %3808 = vmatprep.subr.mxu0 0.0
        %3809 = vmatpush1.msra.mxu0 %v3797
        %3810 = vmatprep.subr.mxu0 0.0
        %3811 = vmatpush1.msra.mxu0 %v3799
        %3812 = vmatprep.subr.mxu0 0.0
        %3813 = vmatpush1.msra.mxu0 0.0
        %3814 = vmatprep.subr.mxu0 0.0
        %3815 = vmatpush1.msra.mxu0 0.0
        %3816 = vmatprep.subr.mxu0 0.0
        %3817 = vmatpush1.msra.mxu0 0.0
        %3818 = vmatprep.subr.mxu0 0.0
        %3819 = vmatpush1.msra.mxu0 0.0
        %3820 = vmatprep.subr.mxu0 0.0
        %3821 = vmatpush1.msra.mxu0 0.0
        %3822 = vmatprep.subr.mxu0 0.0
        %3823 = vmatpush1.msra.mxu0 0.0
        %3824 = vmatprep.subr.mxu0 0.0
        %3825 = vmatpush1.msra.mxu0 0.0
        %3826 = vmatprep.subr.mxu0 0.0
        %3827 = vmatpush1.msra.mxu0 0.0
        %3828 = vmatprep.subr.mxu0 0.0
        %3829 = vmatpush1.msra.mxu0 0.0
        %3830 = vmatprep.subr.mxu0 0.0
        %3831 = vmatpush1.msra.mxu0 0.0
        %3832 = vmatprep.subr.mxu0 0.0
        %3833 = vmatpush1.msra.mxu0 0.0
        %3834 = vmatprep.subr.mxu0 0.0
        %3835 = vmatpush1.msra.mxu0 0.0
        %3836 = vmatprep.subr.mxu0 0.0
        %3837 = vmatpush1.msra.mxu0 0.0
        %3838 = vmatprep.subr.mxu0 0.0
        %3839 = vmatpush1.msra.mxu0 0.0
        %3840 = vmatprep.subr.mxu0 0.0
        %3841 = vmatpush1.msra.mxu0 0.0
        %3842 = vmatprep.subr.mxu0 0.0
        %3843 = vmatpush1.msra.mxu0 0.0
        %3844 = vmatprep.subr.mxu0 0.0
        %3845 = vmatpush1.msra.mxu0 0.0
        %3846 = vmatprep.subr.mxu0 0.0
        %3847 = vmatpush1.msra.mxu0 0.0
        %3848 = vmatprep.subr.mxu0 0.0
        %3849 = vmatpush1.msra.mxu0 0.0
        %3850 = vmatprep.subr.mxu0 0.0
        %3851 = vmatpush1.msra.mxu0 0.0
        %3852 = vmatprep.subr.mxu0 0.0
        %3853 = vmatpush1.msra.mxu0 0.0
        %3854 = vmatprep.subr.mxu0 0.0
        %3855 = vmatpush1.msra.mxu0 0.0
        %3856 = vmatprep.subr.mxu0 0.0
        %3857 = vmatpush1.msra.mxu0 0.0
        %3858 = vmatprep.subr.mxu0 0.0
        %3859 = vmatpush1.msra.mxu0 0.0
        %3860 = vmatprep.subr.mxu0 0.0
        %3861 = vmatpush1.msra.mxu0 0.0
        %3862 = vmatprep.subr.mxu0 0.0
        %3863 = vmatpush1.msra.mxu0 0.0
        %3864 = vmatprep.subr.mxu0 0.0
        %3865 = vmatpush1.msra.mxu0 0.0
        %3866 = vmatprep.subr.mxu0 0.0
        %3867 = vmatpush1.msra.mxu0 0.0
        %3868 = vmatprep.subr.mxu0 0.0
        %3869 = vmatpush1.msra.mxu0 0.0
        %3870 = vmatprep.subr.mxu0 0.0
        %3871 = vmatpush1.msra.mxu0 0.0
        %3872 = vmatprep.mubr.f32.mxu0 0.0
        %3873 = vmatmul.mubr.f32.gmra.mrb[0].mxu0 %v3803
        %v3874 = vpop.f32.mrb[0].mxu0
        %v3875 = vadd.f32 0.0, %v3874
        %v3876 = vpop.f32.mrb[0].mxu0
        %3877 = vmatprep.mubr.f32.mxu0 0.0
        %3878 = vmatmul.mubr.f32.gmra.mrb[0].mxu0 %v3806
        %v3879 = vpop.f32.mrb[0].mxu0
        %v3880 = vadd.f32 0.0, %v3879
        %v3881 = vpop.f32.mrb[0].mxu0
        %3882 = vdwg.mxu0
        %3883 = vrot.lane.b32.xlu0 %v398, 40
        %v3884 = vpop.permute.xlu0 %3883
        %3885 = vrot.lane.b32.xlu0 %v403, 40
        %v3886 = vpop.permute.xlu0 %3885
        %v3890 = vsel %vm825, %v3705, 0
        %v3893 = vsel %vm825, %v3706, 0
        %3895 = vmatprep.subr.mxu0 0.0
        %3896 = vmatpush1.msra.mxu0 %v3884
        %3897 = vmatprep.subr.mxu0 0.0
        %3898 = vmatpush1.msra.mxu0 %v3886
        %3899 = vmatprep.subr.mxu0 0.0
        %3900 = vmatpush1.msra.mxu0 0.0
        %3901 = vmatprep.subr.mxu0 0.0
        %3902 = vmatpush1.msra.mxu0 0.0
        %3903 = vmatprep.subr.mxu0 0.0
        %3904 = vmatpush1.msra.mxu0 0.0
        %3905 = vmatprep.subr.mxu0 0.0
        %3906 = vmatpush1.msra.mxu0 0.0
        %3907 = vmatprep.subr.mxu0 0.0
        %3908 = vmatpush1.msra.mxu0 0.0
        %3909 = vmatprep.subr.mxu0 0.0
        %3910 = vmatpush1.msra.mxu0 0.0
        %3911 = vmatprep.subr.mxu0 0.0
        %3912 = vmatpush1.msra.mxu0 0.0
        %3913 = vmatprep.subr.mxu0 0.0
        %3914 = vmatpush1.msra.mxu0 0.0
        %3915 = vmatprep.subr.mxu0 0.0
        %3916 = vmatpush1.msra.mxu0 0.0
        %3917 = vmatprep.subr.mxu0 0.0
        %3918 = vmatpush1.msra.mxu0 0.0
        %3919 = vmatprep.subr.mxu0 0.0
        %3920 = vmatpush1.msra.mxu0 0.0
        %3921 = vmatprep.subr.mxu0 0.0
        %3922 = vmatpush1.msra.mxu0 0.0
        %3923 = vmatprep.subr.mxu0 0.0
        %3924 = vmatpush1.msra.mxu0 0.0
        %3925 = vmatprep.subr.mxu0 0.0
        %3926 = vmatpush1.msra.mxu0 0.0
        %3927 = vmatprep.subr.mxu0 0.0
        %3928 = vmatpush1.msra.mxu0 0.0
        %3929 = vmatprep.subr.mxu0 0.0
        %3930 = vmatpush1.msra.mxu0 0.0
        %3931 = vmatprep.subr.mxu0 0.0
        %3932 = vmatpush1.msra.mxu0 0.0
        %3933 = vmatprep.subr.mxu0 0.0
        %3934 = vmatpush1.msra.mxu0 0.0
        %3935 = vmatprep.subr.mxu0 0.0
        %3936 = vmatpush1.msra.mxu0 0.0
        %3937 = vmatprep.subr.mxu0 0.0
        %3938 = vmatpush1.msra.mxu0 0.0
        %3939 = vmatprep.subr.mxu0 0.0
        %3940 = vmatpush1.msra.mxu0 0.0
        %3941 = vmatprep.subr.mxu0 0.0
        %3942 = vmatpush1.msra.mxu0 0.0
        %3943 = vmatprep.subr.mxu0 0.0
        %3944 = vmatpush1.msra.mxu0 0.0
        %3945 = vmatprep.subr.mxu0 0.0
        %3946 = vmatpush1.msra.mxu0 0.0
        %3947 = vmatprep.subr.mxu0 0.0
        %3948 = vmatpush1.msra.mxu0 0.0
        %3949 = vmatprep.subr.mxu0 0.0
        %3950 = vmatpush1.msra.mxu0 0.0
        %3951 = vmatprep.subr.mxu0 0.0
        %3952 = vmatpush1.msra.mxu0 0.0
        %3953 = vmatprep.subr.mxu0 0.0
        %3954 = vmatpush1.msra.mxu0 0.0
        %3955 = vmatprep.subr.mxu0 0.0
        %3956 = vmatpush1.msra.mxu0 0.0
        %3957 = vmatprep.subr.mxu0 0.0
        %3958 = vmatpush1.msra.mxu0 0.0
        %3959 = vmatprep.mubr.f32.mxu0 0.0
        %3960 = vmatmul.mubr.f32.gmra.mrb[0].mxu0 %v3890
        %v3961 = vpop.f32.mrb[0].mxu0
        %v3962 = vadd.f32 0.0, %v3961
        %v3963 = vpop.f32.mrb[0].mxu0
        %3964 = vmatprep.mubr.f32.mxu0 0.0
        %3965 = vmatmul.mubr.f32.gmra.mrb[0].mxu0 %v3893
        %v3966 = vpop.f32.mrb[0].mxu0
        %v3967 = vadd.f32 0.0, %v3966
        %v3968 = vpop.f32.mrb[0].mxu0
        %3969 = vdwg.mxu0
        %3970 = vrot.lane.b32.xlu0 %v408, 40
        %v3971 = vpop.permute.xlu0 %3970
        %3972 = vrot.lane.b32.xlu0 %v413, 40
        %v3973 = vpop.permute.xlu0 %3972
        %v3977 = vsel %vm825, %v3707, 0
        %v3980 = vsel %vm825, %v3708, 0
        %3982 = vmatprep.subr.mxu0 0.0
        %3983 = vmatpush1.msra.mxu0 %v3971
        %3984 = vmatprep.subr.mxu0 0.0
        %3985 = vmatpush1.msra.mxu0 %v3973
        %3986 = vmatprep.subr.mxu0 0.0
        %3987 = vmatpush1.msra.mxu0 0.0
        %3988 = vmatprep.subr.mxu0 0.0
        %3989 = vmatpush1.msra.mxu0 0.0
        %3990 = vmatprep.subr.mxu0 0.0
        %3991 = vmatpush1.msra.mxu0 0.0
        %3992 = vmatprep.subr.mxu0 0.0
        %3993 = vmatpush1.msra.mxu0 0.0
        %3994 = vmatprep.subr.mxu0 0.0
        %3995 = vmatpush1.msra.mxu0 0.0
        %3996 = vmatprep.subr.mxu0 0.0
        %3997 = vmatpush1.msra.mxu0 0.0
        %3998 = vmatprep.subr.mxu0 0.0
        %3999 = vmatpush1.msra.mxu0 0.0
        %4000 = vmatprep.subr.mxu0 0.0
        %4001 = vmatpush1.msra.mxu0 0.0
        %4002 = vmatprep.subr.mxu0 0.0
        %4003 = vmatpush1.msra.mxu0 0.0
        %4004 = vmatprep.subr.mxu0 0.0
        %4005 = vmatpush1.msra.mxu0 0.0
        %4006 = vmatprep.subr.mxu0 0.0
        %4007 = vmatpush1.msra.mxu0 0.0
        %4008 = vmatprep.subr.mxu0 0.0
        %4009 = vmatpush1.msra.mxu0 0.0
        %4010 = vmatprep.subr.mxu0 0.0
        %4011 = vmatpush1.msra.mxu0 0.0
        %4012 = vmatprep.subr.mxu0 0.0
        %4013 = vmatpush1.msra.mxu0 0.0
        %4014 = vmatprep.subr.mxu0 0.0
        %4015 = vmatpush1.msra.mxu0 0.0
        %4016 = vmatprep.subr.mxu0 0.0
        %4017 = vmatpush1.msra.mxu0 0.0
        %4018 = vmatprep.subr.mxu0 0.0
        %4019 = vmatpush1.msra.mxu0 0.0
        %4020 = vmatprep.subr.mxu0 0.0
        %4021 = vmatpush1.msra.mxu0 0.0
        %4022 = vmatprep.subr.mxu0 0.0
        %4023 = vmatpush1.msra.mxu0 0.0
        %4024 = vmatprep.subr.mxu0 0.0
        %4025 = vmatpush1.msra.mxu0 0.0
        %4026 = vmatprep.subr.mxu0 0.0
        %4027 = vmatpush1.msra.mxu0 0.0
        %4028 = vmatprep.subr.mxu0 0.0
        %4029 = vmatpush1.msra.mxu0 0.0
        %4030 = vmatprep.subr.mxu0 0.0
        %4031 = vmatpush1.msra.mxu0 0.0
        %4032 = vmatprep.subr.mxu0 0.0
        %4033 = vmatpush1.msra.mxu0 0.0
        %4034 = vmatprep.subr.mxu0 0.0
        %4035 = vmatpush1.msra.mxu0 0.0
        %4036 = vmatprep.subr.mxu0 0.0
        %4037 = vmatpush1.msra.mxu0 0.0
        %4038 = vmatprep.subr.mxu0 0.0
        %4039 = vmatpush1.msra.mxu0 0.0
        %4040 = vmatprep.subr.mxu0 0.0
        %4041 = vmatpush1.msra.mxu0 0.0
        %4042 = vmatprep.subr.mxu0 0.0
        %4043 = vmatpush1.msra.mxu0 0.0
        %4044 = vmatprep.subr.mxu0 0.0
        %4045 = vmatpush1.msra.mxu0 0.0
        %4046 = vmatprep.mubr.f32.mxu0 0.0
        %4047 = vmatmul.mubr.f32.gmra.mrb[0].mxu0 %v3977
        %v4048 = vpop.f32.mrb[0].mxu0
        %v4049 = vadd.f32 0.0, %v4048
        %v4050 = vpop.f32.mrb[0].mxu0
        %4051 = vmatprep.mubr.f32.mxu0 0.0
        %4052 = vmatmul.mubr.f32.gmra.mrb[0].mxu0 %v3980
        %v4053 = vpop.f32.mrb[0].mxu0
        %v4054 = vadd.f32 0.0, %v4053
        %v4055 = vpop.f32.mrb[0].mxu0
        %4056 = vdwg.mxu0
        %v4058 = vsel %vm466, %v3788, 0
        %v4061 = vsel %vm466, %v3793, 0
        %v4064 = vsel %vm466, %v3875, 0
        %v4067 = vsel %vm466, %v3880, 0
        %v4070 = vsel %vm466, %v3962, 0
        %v4073 = vsel %vm466, %v3967, 0
        %v4076 = vsel %vm466, %v4049, 0
        %v4079 = vsel %vm466, %v4054, 0
        %4081 = vmatprep.subr.mxu0 0.0
        %4082 = vmatpush1.msra.mxu0 %v451
        %4083 = vmatprep.subr.mxu0 0.0
        %4084 = vmatpush1.msra.mxu0 0.0
        %4085 = vmatprep.subr.mxu0 0.0
        %4086 = vmatpush1.msra.mxu0 0.0
        %4087 = vmatprep.subr.mxu0 0.0
        %4088 = vmatpush1.msra.mxu0 0.0
        %4089 = vmatprep.subr.mxu0 0.0
        %4090 = vmatpush1.msra.mxu0 0.0
        %4091 = vmatprep.subr.mxu0 0.0
        %4092 = vmatpush1.msra.mxu0 0.0
        %4093 = vmatprep.subr.mxu0 0.0
        %4094 = vmatpush1.msra.mxu0 0.0
        %4095 = vmatprep.subr.mxu0 0.0
        %4096 = vmatpush1.msra.mxu0 0.0
        %4097 = vmatprep.subr.mxu0 0.0
        %4098 = vmatpush1.msra.mxu0 0.0
        %4099 = vmatprep.subr.mxu0 0.0
        %4100 = vmatpush1.msra.mxu0 0.0
        %4101 = vmatprep.subr.mxu0 0.0
        %4102 = vmatpush1.msra.mxu0 0.0
        %4103 = vmatprep.subr.mxu0 0.0
        %4104 = vmatpush1.msra.mxu0 0.0
        %4105 = vmatprep.subr.mxu0 0.0
        %4106 = vmatpush1.msra.mxu0 0.0
        %4107 = vmatprep.subr.mxu0 0.0
        %4108 = vmatpush1.msra.mxu0 0.0
        %4109 = vmatprep.subr.mxu0 0.0
        %4110 = vmatpush1.msra.mxu0 0.0
        %4111 = vmatprep.subr.mxu0 0.0
        %4112 = vmatpush1.msra.mxu0 0.0
        %4113 = vmatprep.subr.mxu0 0.0
        %4114 = vmatpush1.msra.mxu0 0.0
        %4115 = vmatprep.subr.mxu0 0.0
        %4116 = vmatpush1.msra.mxu0 0.0
        %4117 = vmatprep.subr.mxu0 0.0
        %4118 = vmatpush1.msra.mxu0 0.0
        %4119 = vmatprep.subr.mxu0 0.0
        %4120 = vmatpush1.msra.mxu0 0.0
        %4121 = vmatprep.subr.mxu0 0.0
        %4122 = vmatpush1.msra.mxu0 0.0
        %4123 = vmatprep.subr.mxu0 0.0
        %4124 = vmatpush1.msra.mxu0 0.0
        %4125 = vmatprep.subr.mxu0 0.0
        %4126 = vmatpush1.msra.mxu0 0.0
        %4127 = vmatprep.subr.mxu0 0.0
        %4128 = vmatpush1.msra.mxu0 0.0
        %4129 = vmatprep.subr.mxu0 0.0
        %4130 = vmatpush1.msra.mxu0 0.0
        %4131 = vmatprep.subr.mxu0 0.0
        %4132 = vmatpush1.msra.mxu0 0.0
        %4133 = vmatprep.subr.mxu0 0.0
        %4134 = vmatpush1.msra.mxu0 0.0
        %4135 = vmatprep.subr.mxu0 0.0
        %4136 = vmatpush1.msra.mxu0 0.0
        %4137 = vmatprep.subr.mxu0 0.0
        %4138 = vmatpush1.msra.mxu0 0.0
        %4139 = vmatprep.subr.mxu0 0.0
        %4140 = vmatpush1.msra.mxu0 0.0
        %4141 = vmatprep.subr.mxu0 0.0
        %4142 = vmatpush1.msra.mxu0 0.0
        %4143 = vmatprep.subr.mxu0 0.0
        %4144 = vmatpush1.msra.mxu0 0.0
        %4145 = vmatprep.mubr.f32.mxu0 0.0
        %4146 = vmatmul.mubr.f32.gmra.mrb[0].mxu0 %v4058
        %v4147 = vpop.f32.mrb[0].mxu0
        %v4148 = vadd.f32 0.0, %v4147
        %v4149 = vpop.f32.mrb[0].mxu0
        %4150 = vmatprep.mubr.f32.mxu0 0.0
        %4151 = vmatmul.mubr.f32.gmra.mrb[0].mxu0 %v4061
        %v4152 = vpop.f32.mrb[0].mxu0
        %v4153 = vadd.f32 0.0, %v4152
        %v4154 = vpop.f32.mrb[0].mxu0
        %4155 = vmatprep.mubr.f32.mxu0 0.0
        %4156 = vmatmul.mubr.f32.gmra.mrb[0].mxu0 %v4064
        %v4157 = vpop.f32.mrb[0].mxu0
        %v4158 = vadd.f32 0.0, %v4157
        %v4159 = vpop.f32.mrb[0].mxu0
        %4160 = vmatprep.mubr.f32.mxu0 0.0
        %4161 = vmatmul.mubr.f32.gmra.mrb[0].mxu0 %v4067
        %v4162 = vpop.f32.mrb[0].mxu0
        %v4163 = vadd.f32 0.0, %v4162
        %v4164 = vpop.f32.mrb[0].mxu0
        %4165 = vmatprep.mubr.f32.mxu0 0.0
        %4166 = vmatmul.mubr.f32.gmra.mrb[0].mxu0 %v4070
        %v4167 = vpop.f32.mrb[0].mxu0
        %v4168 = vadd.f32 0.0, %v4167
        %v4169 = vpop.f32.mrb[0].mxu0
        %4170 = vmatprep.mubr.f32.mxu0 0.0
        %4171 = vmatmul.mubr.f32.gmra.mrb[0].mxu0 %v4073
        %v4172 = vpop.f32.mrb[0].mxu0
        %v4173 = vadd.f32 0.0, %v4172
        %v4174 = vpop.f32.mrb[0].mxu0
        %4175 = vmatprep.mubr.f32.mxu0 0.0
        %4176 = vmatmul.mubr.f32.gmra.mrb[0].mxu0 %v4076
        %v4177 = vpop.f32.mrb[0].mxu0
        %v4178 = vadd.f32 0.0, %v4177
        %v4179 = vpop.f32.mrb[0].mxu0
        %4180 = vmatprep.mubr.f32.mxu0 0.0
        %4181 = vmatmul.mubr.f32.gmra.mrb[0].mxu0 %v4079
        %v4182 = vpop.f32.mrb[0].mxu0
        %v4183 = vadd.f32 0.0, %v4182
        %v4184 = vpop.f32.mrb[0].mxu0
        %4185 = vdwg.mxu0
        %v4186 = vadd.f32 %v3249, %v4148
        %v4187 = vadd.f32 %v3250, %v4153
        %v4188 = vadd.f32 %v3251, %v4158
        %v4189 = vadd.f32 %v3252, %v4163
        %v4190 = vadd.f32 %v3253, %v4168
        %v4191 = vadd.f32 %v3254, %v4173
        %v4192 = vadd.f32 %v3255, %v4178
        %v4193 = vadd.f32 %v3256, %v4183
        %v4194 = vld [vmem:[%s4] sm:$0x1]
        %v4196 = vlaneseq
        %v4197 = vshrl.u32 %v4196, 7
        %v4198 = vsub.s32 0, %v4197
        %v4199 = vrot.slane %v4194, %v4198
        %v4201 = vadd.f32 %v4186, %v4199
        %v4202 = vadd.f32 %v4187, %v4199
        %v4203 = vadd.f32 %v4188, %v4199
        %v4204 = vadd.f32 %v4189, %v4199
        %v4205 = vadd.f32 %v4190, %v4199
        %v4206 = vadd.f32 %v4191, %v4199
        %v4207 = vadd.f32 %v4192, %v4199
        %v4208 = vadd.f32 %v4193, %v4199
        %4209 = vst.msk [vmem:[%s266] sm:$0xff] %vm286, %v4201
        %4210 = vst.msk [vmem:[%s266 + $0x8] sm:$0xff] %vm286, %v4202
        %4211 = vst.msk [vmem:[%s266 + $0x10] sm:$0xff] %vm286, %v4203
        %4212 = vst.msk [vmem:[%s266 + $0x18] sm:$0xff] %vm286, %v4204
        %4213 = vst.msk [vmem:[%s266 + $0x20] sm:$0xff] %vm286, %v4205
        %4214 = vst.msk [vmem:[%s266 + $0x28] sm:$0xff] %vm286, %v4206
        %4215 = vst.msk [vmem:[%s266 + $0x30] sm:$0xff] %vm286, %v4207
        %4216 = vst.msk [vmem:[%s266 + $0x38] sm:$0xff] %vm286, %v4208
        %p4217 = scmp.lt.s32.totalorder %s18, 1
        %s4218 = scalar_select %p4217, %s18, 1
        %s4219 = smul.addr %s4218, 8
        %s4220 = smul.addr %s4219, 8
        %s4221 = scalar_lea.vmem %s6, %s4220
        // Predicated region
        $region49: #{tpu_custom_call.1} parent=43 // pred_check
          %p4222 = pneg %p167
        $region50: #{tpu_custom_call.1} parent=43 // pred_check_branch
          %4224 = sbr.rel (%p4222) target = $region52
        $region51: #{tpu_custom_call.1} parent=43 // pred_region
          _
        $region52: #{tpu_custom_call.1} parent=43 // pred_fallthru
          _
      $region44: #{tpu_custom_call.1} parent=5 // pred_fallthru
        _
      %p4225 = scmp.le.s32.totalorder 2, %s13
      // Predicated region
      $region53: #{tpu_custom_call.1} parent=5 // pred_check
        %p4226 = pneg %p4225
      $region54: #{tpu_custom_call.1} parent=5 // pred_check_branch
        %4228 = sbr.rel (%p4226) target = $region56
      $region55: #{tpu_custom_call.1} parent=5 // pred_region
        %s4229 = ssub.s32 %s13, 2
        // Predicated region
        $region57: #{tpu_custom_call.1} parent=55 // pred_check
          %p4230 = pneg %p173
        $region58: #{tpu_custom_call.1} parent=55 // pred_check_branch
          %4232 = sbr.rel (%p4230) target = $region60
        $region59: #{tpu_custom_call.1} parent=55 // pred_region
          %p4233 = scmp.lt.s32.totalorder %s19, 1
          %s4234 = scalar_select %p4233, %s19, 1
          %s4235 = smul.addr %s4234, 8
          %s4236 = smul.addr %s4235, 8
          %s4237 = scalar_lea.vmem %s6, %s4236
        $region60: #{tpu_custom_call.1} parent=55 // pred_fallthru
          _
      $region56: #{tpu_custom_call.1} parent=5 // pred_fallthru
        _
    $region6: #{tpu_custom_call.1} parent=1 // loop_footer
      %s17 = sadd.s32 1, %s13
    $region7: #{tpu_custom_call.1} parent=1 // loop_footer_branch
      %12 = sbr.rel target = $region3
    $region8: #{tpu_custom_call.1} parent=1 // loop_exit
      _
    %4238 = vsyncpa [#allocation3], 1
    %s4239 = scalar_lea.sflag [#allocation3], 1
    %4240 = vsyncpa %s4239, 1

</llo_original>
